<compile_context>
chip_gen: v6e
topology: v6e:2x2x1
jax: 0.10.0
libtpu: 0.0.40
codegen_flags: <defaults>
</compile_context>

<pallas_src>
import math

import jax
import jax.numpy as jnp
import numpy as np
from jax import lax
from jax.experimental import pallas as pl
from jax.experimental.pallas import tpu as pltpu


def _round_up(x, m):
    return ((x + m - 1) // m) * m


def _tile_vmem_bytes(TH, Wa, Wp_al, Cp, pad):
    """Rough per-step VMEM working set for a TH-row tile."""
    thp = TH + 2 * pad
    xbuf = 2 * thp * Wp_al * Cp * 2          # bf16 double-buffered haloed input window
    xtmp = thp * Wa * Cp * 4                 # f32 W-sliced temp inside the tap loop
    acc = TH * Wa * Cp * 4                   # f32 depthwise accumulator scratch
    outb = 2 * TH * Wa * Cp * 4              # f32 double-buffered output tile
    ytmp = TH * Wa * Cp * 2                  # bf16 matmul LHS copy
    wts = 2 * (Cp * Cp * 2 + 16 * Cp * 4)    # pointwise + depthwise/shift params
    return xbuf + xtmp + acc + outb + ytmp + wts


def _choose_row_tile(H, Wa, Wp_al, Cp, pad, budget_bytes=20 * 1024 * 1024):
    """Largest multiple-of-8 row tile whose working set fits the VMEM budget."""
    h_cap = _round_up(H, 8)
    best = 8
    th = 8
    while th <= h_cap:
        if _tile_vmem_bytes(th, Wa, Wp_al, Cp, pad) <= budget_bytes:
            best = th
        th += 8
    return min(best, h_cap)


def _make_aspp_kernel(TH, THp, Wa, Cp, KH, KW, dil):
    def kernel(x_hbm, wdw_ref, shift_ref, wpw_ref, o_ref, xbuf, dma_sem, acc_ref):
        # x_hbm   : (N, Hp_al, Wp_al, Cp) bf16 padded activation, left in HBM (pl.ANY)
        # wdw_ref : (KH*KW, Cp) f32 depthwise taps with BN scale folded in
        # shift_ref: (1, Cp)    f32 BN shift (beta - mean*scale)
        # wpw_ref : (Cp, Cp)    bf16 pointwise weights (Cin, Cout)
        # o_ref   : (TH, Wa, Cp) f32 output tile
        # xbuf    : (2, THp, Wp_al, Cp) bf16 double-buffered haloed input window
        # dma_sem : DMA semaphores (2,)
        # acc_ref : (TH, Wa, Cp) f32 depthwise accumulator
        n = pl.program_id(0)
        h = pl.program_id(1)
        n_h = pl.num_programs(1)
        slot = h % 2

        def start_fetch(row_tile, s):
            pltpu.make_async_copy(
                x_hbm.at[n, pl.ds(row_tile * TH, THp)],
                xbuf.at[s],
                dma_sem.at[s],
            ).start()

        # prime the pipeline at the first row tile of this image
        @pl.when(h == 0)
        def _():
            start_fetch(0, 0)

        # wait for the current haloed window
        pltpu.make_async_copy(
            x_hbm.at[n, pl.ds(h * TH, THp)],
            xbuf.at[slot],
            dma_sem.at[slot],
        ).wait()

        # prefetch the next row tile of the same image while computing this one
        @pl.when(h + 1 < n_h)
        def _():
            start_fetch(h + 1, 1 - slot)

        xcur = xbuf.at[slot]                               # (THp, Wp_al, Cp) bf16 view

        # --- depthwise atrous conv (BN scale pre-folded into the taps) --------------
        # One unaligned W-offset slice per kw (3 total), kh taps as leading-dim slices.
        first = True
        for kw in range(KW):
            dw = kw * dil
            xw = xcur[:, dw:dw + Wa, :].astype(jnp.float32)          # (THp, Wa, Cp)
            for kh in range(KH):
                dh = kh * dil
                i = kh * KW + kw
                w_tap = wdw_ref[i:i + 1, :].reshape(1, 1, Cp)
                contrib = xw[dh:dh + TH, :, :] * w_tap
                if first:
                    acc_ref[...] = contrib
                    first = False
                else:
                    acc_ref[...] += contrib

        # --- BN shift + ReLU --------------------------------------------------------
        y = jnp.maximum(acc_ref[...] + shift_ref[0:1, :].reshape(1, 1, Cp), 0.0)

        # --- pointwise 1x1 conv on the MXU (bf16 operands, f32 accumulation) + ReLU --
        y_bf = y.reshape(TH * Wa, Cp).astype(jnp.bfloat16)
        z = jnp.dot(y_bf, wpw_ref[...], preferred_element_type=jnp.float32)
        o_ref[...] = jnp.maximum(z, 0.0).reshape(TH, Wa, Cp).astype(o_ref.dtype)

    return kernel


def aspp_forward(x_nchw, w_dw, bn_gamma, bn_beta, bn_mean, bn_var, w_pw,
                 dilation, eps=1e-3):
    """Pallas TPU implementation of ASPP_module.forward (NCHW in/out)."""
    N, C, H, W = x_nchw.shape
    if dilation == 1:
        KH = KW = 1
        pad = 0
    else:
        KH = KW = 3
        pad = dilation

    # lane-dense channels, sublane-aligned W
    Cp = max(_round_up(C, 128), 128)
    Wa = _round_up(W, 8)
    Wp_al = _round_up(Wa + 2 * pad, 8)

    TH = _choose_row_tile(H, Wa, Wp_al, Cp, pad)
    THp = TH + 2 * pad
    nH = -(-H // TH)
    H_al = nH * TH
    Hp_al = H_al + 2 * pad

    # ---- host-side layout / parameter prep (fused by XLA into one pass) ------------
    x = jnp.transpose(x_nchw, (0, 2, 3, 1))                             # NHWC
    xp = jnp.pad(x, ((0, 0),
                     (pad, Hp_al - H - pad),
                     (pad, Wp_al - W - pad),
                     (0, Cp - C))).astype(jnp.bfloat16)

    scale = bn_gamma / jnp.sqrt(bn_var + eps)                           # (C,)
    # depthwise taps (KH*KW, C) with BN scale folded in, zero-padded to Cp lanes
    wdw = jnp.transpose(w_dw[:, 0, :, :], (1, 2, 0)).reshape(KH * KW, C)
    wdw = jnp.pad((wdw * scale[None, :]).astype(jnp.float32),
                  ((0, 0), (0, Cp - C)))
    shift = jnp.pad((bn_beta - bn_mean * scale).reshape(1, C).astype(jnp.float32),
                    ((0, 0), (0, Cp - C)))
    # pointwise weights: torch (C_out, C_in, 1, 1) -> (C_in, C_out), bf16 for the MXU
    wpw = jnp.pad(jnp.transpose(w_pw[:, :, 0, 0], (1, 0)),
                  ((0, Cp - C), (0, Cp - C))).astype(jnp.bfloat16)

    kernel = _make_aspp_kernel(TH, THp, Wa, Cp, KH, KW, dilation)

    need = _tile_vmem_bytes(TH, Wa, Wp_al, Cp, pad)
    vmem_limit = int(min(max(2 * need, 32 * 1024 * 1024), 112 * 1024 * 1024))

    out = pl.pallas_call(
        kernel,
        out_shape=jax.ShapeDtypeStruct((N, H_al, Wa, Cp), jnp.float32),
        grid_spec=pltpu.PrefetchScalarGridSpec(
            num_scalar_prefetch=0,
            grid=(N, nH),
            in_specs=[
                pl.BlockSpec(memory_space=pl.ANY),                      # haloed rows DMA'd manually
                pl.BlockSpec((KH * KW, Cp), lambda n, h: (0, 0)),
                pl.BlockSpec((1, Cp), lambda n, h: (0, 0)),
                pl.BlockSpec((Cp, Cp), lambda n, h: (0, 0)),
            ],
            out_specs=pl.BlockSpec((None, TH, Wa, Cp),
                                   lambda n, h: (n, h, 0, 0)),
            scratch_shapes=[
                pltpu.VMEM((2, THp, Wp_al, Cp), jnp.bfloat16),          # double-buffered window
                pltpu.SemaphoreType.DMA((2,)),
                pltpu.VMEM((TH, Wa, Cp), jnp.float32),                  # depthwise accumulator
            ]),
        compiler_params=pltpu.CompilerParams(
            dimension_semantics=("parallel", "arbitrary"),
            vmem_limit_bytes=vmem_limit),
    )(xp, wdw, shift, wpw)

    out = out[:, :H, :W, :C]
    return jnp.transpose(out, (0, 3, 1, 2)).astype(x_nchw.dtype)


def aspp_reference(x_nchw, w_dw, gamma, beta, mean, var, w_pw, dilation, eps=1e-3):
    """Pure-JAX reference matching the PyTorch forward (eval-mode BN)."""
    pad = 0 if dilation == 1 else dilation
    C = x_nchw.shape[1]
    y = lax.conv_general_dilated(
        x_nchw, w_dw, (1, 1), ((pad, pad), (pad, pad)),
        rhs_dilation=(dilation, dilation),
        dimension_numbers=("NCHW", "OIHW", "NCHW"),
        feature_group_count=C)
    inv = (gamma / jnp.sqrt(var + eps))[None, :, None, None]
    y = (y - mean[None, :, None, None]) * inv + beta[None, :, None, None]
    y = jnp.maximum(y, 0.0)
    z = lax.conv_general_dilated(
        y, w_pw, (1, 1), ((0, 0), (0, 0)),
        dimension_numbers=("NCHW", "OIHW", "NCHW"))
    return jnp.maximum(z, 0.0)


if __name__ == "__main__":
    # small deterministic example: inplanes = planes = 8, spatial 16x16
    N, C, H, W = 2, 8, 16, 16
    key = jax.random.PRNGKey(0)

    for dilation in (2, 1):
        KH = KW = 3 if dilation != 1 else 1
        kx, kdw, kpw, key = jax.random.split(key, 4)

        x = jax.random.normal(kx, (N, C, H, W), jnp.float32)

        # PyTorch _init_weight: normal(0, sqrt(2/n)), n = kh*kw*out_channels
        w_dw = jax.random.normal(kdw, (C, 1, KH, KW), jnp.float32) * math.sqrt(2.0 / (KH * KW * C))
        w_pw = jax.random.normal(kpw, (C, C, 1, 1), jnp.float32) * math.sqrt(2.0 / C)

        # BatchNorm2d after _init_weight: gamma=1, beta=0, running stats (0, 1)
        gamma = jnp.ones((C,), jnp.float32)
        beta = jnp.zeros((C,), jnp.float32)
        mean = jnp.zeros((C,), jnp.float32)
        var = jnp.ones((C,), jnp.float32)

        out = jax.block_until_ready(
            aspp_forward(x, w_dw, gamma, beta, mean, var, w_pw, dilation))
        ref = aspp_reference(x, w_dw, gamma, beta, mean, var, w_pw, dilation)
        assert out.shape == (N, C, H, W)
        np.testing.assert_allclose(np.asarray(out), np.asarray(ref),
                                   rtol=2e-2, atol=2e-2)

    print("KERNEL_OK")
</pallas_src>

<mosaic_0001>
module attributes {stable_mosaic.version = 11 : i64} {
  func.func @kernel(%arg0: i32, %arg1: i32, %arg2: memref<2x20x24x128xbf16, #tpu.memory_space<any>>, %arg3: memref<9x128xf32, #tpu.memory_space<vmem>>, %arg4: memref<1x128xf32, #tpu.memory_space<vmem>>, %arg5: memref<128x128xbf16, #tpu.memory_space<vmem>>, %arg6: memref<1x16x16x128xf32, #tpu.memory_space<vmem>>, %arg7: memref<2x20x24x128xbf16, #tpu.memory_space<vmem>>, %arg8: memref<2x!tpu.dma_semaphore, #tpu.memory_space<semaphore_mem>>, %arg9: memref<16x16x128xf32, #tpu.memory_space<vmem>>) attributes {dimension_semantics = [#tpu.dimension_semantics<parallel>, #tpu.dimension_semantics<arbitrary>], iteration_bounds = array<i64: 2, 1>, scalar_prefetch = 0 : i64, scratch_operands = 3 : i64, tpu.core_type = #tpu.core_type<tc>, window_params = [{}, {pipeline_mode = #tpu.pipeline_mode<synchronous>, transform_indices = @transform_1, window_bounds = array<i64: 9, 128>}, {pipeline_mode = #tpu.pipeline_mode<synchronous>, transform_indices = @transform_2, window_bounds = array<i64: 1, 128>}, {pipeline_mode = #tpu.pipeline_mode<synchronous>, transform_indices = @transform_3, window_bounds = array<i64: 128, 128>}, {transform_indices = @transform_4, window_bounds = array<i64: 1, 16, 16, 128>}]} {
    %c2_i32 = arith.constant 2 : i32
    %c0_i32 = arith.constant 0 : i32
    %0 = arith.cmpi eq, %c2_i32, %c0_i32 : i32
    %c1_i32 = arith.constant 1 : i32
    %1 = arith.select %0, %c1_i32, %c2_i32 : i32
    %2 = arith.remsi %arg1, %1 : i32
    %c0_i32_0 = arith.constant 0 : i32
    %3 = arith.cmpi ne, %2, %c0_i32_0 : i32
    %c0_i32_1 = arith.constant 0 : i32
    %4 = arith.cmpi slt, %2, %c0_i32_1 : i32
    %c0_i32_2 = arith.constant 0 : i32
    %5 = arith.cmpi slt, %1, %c0_i32_2 : i32
    %6 = arith.xori %4, %5 : i1
    %7 = arith.andi %6, %3 : i1
    %8 = arith.addi %2, %1 : i32
    %9 = arith.select %7, %8, %2 : i32
    %c0_i32_3 = arith.constant 0 : i32
    %10 = arith.cmpi eq, %arg1, %c0_i32_3 : i32
    %11 = arith.extui %10 : i1 to i32
    %c0_i32_4 = arith.constant 0 : i32
    %12 = arith.cmpi ne, %11, %c0_i32_4 : i32
    scf.if %12 {
      %c0_i32_104 = arith.constant 0 : i32
      %c0_i32_105 = arith.constant 0 : i32
      %c0_i32_106 = arith.constant 0 : i32
      %c0_i32_107 = arith.constant 0 : i32
      %c0_i32_108 = arith.constant 0 : i32
      %123 = tpu.memref_slice %arg2[%arg0, %c0_i32_106, %c0_i32_107, %c0_i32_108] : memref<2x20x24x128xbf16, #tpu.memory_space<any>> -> memref<1x20x24x128xbf16, #tpu.memory_space<any>>
      %124 = tpu.memref_squeeze %123 : memref<1x20x24x128xbf16, #tpu.memory_space<any>> -> memref<20x24x128xbf16, #tpu.memory_space<any>>
      %c0_i32_109 = arith.constant 0 : i32
      %c0_i32_110 = arith.constant 0 : i32
      %c0_i32_111 = arith.constant 0 : i32
      %125 = tpu.memref_slice %arg7[%c0_i32_104, %c0_i32_109, %c0_i32_110, %c0_i32_111] : memref<2x20x24x128xbf16, #tpu.memory_space<vmem>> -> memref<1x20x24x128xbf16, #tpu.memory_space<vmem>>
      %126 = tpu.memref_squeeze %125 : memref<1x20x24x128xbf16, #tpu.memory_space<vmem>> -> memref<20x24x128xbf16, #tpu.memory_space<vmem>>
      %127 = tpu.memref_slice %arg8[%c0_i32_105] : memref<2x!tpu.dma_semaphore, #tpu.memory_space<semaphore_mem>> -> memref<1x!tpu.dma_semaphore, #tpu.memory_space<semaphore_mem>>
      %128 = tpu.memref_squeeze %127 : memref<1x!tpu.dma_semaphore, #tpu.memory_space<semaphore_mem>> -> memref<!tpu.dma_semaphore, #tpu.memory_space<semaphore_mem>>
      tpu.enqueue_dma source(%124 : memref<20x24x128xbf16, #tpu.memory_space<any>>) target(%126 : memref<20x24x128xbf16, #tpu.memory_space<vmem>>) target_semaphore(%128 : memref<!tpu.dma_semaphore, #tpu.memory_space<semaphore_mem>>)
    } else {
    }
    %c16_i32 = arith.constant 16 : i32
    %13 = arith.muli %arg1, %c16_i32 : i32
    %c0_i32_5 = arith.constant 0 : i32
    %c0_i32_6 = arith.constant 0 : i32
    %14 = tpu.memref_slice %arg2[%arg0, %13, %c0_i32_5, %c0_i32_6] : memref<2x20x24x128xbf16, #tpu.memory_space<any>> -> memref<1x20x24x128xbf16, #tpu.memory_space<any>>
    %15 = tpu.memref_squeeze %14 : memref<1x20x24x128xbf16, #tpu.memory_space<any>> -> memref<20x24x128xbf16, #tpu.memory_space<any>>
    %c0_i32_7 = arith.constant 0 : i32
    %c0_i32_8 = arith.constant 0 : i32
    %c0_i32_9 = arith.constant 0 : i32
    %16 = tpu.memref_slice %arg7[%9, %c0_i32_7, %c0_i32_8, %c0_i32_9] : memref<2x20x24x128xbf16, #tpu.memory_space<vmem>> -> memref<1x20x24x128xbf16, #tpu.memory_space<vmem>>
    %17 = tpu.memref_squeeze %16 : memref<1x20x24x128xbf16, #tpu.memory_space<vmem>> -> memref<20x24x128xbf16, #tpu.memory_space<vmem>>
    %18 = tpu.memref_slice %arg8[%9] : memref<2x!tpu.dma_semaphore, #tpu.memory_space<semaphore_mem>> -> memref<1x!tpu.dma_semaphore, #tpu.memory_space<semaphore_mem>>
    %19 = tpu.memref_squeeze %18 : memref<1x!tpu.dma_semaphore, #tpu.memory_space<semaphore_mem>> -> memref<!tpu.dma_semaphore, #tpu.memory_space<semaphore_mem>>
    tpu.wait_dma2 semaphore(%19 : memref<!tpu.dma_semaphore, #tpu.memory_space<semaphore_mem>>) src(%15 : memref<20x24x128xbf16, #tpu.memory_space<any>>) dst(%17 : memref<20x24x128xbf16, #tpu.memory_space<vmem>>)
    %c1_i32_10 = arith.constant 1 : i32
    %20 = arith.addi %arg1, %c1_i32_10 : i32
    %c1_i32_11 = arith.constant 1 : i32
    %21 = arith.cmpi slt, %20, %c1_i32_11 : i32
    %22 = arith.extui %21 : i1 to i32
    %c0_i32_12 = arith.constant 0 : i32
    %23 = arith.cmpi ne, %22, %c0_i32_12 : i32
    scf.if %23 {
      %c1_i32_104 = arith.constant 1 : i32
      %123 = arith.addi %arg1, %c1_i32_104 : i32
      %c1_i32_105 = arith.constant 1 : i32
      %124 = arith.subi %c1_i32_105, %9 : i32
      %c16_i32_106 = arith.constant 16 : i32
      %125 = arith.muli %123, %c16_i32_106 : i32
      %c0_i32_107 = arith.constant 0 : i32
      %c0_i32_108 = arith.constant 0 : i32
      %126 = tpu.memref_slice %arg2[%arg0, %125, %c0_i32_107, %c0_i32_108] : memref<2x20x24x128xbf16, #tpu.memory_space<any>> -> memref<1x20x24x128xbf16, #tpu.memory_space<any>>
      %127 = tpu.memref_squeeze %126 : memref<1x20x24x128xbf16, #tpu.memory_space<any>> -> memref<20x24x128xbf16, #tpu.memory_space<any>>
      %c0_i32_109 = arith.constant 0 : i32
      %c0_i32_110 = arith.constant 0 : i32
      %c0_i32_111 = arith.constant 0 : i32
      %128 = tpu.memref_slice %arg7[%124, %c0_i32_109, %c0_i32_110, %c0_i32_111] : memref<2x20x24x128xbf16, #tpu.memory_space<vmem>> -> memref<1x20x24x128xbf16, #tpu.memory_space<vmem>>
      %129 = tpu.memref_squeeze %128 : memref<1x20x24x128xbf16, #tpu.memory_space<vmem>> -> memref<20x24x128xbf16, #tpu.memory_space<vmem>>
      %130 = tpu.memref_slice %arg8[%124] : memref<2x!tpu.dma_semaphore, #tpu.memory_space<semaphore_mem>> -> memref<1x!tpu.dma_semaphore, #tpu.memory_space<semaphore_mem>>
      %131 = tpu.memref_squeeze %130 : memref<1x!tpu.dma_semaphore, #tpu.memory_space<semaphore_mem>> -> memref<!tpu.dma_semaphore, #tpu.memory_space<semaphore_mem>>
      tpu.enqueue_dma source(%127 : memref<20x24x128xbf16, #tpu.memory_space<any>>) target(%129 : memref<20x24x128xbf16, #tpu.memory_space<vmem>>) target_semaphore(%131 : memref<!tpu.dma_semaphore, #tpu.memory_space<semaphore_mem>>)
    } else {
    }
    %c0_i32_13 = arith.constant 0 : i32
    %c0_i32_14 = arith.constant 0 : i32
    %c0_i32_15 = arith.constant 0 : i32
    %24 = tpu.memref_slice %arg7[%9, %c0_i32_13, %c0_i32_14, %c0_i32_15] : memref<2x20x24x128xbf16, #tpu.memory_space<vmem>> -> memref<1x20x24x128xbf16, #tpu.memory_space<vmem>>
    %25 = tpu.memref_squeeze %24 : memref<1x20x24x128xbf16, #tpu.memory_space<vmem>> -> memref<20x24x128xbf16, #tpu.memory_space<vmem>>
    %c0 = arith.constant 0 : index
    %c0_16 = arith.constant 0 : index
    %c0_17 = arith.constant 0 : index
    %26 = vector.load %25[%c0, %c0_16, %c0_17] : memref<20x24x128xbf16, #tpu.memory_space<vmem>>, vector<20x16x128xbf16>
    %27 = arith.extf %26 : vector<20x16x128xbf16> to vector<20x16x128xf32>
    %c0_18 = arith.constant 0 : index
    %c0_19 = arith.constant 0 : index
    %28 = vector.load %arg3[%c0_18, %c0_19] : memref<9x128xf32, #tpu.memory_space<vmem>>, vector<1x128xf32>
    %29 = vector.shape_cast %28 : vector<1x128xf32> to vector<1x1x128xf32>
    %30 = vector.extract_strided_slice %27 {offsets = [0, 0, 0], sizes = [16, 16, 128], strides = [1, 1, 1]} : vector<20x16x128xf32> to vector<16x16x128xf32>
    %31 = vector.broadcast %29 : vector<1x1x128xf32> to vector<16x16x128xf32>
    %32 = arith.mulf %30, %31 : vector<16x16x128xf32>
    %c0_20 = arith.constant 0 : index
    %c0_21 = arith.constant 0 : index
    %c0_22 = arith.constant 0 : index
    %33 = vector.load %arg9[%c0_20, %c0_21, %c0_22] : memref<16x16x128xf32, #tpu.memory_space<vmem>>, vector<16x16x128xf32>
    tpu.vector_store %arg9[%c0_20, %c0_21, %c0_22], %32 {strides = array<i32>} : memref<16x16x128xf32, #tpu.memory_space<vmem>>, vector<16x16x128xf32>,
    %c3 = arith.constant 3 : index
    %c0_23 = arith.constant 0 : index
    %34 = vector.load %arg3[%c3, %c0_23] : memref<9x128xf32, #tpu.memory_space<vmem>>, vector<1x128xf32>
    %35 = vector.shape_cast %34 : vector<1x128xf32> to vector<1x1x128xf32>
    %36 = vector.extract_strided_slice %27 {offsets = [2, 0, 0], sizes = [16, 16, 128], strides = [1, 1, 1]} : vector<20x16x128xf32> to vector<16x16x128xf32>
    %37 = vector.broadcast %35 : vector<1x1x128xf32> to vector<16x16x128xf32>
    %38 = arith.mulf %36, %37 : vector<16x16x128xf32>
    %c0_24 = arith.constant 0 : index
    %c0_25 = arith.constant 0 : index
    %c0_26 = arith.constant 0 : index
    %39 = vector.load %arg9[%c0_24, %c0_25, %c0_26] : memref<16x16x128xf32, #tpu.memory_space<vmem>>, vector<16x16x128xf32>
    %40 = arith.addf %39, %38 : vector<16x16x128xf32>
    %c0_27 = arith.constant 0 : index
    %c0_28 = arith.constant 0 : index
    %c0_29 = arith.constant 0 : index
    %41 = vector.load %arg9[%c0_27, %c0_28, %c0_29] : memref<16x16x128xf32, #tpu.memory_space<vmem>>, vector<16x16x128xf32>
    tpu.vector_store %arg9[%c0_27, %c0_28, %c0_29], %40 {strides = array<i32>} : memref<16x16x128xf32, #tpu.memory_space<vmem>>, vector<16x16x128xf32>,
    %c6 = arith.constant 6 : index
    %c0_30 = arith.constant 0 : index
    %42 = vector.load %arg3[%c6, %c0_30] : memref<9x128xf32, #tpu.memory_space<vmem>>, vector<1x128xf32>
    %43 = vector.shape_cast %42 : vector<1x128xf32> to vector<1x1x128xf32>
    %44 = vector.extract_strided_slice %27 {offsets = [4, 0, 0], sizes = [16, 16, 128], strides = [1, 1, 1]} : vector<20x16x128xf32> to vector<16x16x128xf32>
    %45 = vector.broadcast %43 : vector<1x1x128xf32> to vector<16x16x128xf32>
    %46 = arith.mulf %44, %45 : vector<16x16x128xf32>
    %c0_31 = arith.constant 0 : index
    %c0_32 = arith.constant 0 : index
    %c0_33 = arith.constant 0 : index
    %47 = vector.load %arg9[%c0_31, %c0_32, %c0_33] : memref<16x16x128xf32, #tpu.memory_space<vmem>>, vector<16x16x128xf32>
    %48 = arith.addf %47, %46 : vector<16x16x128xf32>
    %c0_34 = arith.constant 0 : index
    %c0_35 = arith.constant 0 : index
    %c0_36 = arith.constant 0 : index
    %49 = vector.load %arg9[%c0_34, %c0_35, %c0_36] : memref<16x16x128xf32, #tpu.memory_space<vmem>>, vector<16x16x128xf32>
    tpu.vector_store %arg9[%c0_34, %c0_35, %c0_36], %48 {strides = array<i32>} : memref<16x16x128xf32, #tpu.memory_space<vmem>>, vector<16x16x128xf32>,
    %c0_i32_37 = arith.constant 0 : i32
    %c0_i32_38 = arith.constant 0 : i32
    %c0_i32_39 = arith.constant 0 : i32
    %50 = tpu.memref_slice %arg7[%9, %c0_i32_37, %c0_i32_38, %c0_i32_39] : memref<2x20x24x128xbf16, #tpu.memory_space<vmem>> -> memref<1x20x24x128xbf16, #tpu.memory_space<vmem>>
    %51 = tpu.memref_squeeze %50 : memref<1x20x24x128xbf16, #tpu.memory_space<vmem>> -> memref<20x24x128xbf16, #tpu.memory_space<vmem>>
    %c0_40 = arith.constant 0 : index
    %c2 = arith.constant 2 : index
    %c0_41 = arith.constant 0 : index
    %52 = vector.load %51[%c0_40, %c2, %c0_41] : memref<20x24x128xbf16, #tpu.memory_space<vmem>>, vector<20x16x128xbf16>
    %53 = arith.extf %52 : vector<20x16x128xbf16> to vector<20x16x128xf32>
    %c1 = arith.constant 1 : index
    %c0_42 = arith.constant 0 : index
    %54 = vector.load %arg3[%c1, %c0_42] : memref<9x128xf32, #tpu.memory_space<vmem>>, vector<1x128xf32>
    %55 = vector.shape_cast %54 : vector<1x128xf32> to vector<1x1x128xf32>
    %56 = vector.extract_strided_slice %53 {offsets = [0, 0, 0], sizes = [16, 16, 128], strides = [1, 1, 1]} : vector<20x16x128xf32> to vector<16x16x128xf32>
    %57 = vector.broadcast %55 : vector<1x1x128xf32> to vector<16x16x128xf32>
    %58 = arith.mulf %56, %57 : vector<16x16x128xf32>
    %c0_43 = arith.constant 0 : index
    %c0_44 = arith.constant 0 : index
    %c0_45 = arith.constant 0 : index
    %59 = vector.load %arg9[%c0_43, %c0_44, %c0_45] : memref<16x16x128xf32, #tpu.memory_space<vmem>>, vector<16x16x128xf32>
    %60 = arith.addf %59, %58 : vector<16x16x128xf32>
    %c0_46 = arith.constant 0 : index
    %c0_47 = arith.constant 0 : index
    %c0_48 = arith.constant 0 : index
    %61 = vector.load %arg9[%c0_46, %c0_47, %c0_48] : memref<16x16x128xf32, #tpu.memory_space<vmem>>, vector<16x16x128xf32>
    tpu.vector_store %arg9[%c0_46, %c0_47, %c0_48], %60 {strides = array<i32>} : memref<16x16x128xf32, #tpu.memory_space<vmem>>, vector<16x16x128xf32>,
    %c4 = arith.constant 4 : index
    %c0_49 = arith.constant 0 : index
    %62 = vector.load %arg3[%c4, %c0_49] : memref<9x128xf32, #tpu.memory_space<vmem>>, vector<1x128xf32>
    %63 = vector.shape_cast %62 : vector<1x128xf32> to vector<1x1x128xf32>
    %64 = vector.extract_strided_slice %53 {offsets = [2, 0, 0], sizes = [16, 16, 128], strides = [1, 1, 1]} : vector<20x16x128xf32> to vector<16x16x128xf32>
    %65 = vector.broadcast %63 : vector<1x1x128xf32> to vector<16x16x128xf32>
    %66 = arith.mulf %64, %65 : vector<16x16x128xf32>
    %c0_50 = arith.constant 0 : index
    %c0_51 = arith.constant 0 : index
    %c0_52 = arith.constant 0 : index
    %67 = vector.load %arg9[%c0_50, %c0_51, %c0_52] : memref<16x16x128xf32, #tpu.memory_space<vmem>>, vector<16x16x128xf32>
    %68 = arith.addf %67, %66 : vector<16x16x128xf32>
    %c0_53 = arith.constant 0 : index
    %c0_54 = arith.constant 0 : index
    %c0_55 = arith.constant 0 : index
    %69 = vector.load %arg9[%c0_53, %c0_54, %c0_55] : memref<16x16x128xf32, #tpu.memory_space<vmem>>, vector<16x16x128xf32>
    tpu.vector_store %arg9[%c0_53, %c0_54, %c0_55], %68 {strides = array<i32>} : memref<16x16x128xf32, #tpu.memory_space<vmem>>, vector<16x16x128xf32>,
    %c7 = arith.constant 7 : index
    %c0_56 = arith.constant 0 : index
    %70 = vector.load %arg3[%c7, %c0_56] : memref<9x128xf32, #tpu.memory_space<vmem>>, vector<1x128xf32>
    %71 = vector.shape_cast %70 : vector<1x128xf32> to vector<1x1x128xf32>
    %72 = vector.extract_strided_slice %53 {offsets = [4, 0, 0], sizes = [16, 16, 128], strides = [1, 1, 1]} : vector<20x16x128xf32> to vector<16x16x128xf32>
    %73 = vector.broadcast %71 : vector<1x1x128xf32> to vector<16x16x128xf32>
    %74 = arith.mulf %72, %73 : vector<16x16x128xf32>
    %c0_57 = arith.constant 0 : index
    %c0_58 = arith.constant 0 : index
    %c0_59 = arith.constant 0 : index
    %75 = vector.load %arg9[%c0_57, %c0_58, %c0_59] : memref<16x16x128xf32, #tpu.memory_space<vmem>>, vector<16x16x128xf32>
    %76 = arith.addf %75, %74 : vector<16x16x128xf32>
    %c0_60 = arith.constant 0 : index
    %c0_61 = arith.constant 0 : index
    %c0_62 = arith.constant 0 : index
    %77 = vector.load %arg9[%c0_60, %c0_61, %c0_62] : memref<16x16x128xf32, #tpu.memory_space<vmem>>, vector<16x16x128xf32>
    tpu.vector_store %arg9[%c0_60, %c0_61, %c0_62], %76 {strides = array<i32>} : memref<16x16x128xf32, #tpu.memory_space<vmem>>, vector<16x16x128xf32>,
    %c0_i32_63 = arith.constant 0 : i32
    %c0_i32_64 = arith.constant 0 : i32
    %c0_i32_65 = arith.constant 0 : i32
    %78 = tpu.memref_slice %arg7[%9, %c0_i32_63, %c0_i32_64, %c0_i32_65] : memref<2x20x24x128xbf16, #tpu.memory_space<vmem>> -> memref<1x20x24x128xbf16, #tpu.memory_space<vmem>>
    %79 = tpu.memref_squeeze %78 : memref<1x20x24x128xbf16, #tpu.memory_space<vmem>> -> memref<20x24x128xbf16, #tpu.memory_space<vmem>>
    %c0_66 = arith.constant 0 : index
    %c4_67 = arith.constant 4 : index
    %c0_68 = arith.constant 0 : index
    %80 = vector.load %79[%c0_66, %c4_67, %c0_68] : memref<20x24x128xbf16, #tpu.memory_space<vmem>>, vector<20x16x128xbf16>
    %81 = arith.extf %80 : vector<20x16x128xbf16> to vector<20x16x128xf32>
    %c2_69 = arith.constant 2 : index
    %c0_70 = arith.constant 0 : index
    %82 = vector.load %arg3[%c2_69, %c0_70] : memref<9x128xf32, #tpu.memory_space<vmem>>, vector<1x128xf32>
    %83 = vector.shape_cast %82 : vector<1x128xf32> to vector<1x1x128xf32>
    %84 = vector.extract_strided_slice %81 {offsets = [0, 0, 0], sizes = [16, 16, 128], strides = [1, 1, 1]} : vector<20x16x128xf32> to vector<16x16x128xf32>
    %85 = vector.broadcast %83 : vector<1x1x128xf32> to vector<16x16x128xf32>
    %86 = arith.mulf %84, %85 : vector<16x16x128xf32>
    %c0_71 = arith.constant 0 : index
    %c0_72 = arith.constant 0 : index
    %c0_73 = arith.constant 0 : index
    %87 = vector.load %arg9[%c0_71, %c0_72, %c0_73] : memref<16x16x128xf32, #tpu.memory_space<vmem>>, vector<16x16x128xf32>
    %88 = arith.addf %87, %86 : vector<16x16x128xf32>
    %c0_74 = arith.constant 0 : index
    %c0_75 = arith.constant 0 : index
    %c0_76 = arith.constant 0 : index
    %89 = vector.load %arg9[%c0_74, %c0_75, %c0_76] : memref<16x16x128xf32, #tpu.memory_space<vmem>>, vector<16x16x128xf32>
    tpu.vector_store %arg9[%c0_74, %c0_75, %c0_76], %88 {strides = array<i32>} : memref<16x16x128xf32, #tpu.memory_space<vmem>>, vector<16x16x128xf32>,
    %c5 = arith.constant 5 : index
    %c0_77 = arith.constant 0 : index
    %90 = vector.load %arg3[%c5, %c0_77] : memref<9x128xf32, #tpu.memory_space<vmem>>, vector<1x128xf32>
    %91 = vector.shape_cast %90 : vector<1x128xf32> to vector<1x1x128xf32>
    %92 = vector.extract_strided_slice %81 {offsets = [2, 0, 0], sizes = [16, 16, 128], strides = [1, 1, 1]} : vector<20x16x128xf32> to vector<16x16x128xf32>
    %93 = vector.broadcast %91 : vector<1x1x128xf32> to vector<16x16x128xf32>
    %94 = arith.mulf %92, %93 : vector<16x16x128xf32>
    %c0_78 = arith.constant 0 : index
    %c0_79 = arith.constant 0 : index
    %c0_80 = arith.constant 0 : index
    %95 = vector.load %arg9[%c0_78, %c0_79, %c0_80] : memref<16x16x128xf32, #tpu.memory_space<vmem>>, vector<16x16x128xf32>
    %96 = arith.addf %95, %94 : vector<16x16x128xf32>
    %c0_81 = arith.constant 0 : index
    %c0_82 = arith.constant 0 : index
    %c0_83 = arith.constant 0 : index
    %97 = vector.load %arg9[%c0_81, %c0_82, %c0_83] : memref<16x16x128xf32, #tpu.memory_space<vmem>>, vector<16x16x128xf32>
    tpu.vector_store %arg9[%c0_81, %c0_82, %c0_83], %96 {strides = array<i32>} : memref<16x16x128xf32, #tpu.memory_space<vmem>>, vector<16x16x128xf32>,
    %c8 = arith.constant 8 : index
    %c0_84 = arith.constant 0 : index
    %98 = vector.load %arg3[%c8, %c0_84] : memref<9x128xf32, #tpu.memory_space<vmem>>, vector<1x128xf32>
    %99 = vector.shape_cast %98 : vector<1x128xf32> to vector<1x1x128xf32>
    %100 = vector.extract_strided_slice %81 {offsets = [4, 0, 0], sizes = [16, 16, 128], strides = [1, 1, 1]} : vector<20x16x128xf32> to vector<16x16x128xf32>
    %101 = vector.broadcast %99 : vector<1x1x128xf32> to vector<16x16x128xf32>
    %102 = arith.mulf %100, %101 : vector<16x16x128xf32>
    %c0_85 = arith.constant 0 : index
    %c0_86 = arith.constant 0 : index
    %c0_87 = arith.constant 0 : index
    %103 = vector.load %arg9[%c0_85, %c0_86, %c0_87] : memref<16x16x128xf32, #tpu.memory_space<vmem>>, vector<16x16x128xf32>
    %104 = arith.addf %103, %102 : vector<16x16x128xf32>
    %c0_88 = arith.constant 0 : index
    %c0_89 = arith.constant 0 : index
    %c0_90 = arith.constant 0 : index
    %105 = vector.load %arg9[%c0_88, %c0_89, %c0_90] : memref<16x16x128xf32, #tpu.memory_space<vmem>>, vector<16x16x128xf32>
    tpu.vector_store %arg9[%c0_88, %c0_89, %c0_90], %104 {strides = array<i32>} : memref<16x16x128xf32, #tpu.memory_space<vmem>>, vector<16x16x128xf32>,
    %c0_91 = arith.constant 0 : index
    %c0_92 = arith.constant 0 : index
    %c0_93 = arith.constant 0 : index
    %106 = vector.load %arg9[%c0_91, %c0_92, %c0_93] : memref<16x16x128xf32, #tpu.memory_space<vmem>>, vector<16x16x128xf32>
    %c0_94 = arith.constant 0 : index
    %c0_95 = arith.constant 0 : index
    %107 = vector.load %arg4[%c0_94, %c0_95] : memref<1x128xf32, #tpu.memory_space<vmem>>, vector<1x128xf32>
    %108 = vector.shape_cast %107 : vector<1x128xf32> to vector<1x1x128xf32>
    %109 = vector.broadcast %108 : vector<1x1x128xf32> to vector<16x16x128xf32>
    %110 = arith.addf %106, %109 : vector<16x16x128xf32>
    %cst = arith.constant 0.000000e+00 : f32
    %111 = vector.broadcast %cst : f32 to vector<16x16x128xf32>
    %112 = arith.maximumf %110, %111 : vector<16x16x128xf32>
    %113 = vector.shape_cast %112 : vector<16x16x128xf32> to vector<256x128xf32>
    %114 = arith.truncf %113 : vector<256x128xf32> to vector<256x128xbf16>
    %c0_96 = arith.constant 0 : index
    %c0_97 = arith.constant 0 : index
    %115 = vector.load %arg5[%c0_96, %c0_97] : memref<128x128xbf16, #tpu.memory_space<vmem>>, vector<128x128xbf16>
    %cst_98 = arith.constant dense<0.000000e+00> : vector<256x128xf32>
    %116 = tpu.matmul %114, %115, %cst_98 {dimension_numbers = #tpu.dot_dimension_numbers<[1], [0], [0], [1], [0, 0, 1, 1], [], []>} : vector<256x128xbf16>, vector<128x128xbf16>, vector<256x128xf32> -> vector<256x128xf32>
    %cst_99 = arith.constant 0.000000e+00 : f32
    %117 = vector.broadcast %cst_99 : f32 to vector<256x128xf32>
    %118 = arith.maximumf %116, %117 : vector<256x128xf32>
    %119 = vector.shape_cast %118 : vector<256x128xf32> to vector<16x16x128xf32>
    %c0_100 = arith.constant 0 : index
    %c0_101 = arith.constant 0 : index
    %c0_102 = arith.constant 0 : index
    %c0_103 = arith.constant 0 : index
    %120 = vector.load %arg6[%c0_100, %c0_101, %c0_102, %c0_103] : memref<1x16x16x128xf32, #tpu.memory_space<vmem>>, vector<1x16x16x128xf32>
    %121 = vector.shape_cast %120 : vector<1x16x16x128xf32> to vector<16x16x128xf32>
    %122 = vector.shape_cast %119 : vector<16x16x128xf32> to vector<1x16x16x128xf32>
    tpu.vector_store %arg6[%c0_100, %c0_101, %c0_102, %c0_103], %122 {strides = array<i32>} : memref<1x16x16x128xf32, #tpu.memory_space<vmem>>, vector<1x16x16x128xf32>,
    return
  }
  func.func @transform_1(%arg0: i32, %arg1: i32) -> (i32, i32) {
    %c0_i32 = arith.constant 0 : i32
    %c0_i32_0 = arith.constant 0 : i32
    %c0_i32_1 = arith.constant 0 : i32
    return %c0_i32, %c0_i32_0 : i32, i32
  }
  func.func @transform_2(%arg0: i32, %arg1: i32) -> (i32, i32) {
    %c0_i32 = arith.constant 0 : i32
    %c0_i32_0 = arith.constant 0 : i32
    %c0_i32_1 = arith.constant 0 : i32
    return %c0_i32, %c0_i32_0 : i32, i32
  }
  func.func @transform_3(%arg0: i32, %arg1: i32) -> (i32, i32) {
    %c0_i32 = arith.constant 0 : i32
    %c0_i32_0 = arith.constant 0 : i32
    %c0_i32_1 = arith.constant 0 : i32
    return %c0_i32, %c0_i32_0 : i32, i32
  }
  func.func @transform_4(%arg0: i32, %arg1: i32) -> (i32, i32, i32, i32) {
    %c0_i32 = arith.constant 0 : i32
    %c0_i32_0 = arith.constant 0 : i32
    %c0_i32_1 = arith.constant 0 : i32
    return %arg0, %arg1, %c0_i32, %c0_i32_0 : i32, i32, i32, i32
  }
}

</mosaic_0001>

<llo_original>
// kernel: tpu_custom_call.1
$region0: #{tpu_custom_call.1}
  #allocation0 [shape = 'u32[]', space=smem, size = 0x4, offset = 0x4, fixed_abs, tag = 'smem constant byte address 0x4 - core index']
  #allocation1 [shape = 'u32[144,128]{1,0:T(1,128)}', space=vmem, size = 0x12000, scoped, tag = 'internal scratch']
  #allocation2 [shape = 'bf16[2,20,24,128]{3,2,1,0:T(8,128)(2,1)}', space=vmem, size = 0x3c000, scoped, tag = 'scratch operand']
  #allocation3 [shape = 's32[2]{0}', space=sflag, size = 0x8, scoped, tag = 'scratch operand']
  #allocation4 [shape = 'f32[16,16,128]{2,1,0:T(8,128)}', space=vmem, size = 0x20000, scoped, tag = 'scratch operand']
  #allocation11 [shape = 's32[]', space=sflag, size = 0x4, offset = 0, fixed_abs, tag = 'sflag constant byte address 0x0 - dummy sync flag']
  #allocation12 [shape = 's32[]', space=sflag, size = 0x4, offset = 0, fixed_abs, tag = 'sflag constant byte address 0x0 - dummy sync flag']
  #allocation13 [shape = 'u32[]', space=smem, size = 0x4, offset = 0x44, fixed_abs, tag = 'smem constant byte address 0x44 - assertion arg 0']
  #allocation14 [shape = 'u32[]', space=smem, size = 0x4, offset = 0x48, fixed_abs, tag = 'smem constant byte address 0x48 - assertion arg 1']
  #allocation15 [shape = 's32[]', space=sflag, size = 0x4, offset = 0, fixed_abs, tag = 'sflag constant byte address 0x0 - dummy sync flag']
  #allocation16 [shape = 's32[]', space=sflag, size = 0x4, offset = 0, fixed_abs, tag = 'sflag constant byte address 0x0 - dummy sync flag']
  %s0 = inlined_call_operand.hbm [shape: bf16[2,20,24,128], index: 0, kind: input, shape index: {}]
  %s1 = inlined_call_operand.hbm [shape: f32[9,128], index: 1, kind: input, shape index: {}]
  %s2 = inlined_call_operand.vmem [shape: f32[1,128], index: 2, kind: input, shape index: {}]
  %s3 = inlined_call_operand.hbm [shape: bf16[128,128], index: 3, kind: input, shape index: {}]
  %s4 = inlined_call_operand.hbm [shape: f32[2,16,16,128], index: 4, kind: output, shape index: {}]
  %s5 = sld [smem:[#allocation0]]
  $region69: #{tpu_custom_call.1} parent=0
    _
  %s7 = ssub.s32 1, %s5
  %s8 = scalar_select 0, %s7, %s5
  $region1: #{tpu_custom_call.1} parent=0
    #allocation5 [shape = 'u8[8192]{0}', space=vmem, size = 0x2000, scoped, tag = 'input window, operand 1, single buffered']
    #allocation6 [shape = 's32[2]{0}', space=sflag, size = 0x8, scoped, tag = 'scoped memory for tpu_custom_call.1']
    #allocation7 [shape = 's32[2]{0}', space=sflag, size = 0x8, scoped, tag = 'scoped memory for tpu_custom_call.1']
    #allocation8 [shape = 'u8[32768]{0}', space=vmem, size = 0x8000, scoped, tag = 'input window, operand 3, single buffered']
    #allocation9 [shape = 's32[1]{0}', space=sflag, size = 0x4, scoped, tag = 'scoped memory for tpu_custom_call.1']
    #allocation10 [shape = 'u8[262144]{0}', space=vmem, size = 0x40000, scoped, tag = 'output window, operand 0']
    %9 = vsyncpa [#allocation6], 0
    %10 = vsyncpa [#allocation9], 0
    %11 = vsyncpa [#allocation7], 0
    %s12 = scalar_lea.sflag [#allocation7], 1
    %13 = vsyncpa %s12, 0
    loop: start=0, step=1, limit=4
    $region2: #{tpu_custom_call.1} parent=1 // loop_pre_header
      _
    $region3: #{tpu_custom_call.1} parent=1 // loop_header
      %s15 = sphi 0, %s19
      %p16 = scmp.ge.s32.totalorder %s15, 4
      %s22 = sphi 0, %s34
      %s23 = sphi 0, %s30
      %s24 = sphi 0, %s22
      %s25 = sphi 0, %s23
      %s26 = sphi 0, %s24
      %s27 = sphi 0, %s25
      %s35 = sphi 0, %s35
      %s37 = sphi 0, %s35
      %s38 = sphi 0, %s37
      %s52 = sphi 0, %s38
      %s56 = sphi 0, %s56
      %s58 = sphi 0, %s56
      %s59 = sphi 0, %s58
      %s73 = sphi 0, %s59
      %s77 = sphi 0, %s77
      %s79 = sphi 0, %s77
      %s80 = sphi 0, %s79
      %s94 = sphi 0, %s80
      %s102 = sphi 0, %s104
      %s105 = sphi 0, %s102
      %s106 = sphi 0, %s105
      %s122 = sphi 0, %s106
    $region4: #{tpu_custom_call.1} parent=1 // loop_header_branch
      %18 = sbr.rel (%p16) target = $region8
    $region5: #{tpu_custom_call.1} parent=1 // loop_body
      %s20 = ssub.s32 %s15, 1
      %s21 = ssub.s32 %s15, 2
      %s28 = sadd.s32 1, %s23
      %p29 = scmp.ge.s32.totalorder %s28, 1
      %s30 = scalar_select %p29, 0, %s28
      %s31 = sadd.s32 1, %s22
      %s32 = scalar_select %p29, %s31, %s22
      %p33 = scmp.ge.s32.totalorder %s32, 2
      %s34 = scalar_select %p33, 0, %s32
      %s36 = sadd.s32 %s35, 1
      %p39 = scmp.eq.s32.totalorder %s15, 1
      %p40 = scmp.ne.s32.totalorder %s35, %s37
      %p41 = scmp.eq.s32.totalorder %s15, 0
      %p42 = por %p40, %p41
      %p43 = scmp.ne.s32.totalorder %s35, %s37
      %p44 = scmp.eq.s32.totalorder %s20, 1
      %p45 = por %p43, %p44
      %p46 = scmp.ne.s32.totalorder %s37, %s38
      %p47 = scmp.eq.s32.totalorder %s20, 0
      %p48 = por %p46, %p47
      %p49 = scmp.ne.s32.totalorder %s37, %s38
      %p50 = scmp.eq.s32.totalorder %s21, 1
      %p51 = por %p49, %p50
      %p53 = scmp.ne.s32.totalorder %s38, %s52
      %p54 = scmp.eq.s32.totalorder %s21, 0
      %p55 = por %p53, %p54
      %s57 = sadd.s32 %s56, 1
      %p60 = scmp.eq.s32.totalorder %s15, 1
      %p61 = scmp.ne.s32.totalorder %s56, %s58
      %p62 = scmp.eq.s32.totalorder %s15, 0
      %p63 = por %p61, %p62
      %p64 = scmp.ne.s32.totalorder %s56, %s58
      %p65 = scmp.eq.s32.totalorder %s20, 1
      %p66 = por %p64, %p65
      %p67 = scmp.ne.s32.totalorder %s58, %s59
      %p68 = scmp.eq.s32.totalorder %s20, 0
      %p69 = por %p67, %p68
      %p70 = scmp.ne.s32.totalorder %s58, %s59
      %p71 = scmp.eq.s32.totalorder %s21, 1
      %p72 = por %p70, %p71
      %p74 = scmp.ne.s32.totalorder %s59, %s73
      %p75 = scmp.eq.s32.totalorder %s21, 0
      %p76 = por %p74, %p75
      %s78 = sadd.s32 %s77, 1
      %p81 = scmp.eq.s32.totalorder %s15, 1
      %p82 = scmp.ne.s32.totalorder %s77, %s79
      %p83 = scmp.eq.s32.totalorder %s15, 0
      %p84 = por %p82, %p83
      %p85 = scmp.ne.s32.totalorder %s77, %s79
      %p86 = scmp.eq.s32.totalorder %s20, 1
      %p87 = por %p85, %p86
      %p88 = scmp.ne.s32.totalorder %s79, %s80
      %p89 = scmp.eq.s32.totalorder %s20, 0
      %p90 = por %p88, %p89
      %p91 = scmp.ne.s32.totalorder %s79, %s80
      %p92 = scmp.eq.s32.totalorder %s21, 1
      %p93 = por %p91, %p92
      %p95 = scmp.ne.s32.totalorder %s80, %s94
      %p96 = scmp.eq.s32.totalorder %s21, 0
      %p97 = por %p95, %p96
      %s98 = ssub.s32 %s22, %s34
      %s99 = ssub.s32 %s23, %s30
      %s100 = sor.u32 %s98, %s99
      %p101 = scmp.eq.s32.totalorder %s100, 0
      %s103 = sadd.s32 %s102, 1
      %s104 = scalar_select %p101, %s102, %s103
      %p107 = pneg %p101
      %p108 = scmp.eq.s32.totalorder %s15, 1
      %p109 = por %p107, %p108
      %p110 = scmp.ne.s32.totalorder %s102, %s105
      %p111 = scmp.eq.s32.totalorder %s15, 0
      %p112 = por %p110, %p111
      %p113 = scmp.ne.s32.totalorder %s102, %s105
      %p114 = scmp.eq.s32.totalorder %s20, 1
      %p115 = por %p113, %p114
      %p116 = scmp.ne.s32.totalorder %s105, %s106
      %p117 = scmp.eq.s32.totalorder %s20, 0
      %p118 = por %p116, %p117
      %p119 = scmp.ne.s32.totalorder %s105, %s106
      %p120 = scmp.eq.s32.totalorder %s21, 1
      %p121 = por %p119, %p120
      %p123 = scmp.ne.s32.totalorder %s106, %s122
      %p124 = scmp.eq.s32.totalorder %s21, 0
      %p125 = por %p123, %p124
      %p126 = scmp.le.s32.totalorder 1, %s15
      %p127 = scmp.lt.s32.totalorder %s15, 3
      %p128 = pnand %p126, %p127
      %p129 = pneg %p128
      // Predicated region
      $region9: #{tpu_custom_call.1} parent=5 // pred_check
        _
      $region10: #{tpu_custom_call.1} parent=5 // pred_check_branch
        %131 = sbr.rel (%p128) target = $region12
      $region11: #{tpu_custom_call.1} parent=5 // pred_region
        %s132 = ssub.s32 %s15, 1
        // Predicated region
        $region13: #{tpu_custom_call.1} parent=11 // pred_check
          %p133 = pneg %p48
        $region14: #{tpu_custom_call.1} parent=11 // pred_check_branch
          %135 = sbr.rel (%p133) target = $region16
        $region15: #{tpu_custom_call.1} parent=11 // pred_region
          %s137 = ssub.s32 256, 256
          %138 = vsyncadd [#allocation6], %s137
          %s139 = sshll.u32 [#allocation5], 4
          %s140 = int_to_ptr.vmem [resolvable:$true] %s139
          %145 = dma.hbm_to_vmem [thread:$0]  %s1, 256, %s140, [#allocation6], 128, 128, 8
        $region16: #{tpu_custom_call.1} parent=11 // pred_fallthru
          _
        // Predicated region
        $region17: #{tpu_custom_call.1} parent=11 // pred_check
          %p146 = pneg %p69
        $region18: #{tpu_custom_call.1} parent=11 // pred_check_branch
          %148 = sbr.rel (%p146) target = $region20
        $region19: #{tpu_custom_call.1} parent=11 // pred_region
          _
        $region20: #{tpu_custom_call.1} parent=11 // pred_fallthru
          _
        // Predicated region
        $region21: #{tpu_custom_call.1} parent=11 // pred_check
          %p149 = pneg %p90
        $region22: #{tpu_custom_call.1} parent=11 // pred_check_branch
          %151 = sbr.rel (%p149) target = $region24
        $region23: #{tpu_custom_call.1} parent=11 // pred_region
          %s153 = ssub.s32 1024, 1024
          %154 = vsyncadd [#allocation9], %s153
          %s155 = sshll.u32 [#allocation8], 4
          %s156 = int_to_ptr.vmem [resolvable:$true] %s155
          %161 = dma.hbm_to_vmem [thread:$0]  %s3, 1024, %s156, [#allocation9], 64, 64, 4
        $region24: #{tpu_custom_call.1} parent=11 // pred_fallthru
          _
      $region12: #{tpu_custom_call.1} parent=5 // pred_fallthru
        _
      %p162 = scmp.lt.s32.totalorder %s15, 2
      // Predicated region
      $region25: #{tpu_custom_call.1} parent=5 // pred_check
        %p163 = pneg %p162
      $region26: #{tpu_custom_call.1} parent=5 // pred_check_branch
        %165 = sbr.rel (%p163) target = $region28
      $region27: #{tpu_custom_call.1} parent=5 // pred_region
        _
      $region28: #{tpu_custom_call.1} parent=5 // pred_fallthru
        _
      %p166 = scmp.le.s32.totalorder 1, %s15
      %p167 = scmp.lt.s32.totalorder %s15, 3
      %p168 = pnand %p166, %p167
      %p169 = pneg %p168
      // Predicated region
      $region29: #{tpu_custom_call.1} parent=5 // pred_check
        _
      $region30: #{tpu_custom_call.1} parent=5 // pred_check_branch
        %171 = sbr.rel (%p168) target = $region32
      $region31: #{tpu_custom_call.1} parent=5 // pred_region
        %s172 = ssub.s32 %s15, 1
        // Predicated region
        $region33: #{tpu_custom_call.1} parent=31 // pred_check
          %p173 = pneg %p48
        $region34: #{tpu_custom_call.1} parent=31 // pred_check_branch
          %175 = sbr.rel (%p173) target = $region36
        $region35: #{tpu_custom_call.1} parent=31 // pred_region
          %176 = dma.done [#allocation6], 256
        $region36: #{tpu_custom_call.1} parent=31 // pred_fallthru
          _
        // Predicated region
        $region37: #{tpu_custom_call.1} parent=31 // pred_check
          %p177 = pneg %p90
        $region38: #{tpu_custom_call.1} parent=31 // pred_check_branch
          %179 = sbr.rel (%p177) target = $region40
        $region39: #{tpu_custom_call.1} parent=31 // pred_region
          %180 = dma.done [#allocation9], 1024
        $region40: #{tpu_custom_call.1} parent=31 // pred_fallthru
          _
        %p181 = pneg %p48
        %p182 = pneg %p45
        %p183 = pneg %p69
        %p184 = pneg %p66
        %p185 = pneg %p90
        %p186 = pneg %p87
        %p187 = pneg %p118
        %p188 = pneg %p115
        %s189 = sand.u32 %s105, 1
        %s190 = scalar_lea.sflag [#allocation7], %s189
        %s191 = sand.u32 %s105, 1
        %s192 = smul.addr %s191, 256
        %s193 = scalar_lea.vmem [#allocation10], %s192
        %s194 = smul.u32 16, %s25
        %p196 = scmp.lt.s32.totalorder %s25, 0
        %s197 = ssub.s32 0, %s25
        %s198 = scalar_select %p196, %s197, %s25
        %s199 = sand.u32 %s198, 1
        %s200 = ssub.s32 0, %s199
        %s201 = scalar_select %p196, %s200, %s199
        %p202 = scmp.ne.s32.totalorder %s201, 0
        %p203 = scmp.lt.s32.totalorder %s201, 0
        %p204 = pnand %p203, %p202
        %p205 = pneg %p204
        %s206 = sadd.s32 %s201, 2
        %s207 = scalar_select %p205, %s206, %s201
        %p208 = scmp.eq.s32.totalorder %s25, 0
        // Predicated region
        $region41: #{tpu_custom_call.1} parent=31 // pred_check
          %p209 = pneg %p208
        $region42: #{tpu_custom_call.1} parent=31 // pred_check_branch
          %211 = sbr.rel (%p209) target = $region44
        $region43: #{tpu_custom_call.1} parent=31 // pred_region
          %s212 = smul.u32 %s24, 60
          %s213 = smul.addr %s212, 64
          %s214 = scalar_lea.hbm %s0, %s213
          // Predicated region
          $region45: #{tpu_custom_call.1} parent=43 // pred_check
            _
          $region46: #{tpu_custom_call.1} parent=43 // pred_check_branch
            %216 = sbr.rel target = $region48
          $region47: #{tpu_custom_call.1} parent=43 // pred_region
            %217 = sst [smem:[#allocation13]] [#allocation12]
            %218 = sst [smem:[#allocation14]] [#allocation11]
          $region48: #{tpu_custom_call.1} parent=43 // pred_fallthru
            _
          %220 = shalt.err (0)
          %s222 = sshll.u32 [#allocation2], 4
          %s223 = int_to_ptr.vmem [resolvable:$true] %s222
          %225 = dma.hbm_to_vmem [thread:$0]  %s214, 3840, %s223, [#allocation3]
        $region44: #{tpu_custom_call.1} parent=31 // pred_fallthru
          _
        %s226 = smul.u32 %s207, 60
        %s227 = smul.addr %s226, 4
        %s228 = scalar_lea.vmem [#allocation2], %s227
        %s229 = scalar_lea.sflag [#allocation3], %s207
        %s230 = smul.u32 4, 20
        %s231 = smul.u32 %s230, 3
        %s232 = smul.u32 %s231, 1
        %s233 = sshll.u32 %s232, 4
        %234 = dma.done %s229, %s233
        %s235 = sadd.s32 %s25, 1
        %p236 = scmp.lt.s32.totalorder %s235, 1
        // Predicated region
        $region49: #{tpu_custom_call.1} parent=31 // pred_check
          %p237 = pneg %p236
        $region50: #{tpu_custom_call.1} parent=31 // pred_check_branch
          %239 = sbr.rel (%p237) target = $region52
        $region51: #{tpu_custom_call.1} parent=31 // pred_region
          %s240 = ssub.s32 1, %s207
          %s241 = smul.u32 %s235, 16
          %s242 = smul.u32 %s241, 3
          %s243 = smul.u32 %s24, 60
          %s244 = sadd.s32 %s242, %s243
          %s245 = smul.addr %s244, 64
          %s246 = scalar_lea.hbm %s0, %s245
          %s247 = smul.u32 %s240, 60
          %s248 = smul.addr %s247, 4
          %s249 = scalar_lea.vmem [#allocation2], %s248
          %s250 = scalar_lea.sflag [#allocation3], %s240
          // Predicated region
          $region53: #{tpu_custom_call.1} parent=51 // pred_check
            _
          $region54: #{tpu_custom_call.1} parent=51 // pred_check_branch
            %252 = sbr.rel target = $region56
          $region55: #{tpu_custom_call.1} parent=51 // pred_region
            %253 = sst [smem:[#allocation13]] [#allocation16]
            %254 = sst [smem:[#allocation14]] [#allocation15]
          $region56: #{tpu_custom_call.1} parent=51 // pred_fallthru
            _
          %256 = shalt.err (0)
          %s258 = sshll.u32 %s249, 4
          %s259 = int_to_ptr.vmem [resolvable:$true] %s258
          %261 = dma.hbm_to_vmem [thread:$0]  %s246, 3840, %s259, %s250
        $region52: #{tpu_custom_call.1} parent=31 // pred_fallthru
          _
        %v262 = vld [vmem:[%s228] sm:$0xf]
        %v263 = vld [vmem:[%s228 + $0x4] sm:$0xf]
        %v264 = vld [vmem:[%s228 + $0xc] sm:$0xf]
        %v265 = vld [vmem:[%s228 + $0x10] sm:$0xf]
        %v266 = vld [vmem:[%s228 + $0x18] sm:$0xf]
        %v267 = vld [vmem:[%s228 + $0x1c] sm:$0xf]
        %v268 = vld [vmem:[%s228 + $0x24] sm:$0xf]
        %v269 = vld [vmem:[%s228 + $0x28] sm:$0xf]
        %v270 = vld [vmem:[%s228 + $0x30] sm:$0xf]
        %v271 = vld [vmem:[%s228 + $0x34] sm:$0xf]
        %v272 = vld [vmem:[%s228 + $0x3c] sm:$0xf]
        %v273 = vld [vmem:[%s228 + $0x40] sm:$0xf]
        %v274 = vld [vmem:[%s228 + $0x48] sm:$0xf]
        %v275 = vld [vmem:[%s228 + $0x4c] sm:$0xf]
        %v276 = vld [vmem:[%s228 + $0x54] sm:$0xf]
        %v277 = vld [vmem:[%s228 + $0x58] sm:$0xf]
        %v278 = vld [vmem:[%s228 + $0x60] sm:$0xf]
        %v279 = vld [vmem:[%s228 + $0x64] sm:$0xf]
        %v280 = vld [vmem:[%s228 + $0x6c] sm:$0xf]
        %v281 = vld [vmem:[%s228 + $0x70] sm:$0xf]
        %v282 = vld [vmem:[%s228 + $0x78] sm:$0xf]
        %v283 = vld [vmem:[%s228 + $0x7c] sm:$0xf]
        %v284 = vld [vmem:[%s228 + $0x84] sm:$0xf]
        %v285 = vld [vmem:[%s228 + $0x88] sm:$0xf]
        %v286 = vld [vmem:[%s228 + $0x90] sm:$0xf]
        %v287 = vld [vmem:[%s228 + $0x94] sm:$0xf]
        %v288 = vld [vmem:[%s228 + $0x9c] sm:$0xf]
        %v289 = vld [vmem:[%s228 + $0xa0] sm:$0xf]
        %v290 = vld [vmem:[%s228 + $0xa8] sm:$0xf]
        %v291 = vld [vmem:[%s228 + $0xac] sm:$0xf]
        %v292 = vld [vmem:[%s228 + $0xb4] sm:$0xf]
        %v293 = vld [vmem:[%s228 + $0xb8] sm:$0xf]
        %v294 = vld [vmem:[%s228 + $0xc0] sm:$0xf]
        %v295 = vld [vmem:[%s228 + $0xc4] sm:$0xf]
        %v296 = vld [vmem:[%s228 + $0xcc] sm:$0xf]
        %v297 = vld [vmem:[%s228 + $0xd0] sm:$0xf]
        %v298 = vld [vmem:[%s228 + $0xd8] sm:$0xf]
        %v299 = vld [vmem:[%s228 + $0xdc] sm:$0xf]
        %v300 = vld [vmem:[%s228 + $0xe4] sm:$0xf]
        %v301 = vld [vmem:[%s228 + $0xe8] sm:$0xf]
        %v302 = vunpack.c.l.bf16 %v262
        %v303 = vunpack.c.l.bf16 %v263
        %v304 = vunpack.c.l.bf16 %v264
        %v305 = vunpack.c.l.bf16 %v265
        %v306 = vunpack.c.l.bf16 %v266
        %v307 = vunpack.c.l.bf16 %v267
        %v308 = vunpack.c.l.bf16 %v268
        %v309 = vunpack.c.l.bf16 %v269
        %v310 = vunpack.c.l.bf16 %v270
        %v311 = vunpack.c.l.bf16 %v271
        %v312 = vunpack.c.l.bf16 %v272
        %v313 = vunpack.c.l.bf16 %v273
        %v314 = vunpack.c.l.bf16 %v274
        %v315 = vunpack.c.l.bf16 %v275
        %v316 = vunpack.c.l.bf16 %v276
        %v317 = vunpack.c.l.bf16 %v277
        %v318 = vunpack.c.l.bf16 %v278
        %v319 = vunpack.c.l.bf16 %v279
        %v320 = vunpack.c.l.bf16 %v280
        %v321 = vunpack.c.l.bf16 %v281
        %v322 = vunpack.c.l.bf16 %v282
        %v323 = vunpack.c.l.bf16 %v283
        %v324 = vunpack.c.l.bf16 %v284
        %v325 = vunpack.c.l.bf16 %v285
        %v326 = vunpack.c.l.bf16 %v286
        %v327 = vunpack.c.l.bf16 %v287
        %v328 = vunpack.c.l.bf16 %v288
        %v329 = vunpack.c.l.bf16 %v289
        %v330 = vunpack.c.l.bf16 %v290
        %v331 = vunpack.c.l.bf16 %v291
        %v332 = vunpack.c.l.bf16 %v292
        %v333 = vunpack.c.l.bf16 %v293
        %v334 = vunpack.c.l.bf16 %v294
        %v335 = vunpack.c.l.bf16 %v295
        %v336 = vunpack.c.l.bf16 %v296
        %v337 = vunpack.c.l.bf16 %v297
        %v338 = vunpack.c.l.bf16 %v298
        %v339 = vunpack.c.l.bf16 %v299
        %v340 = vunpack.c.l.bf16 %v300
        %v341 = vunpack.c.l.bf16 %v301
        %v342 = vld [vmem:[#allocation5] sm:$0x1]
        %v343 = vlaneseq
        %v344 = vshrl.u32 %v343, 7
        %v345 = vsub.s32 0, %v344
        %v346 = vrot.slane %v342, %v345
        %v347 = vmul.f32 %v302, %v346
        %v348 = vmul.f32 %v303, %v346
        %v349 = vmul.f32 %v304, %v346
        %v350 = vmul.f32 %v305, %v346
        %v351 = vmul.f32 %v306, %v346
        %v352 = vmul.f32 %v307, %v346
        %v353 = vmul.f32 %v308, %v346
        %v354 = vmul.f32 %v309, %v346
        %v355 = vmul.f32 %v310, %v346
        %v356 = vmul.f32 %v311, %v346
        %v357 = vmul.f32 %v312, %v346
        %v358 = vmul.f32 %v313, %v346
        %v359 = vmul.f32 %v314, %v346
        %v360 = vmul.f32 %v315, %v346
        %v361 = vmul.f32 %v316, %v346
        %v362 = vmul.f32 %v317, %v346
        %v363 = vmul.f32 %v318, %v346
        %v364 = vmul.f32 %v319, %v346
        %v365 = vmul.f32 %v320, %v346
        %v366 = vmul.f32 %v321, %v346
        %v367 = vmul.f32 %v322, %v346
        %v368 = vmul.f32 %v323, %v346
        %v369 = vmul.f32 %v324, %v346
        %v370 = vmul.f32 %v325, %v346
        %v371 = vmul.f32 %v326, %v346
        %v372 = vmul.f32 %v327, %v346
        %v373 = vmul.f32 %v328, %v346
        %v374 = vmul.f32 %v329, %v346
        %v375 = vmul.f32 %v330, %v346
        %v376 = vmul.f32 %v331, %v346
        %v377 = vmul.f32 %v332, %v346
        %v378 = vmul.f32 %v333, %v346
        %379 = vst [vmem:[#allocation4] sm:$0xff] %v347
        %380 = vst [vmem:[#allocation4 + $0x8] sm:$0xff] %v348
        %381 = vst [vmem:[#allocation4 + $0x10] sm:$0xff] %v349
        %382 = vst [vmem:[#allocation4 + $0x18] sm:$0xff] %v350
        %383 = vst [vmem:[#allocation4 + $0x20] sm:$0xff] %v351
        %384 = vst [vmem:[#allocation4 + $0x28] sm:$0xff] %v352
        %385 = vst [vmem:[#allocation4 + $0x30] sm:$0xff] %v353
        %386 = vst [vmem:[#allocation4 + $0x38] sm:$0xff] %v354
        %387 = vst [vmem:[#allocation4 + $0x40] sm:$0xff] %v355
        %388 = vst [vmem:[#allocation4 + $0x48] sm:$0xff] %v356
        %389 = vst [vmem:[#allocation4 + $0x50] sm:$0xff] %v357
        %390 = vst [vmem:[#allocation4 + $0x58] sm:$0xff] %v358
        %391 = vst [vmem:[#allocation4 + $0x60] sm:$0xff] %v359
        %392 = vst [vmem:[#allocation4 + $0x68] sm:$0xff] %v360
        %393 = vst [vmem:[#allocation4 + $0x70] sm:$0xff] %v361
        %394 = vst [vmem:[#allocation4 + $0x78] sm:$0xff] %v362
        %395 = vst [vmem:[#allocation4 + $0x80] sm:$0xff] %v363
        %396 = vst [vmem:[#allocation4 + $0x88] sm:$0xff] %v364
        %397 = vst [vmem:[#allocation4 + $0x90] sm:$0xff] %v365
        %398 = vst [vmem:[#allocation4 + $0x98] sm:$0xff] %v366
        %399 = vst [vmem:[#allocation4 + $0xa0] sm:$0xff] %v367
        %400 = vst [vmem:[#allocation4 + $0xa8] sm:$0xff] %v368
        %401 = vst [vmem:[#allocation4 + $0xb0] sm:$0xff] %v369
        %402 = vst [vmem:[#allocation4 + $0xb8] sm:$0xff] %v370
        %403 = vst [vmem:[#allocation4 + $0xc0] sm:$0xff] %v371
        %404 = vst [vmem:[#allocation4 + $0xc8] sm:$0xff] %v372
        %405 = vst [vmem:[#allocation4 + $0xd0] sm:$0xff] %v373
        %406 = vst [vmem:[#allocation4 + $0xd8] sm:$0xff] %v374
        %407 = vst [vmem:[#allocation4 + $0xe0] sm:$0xff] %v375
        %408 = vst [vmem:[#allocation4 + $0xe8] sm:$0xff] %v376
        %409 = vst [vmem:[#allocation4 + $0xf0] sm:$0xff] %v377
        %410 = vst [vmem:[#allocation4 + $0xf8] sm:$0xff] %v378
        %v411 = vld [vmem:[#allocation5 + $0x3] sm:$0x1]
        %v412 = vlaneseq
        %v413 = vshrl.u32 %v412, 7
        %v414 = vsub.s32 0, %v413
        %v415 = vrot.slane %v411, %v414
        %v416 = vmul.f32 %v306, %v415
        %v417 = vmul.f32 %v307, %v415
        %v418 = vmul.f32 %v308, %v415
        %v419 = vmul.f32 %v309, %v415
        %v420 = vmul.f32 %v310, %v415
        %v421 = vmul.f32 %v311, %v415
        %v422 = vmul.f32 %v312, %v415
        %v423 = vmul.f32 %v313, %v415
        %v424 = vmul.f32 %v314, %v415
        %v425 = vmul.f32 %v315, %v415
        %v426 = vmul.f32 %v316, %v415
        %v427 = vmul.f32 %v317, %v415
        %v428 = vmul.f32 %v318, %v415
        %v429 = vmul.f32 %v319, %v415
        %v430 = vmul.f32 %v320, %v415
        %v431 = vmul.f32 %v321, %v415
        %v432 = vmul.f32 %v322, %v415
        %v433 = vmul.f32 %v323, %v415
        %v434 = vmul.f32 %v324, %v415
        %v435 = vmul.f32 %v325, %v415
        %v436 = vmul.f32 %v326, %v415
        %v437 = vmul.f32 %v327, %v415
        %v438 = vmul.f32 %v328, %v415
        %v439 = vmul.f32 %v329, %v415
        %v440 = vmul.f32 %v330, %v415
        %v441 = vmul.f32 %v331, %v415
        %v442 = vmul.f32 %v332, %v415
        %v443 = vmul.f32 %v333, %v415
        %v444 = vmul.f32 %v334, %v415
        %v445 = vmul.f32 %v335, %v415
        %v446 = vmul.f32 %v336, %v415
        %v447 = vmul.f32 %v337, %v415
        %v448 = vld [vmem:[#allocation4] sm:$0xff]
        %v449 = vld [vmem:[#allocation4 + $0x8] sm:$0xff]
        %v450 = vld [vmem:[#allocation4 + $0x10] sm:$0xff]
        %v451 = vld [vmem:[#allocation4 + $0x18] sm:$0xff]
        %v452 = vld [vmem:[#allocation4 + $0x20] sm:$0xff]
        %v453 = vld [vmem:[#allocation4 + $0x28] sm:$0xff]
        %v454 = vld [vmem:[#allocation4 + $0x30] sm:$0xff]
        %v455 = vld [vmem:[#allocation4 + $0x38] sm:$0xff]
        %v456 = vld [vmem:[#allocation4 + $0x40] sm:$0xff]
        %v457 = vld [vmem:[#allocation4 + $0x48] sm:$0xff]
        %v458 = vld [vmem:[#allocation4 + $0x50] sm:$0xff]
        %v459 = vld [vmem:[#allocation4 + $0x58] sm:$0xff]
        %v460 = vld [vmem:[#allocation4 + $0x60] sm:$0xff]
        %v461 = vld [vmem:[#allocation4 + $0x68] sm:$0xff]
        %v462 = vld [vmem:[#allocation4 + $0x70] sm:$0xff]
        %v463 = vld [vmem:[#allocation4 + $0x78] sm:$0xff]
        %v464 = vld [vmem:[#allocation4 + $0x80] sm:$0xff]
        %v465 = vld [vmem:[#allocation4 + $0x88] sm:$0xff]
        %v466 = vld [vmem:[#allocation4 + $0x90] sm:$0xff]
        %v467 = vld [vmem:[#allocation4 + $0x98] sm:$0xff]
        %v468 = vld [vmem:[#allocation4 + $0xa0] sm:$0xff]
        %v469 = vld [vmem:[#allocation4 + $0xa8] sm:$0xff]
        %v470 = vld [vmem:[#allocation4 + $0xb0] sm:$0xff]
        %v471 = vld [vmem:[#allocation4 + $0xb8] sm:$0xff]
        %v472 = vld [vmem:[#allocation4 + $0xc0] sm:$0xff]
        %v473 = vld [vmem:[#allocation4 + $0xc8] sm:$0xff]
        %v474 = vld [vmem:[#allocation4 + $0xd0] sm:$0xff]
        %v475 = vld [vmem:[#allocation4 + $0xd8] sm:$0xff]
        %v476 = vld [vmem:[#allocation4 + $0xe0] sm:$0xff]
        %v477 = vld [vmem:[#allocation4 + $0xe8] sm:$0xff]
        %v478 = vld [vmem:[#allocation4 + $0xf0] sm:$0xff]
        %v479 = vld [vmem:[#allocation4 + $0xf8] sm:$0xff]
        %v480 = vadd.f32 %v448, %v416
        %v481 = vadd.f32 %v449, %v417
        %v482 = vadd.f32 %v450, %v418
        %v483 = vadd.f32 %v451, %v419
        %v484 = vadd.f32 %v452, %v420
        %v485 = vadd.f32 %v453, %v421
        %v486 = vadd.f32 %v454, %v422
        %v487 = vadd.f32 %v455, %v423
        %v488 = vadd.f32 %v456, %v424
        %v489 = vadd.f32 %v457, %v425
        %v490 = vadd.f32 %v458, %v426
        %v491 = vadd.f32 %v459, %v427
        %v492 = vadd.f32 %v460, %v428
        %v493 = vadd.f32 %v461, %v429
        %v494 = vadd.f32 %v462, %v430
        %v495 = vadd.f32 %v463, %v431
        %v496 = vadd.f32 %v464, %v432
        %v497 = vadd.f32 %v465, %v433
        %v498 = vadd.f32 %v466, %v434
        %v499 = vadd.f32 %v467, %v435
        %v500 = vadd.f32 %v468, %v436
        %v501 = vadd.f32 %v469, %v437
        %v502 = vadd.f32 %v470, %v438
        %v503 = vadd.f32 %v471, %v439
        %v504 = vadd.f32 %v472, %v440
        %v505 = vadd.f32 %v473, %v441
        %v506 = vadd.f32 %v474, %v442
        %v507 = vadd.f32 %v475, %v443
        %v508 = vadd.f32 %v476, %v444
        %v509 = vadd.f32 %v477, %v445
        %v510 = vadd.f32 %v478, %v446
        %v511 = vadd.f32 %v479, %v447
        %512 = vst [vmem:[#allocation4] sm:$0xff] %v480
        %513 = vst [vmem:[#allocation4 + $0x8] sm:$0xff] %v481
        %514 = vst [vmem:[#allocation4 + $0x10] sm:$0xff] %v482
        %515 = vst [vmem:[#allocation4 + $0x18] sm:$0xff] %v483
        %516 = vst [vmem:[#allocation4 + $0x20] sm:$0xff] %v484
        %517 = vst [vmem:[#allocation4 + $0x28] sm:$0xff] %v485
        %518 = vst [vmem:[#allocation4 + $0x30] sm:$0xff] %v486
        %519 = vst [vmem:[#allocation4 + $0x38] sm:$0xff] %v487
        %520 = vst [vmem:[#allocation4 + $0x40] sm:$0xff] %v488
        %521 = vst [vmem:[#allocation4 + $0x48] sm:$0xff] %v489
        %522 = vst [vmem:[#allocation4 + $0x50] sm:$0xff] %v490
        %523 = vst [vmem:[#allocation4 + $0x58] sm:$0xff] %v491
        %524 = vst [vmem:[#allocation4 + $0x60] sm:$0xff] %v492
        %525 = vst [vmem:[#allocation4 + $0x68] sm:$0xff] %v493
        %526 = vst [vmem:[#allocation4 + $0x70] sm:$0xff] %v494
        %527 = vst [vmem:[#allocation4 + $0x78] sm:$0xff] %v495
        %528 = vst [vmem:[#allocation4 + $0x80] sm:$0xff] %v496
        %529 = vst [vmem:[#allocation4 + $0x88] sm:$0xff] %v497
        %530 = vst [vmem:[#allocation4 + $0x90] sm:$0xff] %v498
        %531 = vst [vmem:[#allocation4 + $0x98] sm:$0xff] %v499
        %532 = vst [vmem:[#allocation4 + $0xa0] sm:$0xff] %v500
        %533 = vst [vmem:[#allocation4 + $0xa8] sm:$0xff] %v501
        %534 = vst [vmem:[#allocation4 + $0xb0] sm:$0xff] %v502
        %535 = vst [vmem:[#allocation4 + $0xb8] sm:$0xff] %v503
        %536 = vst [vmem:[#allocation4 + $0xc0] sm:$0xff] %v504
        %537 = vst [vmem:[#allocation4 + $0xc8] sm:$0xff] %v505
        %538 = vst [vmem:[#allocation4 + $0xd0] sm:$0xff] %v506
        %539 = vst [vmem:[#allocation4 + $0xd8] sm:$0xff] %v507
        %540 = vst [vmem:[#allocation4 + $0xe0] sm:$0xff] %v508
        %541 = vst [vmem:[#allocation4 + $0xe8] sm:$0xff] %v509
        %542 = vst [vmem:[#allocation4 + $0xf0] sm:$0xff] %v510
        %543 = vst [vmem:[#allocation4 + $0xf8] sm:$0xff] %v511
        %v544 = vld [vmem:[#allocation5 + $0x6] sm:$0x1]
        %v545 = vlaneseq
        %v546 = vshrl.u32 %v545, 7
        %v547 = vsub.s32 0, %v546
        %v548 = vrot.slane %v544, %v547
        %v549 = vmul.f32 %v310, %v548
        %v550 = vmul.f32 %v311, %v548
        %v551 = vmul.f32 %v312, %v548
        %v552 = vmul.f32 %v313, %v548
        %v553 = vmul.f32 %v314, %v548
        %v554 = vmul.f32 %v315, %v548
        %v555 = vmul.f32 %v316, %v548
        %v556 = vmul.f32 %v317, %v548
        %v557 = vmul.f32 %v318, %v548
        %v558 = vmul.f32 %v319, %v548
        %v559 = vmul.f32 %v320, %v548
        %v560 = vmul.f32 %v321, %v548
        %v561 = vmul.f32 %v322, %v548
        %v562 = vmul.f32 %v323, %v548
        %v563 = vmul.f32 %v324, %v548
        %v564 = vmul.f32 %v325, %v548
        %v565 = vmul.f32 %v326, %v548
        %v566 = vmul.f32 %v327, %v548
        %v567 = vmul.f32 %v328, %v548
        %v568 = vmul.f32 %v329, %v548
        %v569 = vmul.f32 %v330, %v548
        %v570 = vmul.f32 %v331, %v548
        %v571 = vmul.f32 %v332, %v548
        %v572 = vmul.f32 %v333, %v548
        %v573 = vmul.f32 %v334, %v548
        %v574 = vmul.f32 %v335, %v548
        %v575 = vmul.f32 %v336, %v548
        %v576 = vmul.f32 %v337, %v548
        %v577 = vmul.f32 %v338, %v548
        %v578 = vmul.f32 %v339, %v548
        %v579 = vmul.f32 %v340, %v548
        %v580 = vmul.f32 %v341, %v548
        %v581 = vld [vmem:[#allocation4] sm:$0xff]
        %v582 = vld [vmem:[#allocation4 + $0x8] sm:$0xff]
        %v583 = vld [vmem:[#allocation4 + $0x10] sm:$0xff]
        %v584 = vld [vmem:[#allocation4 + $0x18] sm:$0xff]
        %v585 = vld [vmem:[#allocation4 + $0x20] sm:$0xff]
        %v586 = vld [vmem:[#allocation4 + $0x28] sm:$0xff]
        %v587 = vld [vmem:[#allocation4 + $0x30] sm:$0xff]
        %v588 = vld [vmem:[#allocation4 + $0x38] sm:$0xff]
        %v589 = vld [vmem:[#allocation4 + $0x40] sm:$0xff]
        %v590 = vld [vmem:[#allocation4 + $0x48] sm:$0xff]
        %v591 = vld [vmem:[#allocation4 + $0x50] sm:$0xff]
        %v592 = vld [vmem:[#allocation4 + $0x58] sm:$0xff]
        %v593 = vld [vmem:[#allocation4 + $0x60] sm:$0xff]
        %v594 = vld [vmem:[#allocation4 + $0x68] sm:$0xff]
        %v595 = vld [vmem:[#allocation4 + $0x70] sm:$0xff]
        %v596 = vld [vmem:[#allocation4 + $0x78] sm:$0xff]
        %v597 = vld [vmem:[#allocation4 + $0x80] sm:$0xff]
        %v598 = vld [vmem:[#allocation4 + $0x88] sm:$0xff]
        %v599 = vld [vmem:[#allocation4 + $0x90] sm:$0xff]
        %v600 = vld [vmem:[#allocation4 + $0x98] sm:$0xff]
        %v601 = vld [vmem:[#allocation4 + $0xa0] sm:$0xff]
        %v602 = vld [vmem:[#allocation4 + $0xa8] sm:$0xff]
        %v603 = vld [vmem:[#allocation4 + $0xb0] sm:$0xff]
        %v604 = vld [vmem:[#allocation4 + $0xb8] sm:$0xff]
        %v605 = vld [vmem:[#allocation4 + $0xc0] sm:$0xff]
        %v606 = vld [vmem:[#allocation4 + $0xc8] sm:$0xff]
        %v607 = vld [vmem:[#allocation4 + $0xd0] sm:$0xff]
        %v608 = vld [vmem:[#allocation4 + $0xd8] sm:$0xff]
        %v609 = vld [vmem:[#allocation4 + $0xe0] sm:$0xff]
        %v610 = vld [vmem:[#allocation4 + $0xe8] sm:$0xff]
        %v611 = vld [vmem:[#allocation4 + $0xf0] sm:$0xff]
        %v612 = vld [vmem:[#allocation4 + $0xf8] sm:$0xff]
        %v613 = vadd.f32 %v581, %v549
        %v614 = vadd.f32 %v582, %v550
        %v615 = vadd.f32 %v583, %v551
        %v616 = vadd.f32 %v584, %v552
        %v617 = vadd.f32 %v585, %v553
        %v618 = vadd.f32 %v586, %v554
        %v619 = vadd.f32 %v587, %v555
        %v620 = vadd.f32 %v588, %v556
        %v621 = vadd.f32 %v589, %v557
        %v622 = vadd.f32 %v590, %v558
        %v623 = vadd.f32 %v591, %v559
        %v624 = vadd.f32 %v592, %v560
        %v625 = vadd.f32 %v593, %v561
        %v626 = vadd.f32 %v594, %v562
        %v627 = vadd.f32 %v595, %v563
        %v628 = vadd.f32 %v596, %v564
        %v629 = vadd.f32 %v597, %v565
        %v630 = vadd.f32 %v598, %v566
        %v631 = vadd.f32 %v599, %v567
        %v632 = vadd.f32 %v600, %v568
        %v633 = vadd.f32 %v601, %v569
        %v634 = vadd.f32 %v602, %v570
        %v635 = vadd.f32 %v603, %v571
        %v636 = vadd.f32 %v604, %v572
        %v637 = vadd.f32 %v605, %v573
        %v638 = vadd.f32 %v606, %v574
        %v639 = vadd.f32 %v607, %v575
        %v640 = vadd.f32 %v608, %v576
        %v641 = vadd.f32 %v609, %v577
        %v642 = vadd.f32 %v610, %v578
        %v643 = vadd.f32 %v611, %v579
        %v644 = vadd.f32 %v612, %v580
        %645 = vst [vmem:[#allocation4] sm:$0xff] %v613
        %646 = vst [vmem:[#allocation4 + $0x8] sm:$0xff] %v614
        %647 = vst [vmem:[#allocation4 + $0x10] sm:$0xff] %v615
        %648 = vst [vmem:[#allocation4 + $0x18] sm:$0xff] %v616
        %649 = vst [vmem:[#allocation4 + $0x20] sm:$0xff] %v617
        %650 = vst [vmem:[#allocation4 + $0x28] sm:$0xff] %v618
        %651 = vst [vmem:[#allocation4 + $0x30] sm:$0xff] %v619
        %652 = vst [vmem:[#allocation4 + $0x38] sm:$0xff] %v620
        %653 = vst [vmem:[#allocation4 + $0x40] sm:$0xff] %v621
        %654 = vst [vmem:[#allocation4 + $0x48] sm:$0xff] %v622
        %655 = vst [vmem:[#allocation4 + $0x50] sm:$0xff] %v623
        %656 = vst [vmem:[#allocation4 + $0x58] sm:$0xff] %v624
        %657 = vst [vmem:[#allocation4 + $0x60] sm:$0xff] %v625
        %658 = vst [vmem:[#allocation4 + $0x68] sm:$0xff] %v626
        %659 = vst [vmem:[#allocation4 + $0x70] sm:$0xff] %v627
        %660 = vst [vmem:[#allocation4 + $0x78] sm:$0xff] %v628
        %661 = vst [vmem:[#allocation4 + $0x80] sm:$0xff] %v629
        %662 = vst [vmem:[#allocation4 + $0x88] sm:$0xff] %v630
        %663 = vst [vmem:[#allocation4 + $0x90] sm:$0xff] %v631
        %664 = vst [vmem:[#allocation4 + $0x98] sm:$0xff] %v632
        %665 = vst [vmem:[#allocation4 + $0xa0] sm:$0xff] %v633
        %666 = vst [vmem:[#allocation4 + $0xa8] sm:$0xff] %v634
        %667 = vst [vmem:[#allocation4 + $0xb0] sm:$0xff] %v635
        %668 = vst [vmem:[#allocation4 + $0xb8] sm:$0xff] %v636
        %669 = vst [vmem:[#allocation4 + $0xc0] sm:$0xff] %v637
        %670 = vst [vmem:[#allocation4 + $0xc8] sm:$0xff] %v638
        %671 = vst [vmem:[#allocation4 + $0xd0] sm:$0xff] %v639
        %672 = vst [vmem:[#allocation4 + $0xd8] sm:$0xff] %v640
        %673 = vst [vmem:[#allocation4 + $0xe0] sm:$0xff] %v641
        %674 = vst [vmem:[#allocation4 + $0xe8] sm:$0xff] %v642
        %675 = vst [vmem:[#allocation4 + $0xf0] sm:$0xff] %v643
        %676 = vst [vmem:[#allocation4 + $0xf8] sm:$0xff] %v644
        %v677 = vld [vmem:[%s228] sm:$0xe]
        %v678 = vld [vmem:[%s228 + $0x4] sm:$0xf]
        %v679 = vld [vmem:[%s228 + $0x8] sm:$0x1]
        %v680 = vld [vmem:[%s228 + $0xc] sm:$0xe]
        %v681 = vld [vmem:[%s228 + $0x10] sm:$0xf]
        %v682 = vld [vmem:[%s228 + $0x14] sm:$0x1]
        %v683 = vld [vmem:[%s228 + $0x18] sm:$0xe]
        %v684 = vld [vmem:[%s228 + $0x1c] sm:$0xf]
        %v685 = vld [vmem:[%s228 + $0x20] sm:$0x1]
        %v686 = vld [vmem:[%s228 + $0x24] sm:$0xe]
        %v687 = vld [vmem:[%s228 + $0x28] sm:$0xf]
        %v688 = vld [vmem:[%s228 + $0x2c] sm:$0x1]
        %v689 = vld [vmem:[%s228 + $0x30] sm:$0xe]
        %v690 = vld [vmem:[%s228 + $0x34] sm:$0xf]
        %v691 = vld [vmem:[%s228 + $0x38] sm:$0x1]
        %v692 = vld [vmem:[%s228 + $0x3c] sm:$0xe]
        %v693 = vld [vmem:[%s228 + $0x40] sm:$0xf]
        %v694 = vld [vmem:[%s228 + $0x44] sm:$0x1]
        %v695 = vld [vmem:[%s228 + $0x48] sm:$0xe]
        %v696 = vld [vmem:[%s228 + $0x4c] sm:$0xf]
        %v697 = vld [vmem:[%s228 + $0x50] sm:$0x1]
        %v698 = vld [vmem:[%s228 + $0x54] sm:$0xe]
        %v699 = vld [vmem:[%s228 + $0x58] sm:$0xf]
        %v700 = vld [vmem:[%s228 + $0x5c] sm:$0x1]
        %v701 = vld [vmem:[%s228 + $0x60] sm:$0xe]
        %v702 = vld [vmem:[%s228 + $0x64] sm:$0xf]
        %v703 = vld [vmem:[%s228 + $0x68] sm:$0x1]
        %v704 = vld [vmem:[%s228 + $0x6c] sm:$0xe]
        %v705 = vld [vmem:[%s228 + $0x70] sm:$0xf]
        %v706 = vld [vmem:[%s228 + $0x74] sm:$0x1]
        %v707 = vld [vmem:[%s228 + $0x78] sm:$0xe]
        %v708 = vld [vmem:[%s228 + $0x7c] sm:$0xf]
        %v709 = vld [vmem:[%s228 + $0x80] sm:$0x1]
        %v710 = vld [vmem:[%s228 + $0x84] sm:$0xe]
        %v711 = vld [vmem:[%s228 + $0x88] sm:$0xf]
        %v712 = vld [vmem:[%s228 + $0x8c] sm:$0x1]
        %v713 = vld [vmem:[%s228 + $0x90] sm:$0xe]
        %v714 = vld [vmem:[%s228 + $0x94] sm:$0xf]
        %v715 = vld [vmem:[%s228 + $0x98] sm:$0x1]
        %v716 = vld [vmem:[%s228 + $0x9c] sm:$0xe]
        %v717 = vld [vmem:[%s228 + $0xa0] sm:$0xf]
        %v718 = vld [vmem:[%s228 + $0xa4] sm:$0x1]
        %v719 = vld [vmem:[%s228 + $0xa8] sm:$0xe]
        %v720 = vld [vmem:[%s228 + $0xac] sm:$0xf]
        %v721 = vld [vmem:[%s228 + $0xb0] sm:$0x1]
        %v722 = vld [vmem:[%s228 + $0xb4] sm:$0xe]
        %v723 = vld [vmem:[%s228 + $0xb8] sm:$0xf]
        %v724 = vld [vmem:[%s228 + $0xbc] sm:$0x1]
        %v725 = vld [vmem:[%s228 + $0xc0] sm:$0xe]
        %v726 = vld [vmem:[%s228 + $0xc4] sm:$0xf]
        %v727 = vld [vmem:[%s228 + $0xc8] sm:$0x1]
        %v728 = vld [vmem:[%s228 + $0xcc] sm:$0xe]
        %v729 = vld [vmem:[%s228 + $0xd0] sm:$0xf]
        %v730 = vld [vmem:[%s228 + $0xd4] sm:$0x1]
        %v731 = vld [vmem:[%s228 + $0xd8] sm:$0xe]
        %v732 = vld [vmem:[%s228 + $0xdc] sm:$0xf]
        %v733 = vld [vmem:[%s228 + $0xe0] sm:$0x1]
        %v734 = vld [vmem:[%s228 + $0xe4] sm:$0xe]
        %v735 = vld [vmem:[%s228 + $0xe8] sm:$0xf]
        %v736 = vld [vmem:[%s228 + $0xec] sm:$0x1]
        %v737 = vunpack.c.l.bf16 %v677
        %v738 = vunpack.c.l.bf16 %v678
        %v739 = vunpack.c.l.bf16 %v679
        %v740 = vunpack.c.l.bf16 %v680
        %v741 = vunpack.c.l.bf16 %v681
        %v742 = vunpack.c.l.bf16 %v682
        %v743 = vunpack.c.l.bf16 %v683
        %v744 = vunpack.c.l.bf16 %v684
        %v745 = vunpack.c.l.bf16 %v685
        %v746 = vunpack.c.l.bf16 %v686
        %v747 = vunpack.c.l.bf16 %v687
        %v748 = vunpack.c.l.bf16 %v688
        %v749 = vunpack.c.l.bf16 %v689
        %v750 = vunpack.c.l.bf16 %v690
        %v751 = vunpack.c.l.bf16 %v691
        %v752 = vunpack.c.l.bf16 %v692
        %v753 = vunpack.c.l.bf16 %v693
        %v754 = vunpack.c.l.bf16 %v694
        %v755 = vunpack.c.l.bf16 %v695
        %v756 = vunpack.c.l.bf16 %v696
        %v757 = vunpack.c.l.bf16 %v697
        %v758 = vunpack.c.l.bf16 %v698
        %v759 = vunpack.c.l.bf16 %v699
        %v760 = vunpack.c.l.bf16 %v700
        %v761 = vunpack.c.l.bf16 %v701
        %v762 = vunpack.c.l.bf16 %v702
        %v763 = vunpack.c.l.bf16 %v703
        %v764 = vunpack.c.l.bf16 %v704
        %v765 = vunpack.c.l.bf16 %v705
        %v766 = vunpack.c.l.bf16 %v706
        %v767 = vunpack.c.l.bf16 %v707
        %v768 = vunpack.c.l.bf16 %v708
        %v769 = vunpack.c.l.bf16 %v709
        %v770 = vunpack.c.l.bf16 %v710
        %v771 = vunpack.c.l.bf16 %v711
        %v772 = vunpack.c.l.bf16 %v712
        %v773 = vunpack.c.l.bf16 %v713
        %v774 = vunpack.c.l.bf16 %v714
        %v775 = vunpack.c.l.bf16 %v715
        %v776 = vunpack.c.l.bf16 %v716
        %v777 = vunpack.c.l.bf16 %v717
        %v778 = vunpack.c.l.bf16 %v718
        %v779 = vunpack.c.l.bf16 %v719
        %v780 = vunpack.c.l.bf16 %v720
        %v781 = vunpack.c.l.bf16 %v721
        %v782 = vunpack.c.l.bf16 %v722
        %v783 = vunpack.c.l.bf16 %v723
        %v784 = vunpack.c.l.bf16 %v724
        %v785 = vunpack.c.l.bf16 %v725
        %v786 = vunpack.c.l.bf16 %v726
        %v787 = vunpack.c.l.bf16 %v727
        %v788 = vunpack.c.l.bf16 %v728
        %v789 = vunpack.c.l.bf16 %v729
        %v790 = vunpack.c.l.bf16 %v730
        %v791 = vunpack.c.l.bf16 %v731
        %v792 = vunpack.c.l.bf16 %v732
        %v793 = vunpack.c.l.bf16 %v733
        %v794 = vunpack.c.l.bf16 %v734
        %v795 = vunpack.c.l.bf16 %v735
        %v796 = vunpack.c.l.bf16 %v736
        %v797 = vld [vmem:[#allocation5 + $0x1] sm:$0x1]
        %v798 = vlaneseq
        %v799 = vshrl.u32 %v798, 7
        %v800 = vsub.s32 0, %v799
        %v801 = vrot.slane %v797, %v800
        %v802 = vmul.f32 %v737, %v801
        %v803 = vmul.f32 %v738, %v801
        %v804 = vmul.f32 %v739, %v801
        %v805 = vmul.f32 %v740, %v801
        %v806 = vmul.f32 %v741, %v801
        %v807 = vmul.f32 %v742, %v801
        %v808 = vmul.f32 %v743, %v801
        %v809 = vmul.f32 %v744, %v801
        %v810 = vmul.f32 %v745, %v801
        %v811 = vmul.f32 %v746, %v801
        %v812 = vmul.f32 %v747, %v801
        %v813 = vmul.f32 %v748, %v801
        %v814 = vmul.f32 %v749, %v801
        %v815 = vmul.f32 %v750, %v801
        %v816 = vmul.f32 %v751, %v801
        %v817 = vmul.f32 %v752, %v801
        %v818 = vmul.f32 %v753, %v801
        %v819 = vmul.f32 %v754, %v801
        %v820 = vmul.f32 %v755, %v801
        %v821 = vmul.f32 %v756, %v801
        %v822 = vmul.f32 %v757, %v801
        %v823 = vmul.f32 %v758, %v801
        %v824 = vmul.f32 %v759, %v801
        %v825 = vmul.f32 %v760, %v801
        %v826 = vmul.f32 %v761, %v801
        %v827 = vmul.f32 %v762, %v801
        %v828 = vmul.f32 %v763, %v801
        %v829 = vmul.f32 %v764, %v801
        %v830 = vmul.f32 %v765, %v801
        %v831 = vmul.f32 %v766, %v801
        %v832 = vmul.f32 %v767, %v801
        %v833 = vmul.f32 %v768, %v801
        %v834 = vmul.f32 %v769, %v801
        %v835 = vmul.f32 %v770, %v801
        %v836 = vmul.f32 %v771, %v801
        %v837 = vmul.f32 %v772, %v801
        %v838 = vmul.f32 %v773, %v801
        %v839 = vmul.f32 %v774, %v801
        %v840 = vmul.f32 %v775, %v801
        %v841 = vmul.f32 %v776, %v801
        %v842 = vmul.f32 %v777, %v801
        %v843 = vmul.f32 %v778, %v801
        %v844 = vmul.f32 %v779, %v801
        %v845 = vmul.f32 %v780, %v801
        %v846 = vmul.f32 %v781, %v801
        %v847 = vmul.f32 %v782, %v801
        %v848 = vmul.f32 %v783, %v801
        %v849 = vmul.f32 %v784, %v801
        %v850 = vld [vmem:[#allocation4] sm:$0xff]
        %v851 = vld [vmem:[#allocation4 + $0x8] sm:$0xff]
        %v852 = vld [vmem:[#allocation4 + $0x10] sm:$0xff]
        %v853 = vld [vmem:[#allocation4 + $0x18] sm:$0xff]
        %v854 = vld [vmem:[#allocation4 + $0x20] sm:$0xff]
        %v855 = vld [vmem:[#allocation4 + $0x28] sm:$0xff]
        %v856 = vld [vmem:[#allocation4 + $0x30] sm:$0xff]
        %v857 = vld [vmem:[#allocation4 + $0x38] sm:$0xff]
        %v858 = vld [vmem:[#allocation4 + $0x40] sm:$0xff]
        %v859 = vld [vmem:[#allocation4 + $0x48] sm:$0xff]
        %v860 = vld [vmem:[#allocation4 + $0x50] sm:$0xff]
        %v861 = vld [vmem:[#allocation4 + $0x58] sm:$0xff]
        %v862 = vld [vmem:[#allocation4 + $0x60] sm:$0xff]
        %v863 = vld [vmem:[#allocation4 + $0x68] sm:$0xff]
        %v864 = vld [vmem:[#allocation4 + $0x70] sm:$0xff]
        %v865 = vld [vmem:[#allocation4 + $0x78] sm:$0xff]
        %v866 = vld [vmem:[#allocation4 + $0x80] sm:$0xff]
        %v867 = vld [vmem:[#allocation4 + $0x88] sm:$0xff]
        %v868 = vld [vmem:[#allocation4 + $0x90] sm:$0xff]
        %v869 = vld [vmem:[#allocation4 + $0x98] sm:$0xff]
        %v870 = vld [vmem:[#allocation4 + $0xa0] sm:$0xff]
        %v871 = vld [vmem:[#allocation4 + $0xa8] sm:$0xff]
        %v872 = vld [vmem:[#allocation4 + $0xb0] sm:$0xff]
        %v873 = vld [vmem:[#allocation4 + $0xb8] sm:$0xff]
        %v874 = vld [vmem:[#allocation4 + $0xc0] sm:$0xff]
        %v875 = vld [vmem:[#allocation4 + $0xc8] sm:$0xff]
        %v876 = vld [vmem:[#allocation4 + $0xd0] sm:$0xff]
        %v877 = vld [vmem:[#allocation4 + $0xd8] sm:$0xff]
        %v878 = vld [vmem:[#allocation4 + $0xe0] sm:$0xff]
        %v879 = vld [vmem:[#allocation4 + $0xe8] sm:$0xff]
        %v880 = vld [vmem:[#allocation4 + $0xf0] sm:$0xff]
        %v881 = vld [vmem:[#allocation4 + $0xf8] sm:$0xff]
        %vm930 = vcmask 1045504
        %v931 = vrot.slane %v802, 2
        %v932 = vrot.slane %v803, 2
        %v933 = vsel %vm930, %v931, %v932
        %v934 = vrot.slane %v804, 2
        %v935 = vsel %vm930, %v932, %v934
        %v936 = vrot.slane %v805, 2
        %v937 = vrot.slane %v806, 2
        %v938 = vsel %vm930, %v936, %v937
        %v939 = vrot.slane %v807, 2
        %v940 = vsel %vm930, %v937, %v939
        %v941 = vrot.slane %v808, 2
        %v942 = vrot.slane %v809, 2
        %v943 = vsel %vm930, %v941, %v942
        %v944 = vrot.slane %v810, 2
        %v945 = vsel %vm930, %v942, %v944
        %v946 = vrot.slane %v811, 2
        %v947 = vrot.slane %v812, 2
        %v948 = vsel %vm930, %v946, %v947
        %v949 = vrot.slane %v813, 2
        %v950 = vsel %vm930, %v947, %v949
        %v951 = vrot.slane %v814, 2
        %v952 = vrot.slane %v815, 2
        %v953 = vsel %vm930, %v951, %v952
        %v954 = vrot.slane %v816, 2
        %v955 = vsel %vm930, %v952, %v954
        %v956 = vrot.slane %v817, 2
        %v957 = vrot.slane %v818, 2
        %v958 = vsel %vm930, %v956, %v957
        %v959 = vrot.slane %v819, 2
        %v960 = vsel %vm930, %v957, %v959
        %v961 = vrot.slane %v820, 2
        %v962 = vrot.slane %v821, 2
        %v963 = vsel %vm930, %v961, %v962
        %v964 = vrot.slane %v822, 2
        %v965 = vsel %vm930, %v962, %v964
        %v966 = vrot.slane %v823, 2
        %v967 = vrot.slane %v824, 2
        %v968 = vsel %vm930, %v966, %v967
        %v969 = vrot.slane %v825, 2
        %v970 = vsel %vm930, %v967, %v969
        %v971 = vrot.slane %v826, 2
        %v972 = vrot.slane %v827, 2
        %v973 = vsel %vm930, %v971, %v972
        %v974 = vrot.slane %v828, 2
        %v975 = vsel %vm930, %v972, %v974
        %v976 = vrot.slane %v829, 2
        %v977 = vrot.slane %v830, 2
        %v978 = vsel %vm930, %v976, %v977
        %v979 = vrot.slane %v831, 2
        %v980 = vsel %vm930, %v977, %v979
        %v981 = vrot.slane %v832, 2
        %v982 = vrot.slane %v833, 2
        %v983 = vsel %vm930, %v981, %v982
        %v984 = vrot.slane %v834, 2
        %v985 = vsel %vm930, %v982, %v984
        %v986 = vrot.slane %v835, 2
        %v987 = vrot.slane %v836, 2
        %v988 = vsel %vm930, %v986, %v987
        %v989 = vrot.slane %v837, 2
        %v990 = vsel %vm930, %v987, %v989
        %v991 = vrot.slane %v838, 2
        %v992 = vrot.slane %v839, 2
        %v993 = vsel %vm930, %v991, %v992
        %v994 = vrot.slane %v840, 2
        %v995 = vsel %vm930, %v992, %v994
        %v996 = vrot.slane %v841, 2
        %v997 = vrot.slane %v842, 2
        %v998 = vsel %vm930, %v996, %v997
        %v999 = vrot.slane %v843, 2
        %v1000 = vsel %vm930, %v997, %v999
        %v1001 = vrot.slane %v844, 2
        %v1002 = vrot.slane %v845, 2
        %v1003 = vsel %vm930, %v1001, %v1002
        %v1004 = vrot.slane %v846, 2
        %v1005 = vsel %vm930, %v1002, %v1004
        %v1006 = vrot.slane %v847, 2
        %v1007 = vrot.slane %v848, 2
        %v1008 = vsel %vm930, %v1006, %v1007
        %v1009 = vrot.slane %v849, 2
        %v1010 = vsel %vm930, %v1007, %v1009
        %v1043 = vadd.f32 %v850, %v933
        %v1044 = vadd.f32 %v851, %v935
        %v1045 = vadd.f32 %v852, %v938
        %v1046 = vadd.f32 %v853, %v940
        %v1047 = vadd.f32 %v854, %v943
        %v1048 = vadd.f32 %v855, %v945
        %v1049 = vadd.f32 %v856, %v948
        %v1050 = vadd.f32 %v857, %v950
        %v1051 = vadd.f32 %v858, %v953
        %v1052 = vadd.f32 %v859, %v955
        %v1053 = vadd.f32 %v860, %v958
        %v1054 = vadd.f32 %v861, %v960
        %v1055 = vadd.f32 %v862, %v963
        %v1056 = vadd.f32 %v863, %v965
        %v1057 = vadd.f32 %v864, %v968
        %v1058 = vadd.f32 %v865, %v970
        %v1059 = vadd.f32 %v866, %v973
        %v1060 = vadd.f32 %v867, %v975
        %v1061 = vadd.f32 %v868, %v978
        %v1062 = vadd.f32 %v869, %v980
        %v1063 = vadd.f32 %v870, %v983
        %v1064 = vadd.f32 %v871, %v985
        %v1065 = vadd.f32 %v872, %v988
        %v1066 = vadd.f32 %v873, %v990
        %v1067 = vadd.f32 %v874, %v993
        %v1068 = vadd.f32 %v875, %v995
        %v1069 = vadd.f32 %v876, %v998
        %v1070 = vadd.f32 %v877, %v1000
        %v1071 = vadd.f32 %v878, %v1003
        %v1072 = vadd.f32 %v879, %v1005
        %v1073 = vadd.f32 %v880, %v1008
        %v1074 = vadd.f32 %v881, %v1010
        %1075 = vst [vmem:[#allocation4] sm:$0xff] %v1043
        %1076 = vst [vmem:[#allocation4 + $0x8] sm:$0xff] %v1044
        %1077 = vst [vmem:[#allocation4 + $0x10] sm:$0xff] %v1045
        %1078 = vst [vmem:[#allocation4 + $0x18] sm:$0xff] %v1046
        %1079 = vst [vmem:[#allocation4 + $0x20] sm:$0xff] %v1047
        %1080 = vst [vmem:[#allocation4 + $0x28] sm:$0xff] %v1048
        %1081 = vst [vmem:[#allocation4 + $0x30] sm:$0xff] %v1049
        %1082 = vst [vmem:[#allocation4 + $0x38] sm:$0xff] %v1050
        %1083 = vst [vmem:[#allocation4 + $0x40] sm:$0xff] %v1051
        %1084 = vst [vmem:[#allocation4 + $0x48] sm:$0xff] %v1052
        %1085 = vst [vmem:[#allocation4 + $0x50] sm:$0xff] %v1053
        %1086 = vst [vmem:[#allocation4 + $0x58] sm:$0xff] %v1054
        %1087 = vst [vmem:[#allocation4 + $0x60] sm:$0xff] %v1055
        %1088 = vst [vmem:[#allocation4 + $0x68] sm:$0xff] %v1056
        %1089 = vst [vmem:[#allocation4 + $0x70] sm:$0xff] %v1057
        %1090 = vst [vmem:[#allocation4 + $0x78] sm:$0xff] %v1058
        %1091 = vst [vmem:[#allocation4 + $0x80] sm:$0xff] %v1059
        %1092 = vst [vmem:[#allocation4 + $0x88] sm:$0xff] %v1060
        %1093 = vst [vmem:[#allocation4 + $0x90] sm:$0xff] %v1061
        %1094 = vst [vmem:[#allocation4 + $0x98] sm:$0xff] %v1062
        %1095 = vst [vmem:[#allocation4 + $0xa0] sm:$0xff] %v1063
        %1096 = vst [vmem:[#allocation4 + $0xa8] sm:$0xff] %v1064
        %1097 = vst [vmem:[#allocation4 + $0xb0] sm:$0xff] %v1065
        %1098 = vst [vmem:[#allocation4 + $0xb8] sm:$0xff] %v1066
        %1099 = vst [vmem:[#allocation4 + $0xc0] sm:$0xff] %v1067
        %1100 = vst [vmem:[#allocation4 + $0xc8] sm:$0xff] %v1068
        %1101 = vst [vmem:[#allocation4 + $0xd0] sm:$0xff] %v1069
        %1102 = vst [vmem:[#allocation4 + $0xd8] sm:$0xff] %v1070
        %1103 = vst [vmem:[#allocation4 + $0xe0] sm:$0xff] %v1071
        %1104 = vst [vmem:[#allocation4 + $0xe8] sm:$0xff] %v1072
        %1105 = vst [vmem:[#allocation4 + $0xf0] sm:$0xff] %v1073
        %1106 = vst [vmem:[#allocation4 + $0xf8] sm:$0xff] %v1074
        %v1107 = vld [vmem:[#allocation5 + $0x4] sm:$0x1]
        %v1108 = vlaneseq
        %v1109 = vshrl.u32 %v1108, 7
        %v1110 = vsub.s32 0, %v1109
        %v1111 = vrot.slane %v1107, %v1110
        %v1112 = vmul.f32 %v743, %v1111
        %v1113 = vmul.f32 %v744, %v1111
        %v1114 = vmul.f32 %v745, %v1111
        %v1115 = vmul.f32 %v746, %v1111
        %v1116 = vmul.f32 %v747, %v1111
        %v1117 = vmul.f32 %v748, %v1111
        %v1118 = vmul.f32 %v749, %v1111
        %v1119 = vmul.f32 %v750, %v1111
        %v1120 = vmul.f32 %v751, %v1111
        %v1121 = vmul.f32 %v752, %v1111
        %v1122 = vmul.f32 %v753, %v1111
        %v1123 = vmul.f32 %v754, %v1111
        %v1124 = vmul.f32 %v755, %v1111
        %v1125 = vmul.f32 %v756, %v1111
        %v1126 = vmul.f32 %v757, %v1111
        %v1127 = vmul.f32 %v758, %v1111
        %v1128 = vmul.f32 %v759, %v1111
        %v1129 = vmul.f32 %v760, %v1111
        %v1130 = vmul.f32 %v761, %v1111
        %v1131 = vmul.f32 %v762, %v1111
        %v1132 = vmul.f32 %v763, %v1111
        %v1133 = vmul.f32 %v764, %v1111
        %v1134 = vmul.f32 %v765, %v1111
        %v1135 = vmul.f32 %v766, %v1111
        %v1136 = vmul.f32 %v767, %v1111
        %v1137 = vmul.f32 %v768, %v1111
        %v1138 = vmul.f32 %v769, %v1111
        %v1139 = vmul.f32 %v770, %v1111
        %v1140 = vmul.f32 %v771, %v1111
        %v1141 = vmul.f32 %v772, %v1111
        %v1142 = vmul.f32 %v773, %v1111
        %v1143 = vmul.f32 %v774, %v1111
        %v1144 = vmul.f32 %v775, %v1111
        %v1145 = vmul.f32 %v776, %v1111
        %v1146 = vmul.f32 %v777, %v1111
        %v1147 = vmul.f32 %v778, %v1111
        %v1148 = vmul.f32 %v779, %v1111
        %v1149 = vmul.f32 %v780, %v1111
        %v1150 = vmul.f32 %v781, %v1111
        %v1151 = vmul.f32 %v782, %v1111
        %v1152 = vmul.f32 %v783, %v1111
        %v1153 = vmul.f32 %v784, %v1111
        %v1154 = vmul.f32 %v785, %v1111
        %v1155 = vmul.f32 %v786, %v1111
        %v1156 = vmul.f32 %v787, %v1111
        %v1157 = vmul.f32 %v788, %v1111
        %v1158 = vmul.f32 %v789, %v1111
        %v1159 = vmul.f32 %v790, %v1111
        %v1160 = vld [vmem:[#allocation4] sm:$0xff]
        %v1161 = vld [vmem:[#allocation4 + $0x8] sm:$0xff]
        %v1162 = vld [vmem:[#allocation4 + $0x10] sm:$0xff]
        %v1163 = vld [vmem:[#allocation4 + $0x18] sm:$0xff]
        %v1164 = vld [vmem:[#allocation4 + $0x20] sm:$0xff]
        %v1165 = vld [vmem:[#allocation4 + $0x28] sm:$0xff]
        %v1166 = vld [vmem:[#allocation4 + $0x30] sm:$0xff]
        %v1167 = vld [vmem:[#allocation4 + $0x38] sm:$0xff]
        %v1168 = vld [vmem:[#allocation4 + $0x40] sm:$0xff]
        %v1169 = vld [vmem:[#allocation4 + $0x48] sm:$0xff]
        %v1170 = vld [vmem:[#allocation4 + $0x50] sm:$0xff]
        %v1171 = vld [vmem:[#allocation4 + $0x58] sm:$0xff]
        %v1172 = vld [vmem:[#allocation4 + $0x60] sm:$0xff]
        %v1173 = vld [vmem:[#allocation4 + $0x68] sm:$0xff]
        %v1174 = vld [vmem:[#allocation4 + $0x70] sm:$0xff]
        %v1175 = vld [vmem:[#allocation4 + $0x78] sm:$0xff]
        %v1176 = vld [vmem:[#allocation4 + $0x80] sm:$0xff]
        %v1177 = vld [vmem:[#allocation4 + $0x88] sm:$0xff]
        %v1178 = vld [vmem:[#allocation4 + $0x90] sm:$0xff]
        %v1179 = vld [vmem:[#allocation4 + $0x98] sm:$0xff]
        %v1180 = vld [vmem:[#allocation4 + $0xa0] sm:$0xff]
        %v1181 = vld [vmem:[#allocation4 + $0xa8] sm:$0xff]
        %v1182 = vld [vmem:[#allocation4 + $0xb0] sm:$0xff]
        %v1183 = vld [vmem:[#allocation4 + $0xb8] sm:$0xff]
        %v1184 = vld [vmem:[#allocation4 + $0xc0] sm:$0xff]
        %v1185 = vld [vmem:[#allocation4 + $0xc8] sm:$0xff]
        %v1186 = vld [vmem:[#allocation4 + $0xd0] sm:$0xff]
        %v1187 = vld [vmem:[#allocation4 + $0xd8] sm:$0xff]
        %v1188 = vld [vmem:[#allocation4 + $0xe0] sm:$0xff]
        %v1189 = vld [vmem:[#allocation4 + $0xe8] sm:$0xff]
        %v1190 = vld [vmem:[#allocation4 + $0xf0] sm:$0xff]
        %v1191 = vld [vmem:[#allocation4 + $0xf8] sm:$0xff]
        %v1240 = vrot.slane %v1112, 2
        %v1241 = vrot.slane %v1113, 2
        %v1242 = vsel %vm930, %v1240, %v1241
        %v1243 = vrot.slane %v1114, 2
        %v1244 = vsel %vm930, %v1241, %v1243
        %v1245 = vrot.slane %v1115, 2
        %v1246 = vrot.slane %v1116, 2
        %v1247 = vsel %vm930, %v1245, %v1246
        %v1248 = vrot.slane %v1117, 2
        %v1249 = vsel %vm930, %v1246, %v1248
        %v1250 = vrot.slane %v1118, 2
        %v1251 = vrot.slane %v1119, 2
        %v1252 = vsel %vm930, %v1250, %v1251
        %v1253 = vrot.slane %v1120, 2
        %v1254 = vsel %vm930, %v1251, %v1253
        %v1255 = vrot.slane %v1121, 2
        %v1256 = vrot.slane %v1122, 2
        %v1257 = vsel %vm930, %v1255, %v1256
        %v1258 = vrot.slane %v1123, 2
        %v1259 = vsel %vm930, %v1256, %v1258
        %v1260 = vrot.slane %v1124, 2
        %v1261 = vrot.slane %v1125, 2
        %v1262 = vsel %vm930, %v1260, %v1261
        %v1263 = vrot.slane %v1126, 2
        %v1264 = vsel %vm930, %v1261, %v1263
        %v1265 = vrot.slane %v1127, 2
        %v1266 = vrot.slane %v1128, 2
        %v1267 = vsel %vm930, %v1265, %v1266
        %v1268 = vrot.slane %v1129, 2
        %v1269 = vsel %vm930, %v1266, %v1268
        %v1270 = vrot.slane %v1130, 2
        %v1271 = vrot.slane %v1131, 2
        %v1272 = vsel %vm930, %v1270, %v1271
        %v1273 = vrot.slane %v1132, 2
        %v1274 = vsel %vm930, %v1271, %v1273
        %v1275 = vrot.slane %v1133, 2
        %v1276 = vrot.slane %v1134, 2
        %v1277 = vsel %vm930, %v1275, %v1276
        %v1278 = vrot.slane %v1135, 2
        %v1279 = vsel %vm930, %v1276, %v1278
        %v1280 = vrot.slane %v1136, 2
        %v1281 = vrot.slane %v1137, 2
        %v1282 = vsel %vm930, %v1280, %v1281
        %v1283 = vrot.slane %v1138, 2
        %v1284 = vsel %vm930, %v1281, %v1283
        %v1285 = vrot.slane %v1139, 2
        %v1286 = vrot.slane %v1140, 2
        %v1287 = vsel %vm930, %v1285, %v1286
        %v1288 = vrot.slane %v1141, 2
        %v1289 = vsel %vm930, %v1286, %v1288
        %v1290 = vrot.slane %v1142, 2
        %v1291 = vrot.slane %v1143, 2
        %v1292 = vsel %vm930, %v1290, %v1291
        %v1293 = vrot.slane %v1144, 2
        %v1294 = vsel %vm930, %v1291, %v1293
        %v1295 = vrot.slane %v1145, 2
        %v1296 = vrot.slane %v1146, 2
        %v1297 = vsel %vm930, %v1295, %v1296
        %v1298 = vrot.slane %v1147, 2
        %v1299 = vsel %vm930, %v1296, %v1298
        %v1300 = vrot.slane %v1148, 2
        %v1301 = vrot.slane %v1149, 2
        %v1302 = vsel %vm930, %v1300, %v1301
        %v1303 = vrot.slane %v1150, 2
        %v1304 = vsel %vm930, %v1301, %v1303
        %v1305 = vrot.slane %v1151, 2
        %v1306 = vrot.slane %v1152, 2
        %v1307 = vsel %vm930, %v1305, %v1306
        %v1308 = vrot.slane %v1153, 2
        %v1309 = vsel %vm930, %v1306, %v1308
        %v1310 = vrot.slane %v1154, 2
        %v1311 = vrot.slane %v1155, 2
        %v1312 = vsel %vm930, %v1310, %v1311
        %v1313 = vrot.slane %v1156, 2
        %v1314 = vsel %vm930, %v1311, %v1313
        %v1315 = vrot.slane %v1157, 2
        %v1316 = vrot.slane %v1158, 2
        %v1317 = vsel %vm930, %v1315, %v1316
        %v1318 = vrot.slane %v1159, 2
        %v1319 = vsel %vm930, %v1316, %v1318
        %v1352 = vadd.f32 %v1160, %v1242
        %v1353 = vadd.f32 %v1161, %v1244
        %v1354 = vadd.f32 %v1162, %v1247
        %v1355 = vadd.f32 %v1163, %v1249
        %v1356 = vadd.f32 %v1164, %v1252
        %v1357 = vadd.f32 %v1165, %v1254
        %v1358 = vadd.f32 %v1166, %v1257
        %v1359 = vadd.f32 %v1167, %v1259
        %v1360 = vadd.f32 %v1168, %v1262
        %v1361 = vadd.f32 %v1169, %v1264
        %v1362 = vadd.f32 %v1170, %v1267
        %v1363 = vadd.f32 %v1171, %v1269
        %v1364 = vadd.f32 %v1172, %v1272
        %v1365 = vadd.f32 %v1173, %v1274
        %v1366 = vadd.f32 %v1174, %v1277
        %v1367 = vadd.f32 %v1175, %v1279
        %v1368 = vadd.f32 %v1176, %v1282
        %v1369 = vadd.f32 %v1177, %v1284
        %v1370 = vadd.f32 %v1178, %v1287
        %v1371 = vadd.f32 %v1179, %v1289
        %v1372 = vadd.f32 %v1180, %v1292
        %v1373 = vadd.f32 %v1181, %v1294
        %v1374 = vadd.f32 %v1182, %v1297
        %v1375 = vadd.f32 %v1183, %v1299
        %v1376 = vadd.f32 %v1184, %v1302
        %v1377 = vadd.f32 %v1185, %v1304
        %v1378 = vadd.f32 %v1186, %v1307
        %v1379 = vadd.f32 %v1187, %v1309
        %v1380 = vadd.f32 %v1188, %v1312
        %v1381 = vadd.f32 %v1189, %v1314
        %v1382 = vadd.f32 %v1190, %v1317
        %v1383 = vadd.f32 %v1191, %v1319
        %1384 = vst [vmem:[#allocation4] sm:$0xff] %v1352
        %1385 = vst [vmem:[#allocation4 + $0x8] sm:$0xff] %v1353
        %1386 = vst [vmem:[#allocation4 + $0x10] sm:$0xff] %v1354
        %1387 = vst [vmem:[#allocation4 + $0x18] sm:$0xff] %v1355
        %1388 = vst [vmem:[#allocation4 + $0x20] sm:$0xff] %v1356
        %1389 = vst [vmem:[#allocation4 + $0x28] sm:$0xff] %v1357
        %1390 = vst [vmem:[#allocation4 + $0x30] sm:$0xff] %v1358
        %1391 = vst [vmem:[#allocation4 + $0x38] sm:$0xff] %v1359
        %1392 = vst [vmem:[#allocation4 + $0x40] sm:$0xff] %v1360
        %1393 = vst [vmem:[#allocation4 + $0x48] sm:$0xff] %v1361
        %1394 = vst [vmem:[#allocation4 + $0x50] sm:$0xff] %v1362
        %1395 = vst [vmem:[#allocation4 + $0x58] sm:$0xff] %v1363
        %1396 = vst [vmem:[#allocation4 + $0x60] sm:$0xff] %v1364
        %1397 = vst [vmem:[#allocation4 + $0x68] sm:$0xff] %v1365
        %1398 = vst [vmem:[#allocation4 + $0x70] sm:$0xff] %v1366
        %1399 = vst [vmem:[#allocation4 + $0x78] sm:$0xff] %v1367
        %1400 = vst [vmem:[#allocation4 + $0x80] sm:$0xff] %v1368
        %1401 = vst [vmem:[#allocation4 + $0x88] sm:$0xff] %v1369
        %1402 = vst [vmem:[#allocation4 + $0x90] sm:$0xff] %v1370
        %1403 = vst [vmem:[#allocation4 + $0x98] sm:$0xff] %v1371
        %1404 = vst [vmem:[#allocation4 + $0xa0] sm:$0xff] %v1372
        %1405 = vst [vmem:[#allocation4 + $0xa8] sm:$0xff] %v1373
        %1406 = vst [vmem:[#allocation4 + $0xb0] sm:$0xff] %v1374
        %1407 = vst [vmem:[#allocation4 + $0xb8] sm:$0xff] %v1375
        %1408 = vst [vmem:[#allocation4 + $0xc0] sm:$0xff] %v1376
        %1409 = vst [vmem:[#allocation4 + $0xc8] sm:$0xff] %v1377
        %1410 = vst [vmem:[#allocation4 + $0xd0] sm:$0xff] %v1378
        %1411 = vst [vmem:[#allocation4 + $0xd8] sm:$0xff] %v1379
        %1412 = vst [vmem:[#allocation4 + $0xe0] sm:$0xff] %v1380
        %1413 = vst [vmem:[#allocation4 + $0xe8] sm:$0xff] %v1381
        %1414 = vst [vmem:[#allocation4 + $0xf0] sm:$0xff] %v1382
        %1415 = vst [vmem:[#allocation4 + $0xf8] sm:$0xff] %v1383
        %v1416 = vld [vmem:[#allocation5 + $0x7] sm:$0x1]
        %v1417 = vlaneseq
        %v1418 = vshrl.u32 %v1417, 7
        %v1419 = vsub.s32 0, %v1418
        %v1420 = vrot.slane %v1416, %v1419
        %v1421 = vmul.f32 %v749, %v1420
        %v1422 = vmul.f32 %v750, %v1420
        %v1423 = vmul.f32 %v751, %v1420
        %v1424 = vmul.f32 %v752, %v1420
        %v1425 = vmul.f32 %v753, %v1420
        %v1426 = vmul.f32 %v754, %v1420
        %v1427 = vmul.f32 %v755, %v1420
        %v1428 = vmul.f32 %v756, %v1420
        %v1429 = vmul.f32 %v757, %v1420
        %v1430 = vmul.f32 %v758, %v1420
        %v1431 = vmul.f32 %v759, %v1420
        %v1432 = vmul.f32 %v760, %v1420
        %v1433 = vmul.f32 %v761, %v1420
        %v1434 = vmul.f32 %v762, %v1420
        %v1435 = vmul.f32 %v763, %v1420
        %v1436 = vmul.f32 %v764, %v1420
        %v1437 = vmul.f32 %v765, %v1420
        %v1438 = vmul.f32 %v766, %v1420
        %v1439 = vmul.f32 %v767, %v1420
        %v1440 = vmul.f32 %v768, %v1420
        %v1441 = vmul.f32 %v769, %v1420
        %v1442 = vmul.f32 %v770, %v1420
        %v1443 = vmul.f32 %v771, %v1420
        %v1444 = vmul.f32 %v772, %v1420
        %v1445 = vmul.f32 %v773, %v1420
        %v1446 = vmul.f32 %v774, %v1420
        %v1447 = vmul.f32 %v775, %v1420
        %v1448 = vmul.f32 %v776, %v1420
        %v1449 = vmul.f32 %v777, %v1420
        %v1450 = vmul.f32 %v778, %v1420
        %v1451 = vmul.f32 %v779, %v1420
        %v1452 = vmul.f32 %v780, %v1420
        %v1453 = vmul.f32 %v781, %v1420
        %v1454 = vmul.f32 %v782, %v1420
        %v1455 = vmul.f32 %v783, %v1420
        %v1456 = vmul.f32 %v784, %v1420
        %v1457 = vmul.f32 %v785, %v1420
        %v1458 = vmul.f32 %v786, %v1420
        %v1459 = vmul.f32 %v787, %v1420
        %v1460 = vmul.f32 %v788, %v1420
        %v1461 = vmul.f32 %v789, %v1420
        %v1462 = vmul.f32 %v790, %v1420
        %v1463 = vmul.f32 %v791, %v1420
        %v1464 = vmul.f32 %v792, %v1420
        %v1465 = vmul.f32 %v793, %v1420
        %v1466 = vmul.f32 %v794, %v1420
        %v1467 = vmul.f32 %v795, %v1420
        %v1468 = vmul.f32 %v796, %v1420
        %v1469 = vld [vmem:[#allocation4] sm:$0xff]
        %v1470 = vld [vmem:[#allocation4 + $0x8] sm:$0xff]
        %v1471 = vld [vmem:[#allocation4 + $0x10] sm:$0xff]
        %v1472 = vld [vmem:[#allocation4 + $0x18] sm:$0xff]
        %v1473 = vld [vmem:[#allocation4 + $0x20] sm:$0xff]
        %v1474 = vld [vmem:[#allocation4 + $0x28] sm:$0xff]
        %v1475 = vld [vmem:[#allocation4 + $0x30] sm:$0xff]
        %v1476 = vld [vmem:[#allocation4 + $0x38] sm:$0xff]
        %v1477 = vld [vmem:[#allocation4 + $0x40] sm:$0xff]
        %v1478 = vld [vmem:[#allocation4 + $0x48] sm:$0xff]
        %v1479 = vld [vmem:[#allocation4 + $0x50] sm:$0xff]
        %v1480 = vld [vmem:[#allocation4 + $0x58] sm:$0xff]
        %v1481 = vld [vmem:[#allocation4 + $0x60] sm:$0xff]
        %v1482 = vld [vmem:[#allocation4 + $0x68] sm:$0xff]
        %v1483 = vld [vmem:[#allocation4 + $0x70] sm:$0xff]
        %v1484 = vld [vmem:[#allocation4 + $0x78] sm:$0xff]
        %v1485 = vld [vmem:[#allocation4 + $0x80] sm:$0xff]
        %v1486 = vld [vmem:[#allocation4 + $0x88] sm:$0xff]
        %v1487 = vld [vmem:[#allocation4 + $0x90] sm:$0xff]
        %v1488 = vld [vmem:[#allocation4 + $0x98] sm:$0xff]
        %v1489 = vld [vmem:[#allocation4 + $0xa0] sm:$0xff]
        %v1490 = vld [vmem:[#allocation4 + $0xa8] sm:$0xff]
        %v1491 = vld [vmem:[#allocation4 + $0xb0] sm:$0xff]
        %v1492 = vld [vmem:[#allocation4 + $0xb8] sm:$0xff]
        %v1493 = vld [vmem:[#allocation4 + $0xc0] sm:$0xff]
        %v1494 = vld [vmem:[#allocation4 + $0xc8] sm:$0xff]
        %v1495 = vld [vmem:[#allocation4 + $0xd0] sm:$0xff]
        %v1496 = vld [vmem:[#allocation4 + $0xd8] sm:$0xff]
        %v1497 = vld [vmem:[#allocation4 + $0xe0] sm:$0xff]
        %v1498 = vld [vmem:[#allocation4 + $0xe8] sm:$0xff]
        %v1499 = vld [vmem:[#allocation4 + $0xf0] sm:$0xff]
        %v1500 = vld [vmem:[#allocation4 + $0xf8] sm:$0xff]
        %v1549 = vrot.slane %v1421, 2
        %v1550 = vrot.slane %v1422, 2
        %v1551 = vsel %vm930, %v1549, %v1550
        %v1552 = vrot.slane %v1423, 2
        %v1553 = vsel %vm930, %v1550, %v1552
        %v1554 = vrot.slane %v1424, 2
        %v1555 = vrot.slane %v1425, 2
        %v1556 = vsel %vm930, %v1554, %v1555
        %v1557 = vrot.slane %v1426, 2
        %v1558 = vsel %vm930, %v1555, %v1557
        %v1559 = vrot.slane %v1427, 2
        %v1560 = vrot.slane %v1428, 2
        %v1561 = vsel %vm930, %v1559, %v1560
        %v1562 = vrot.slane %v1429, 2
        %v1563 = vsel %vm930, %v1560, %v1562
        %v1564 = vrot.slane %v1430, 2
        %v1565 = vrot.slane %v1431, 2
        %v1566 = vsel %vm930, %v1564, %v1565
        %v1567 = vrot.slane %v1432, 2
        %v1568 = vsel %vm930, %v1565, %v1567
        %v1569 = vrot.slane %v1433, 2
        %v1570 = vrot.slane %v1434, 2
        %v1571 = vsel %vm930, %v1569, %v1570
        %v1572 = vrot.slane %v1435, 2
        %v1573 = vsel %vm930, %v1570, %v1572
        %v1574 = vrot.slane %v1436, 2
        %v1575 = vrot.slane %v1437, 2
        %v1576 = vsel %vm930, %v1574, %v1575
        %v1577 = vrot.slane %v1438, 2
        %v1578 = vsel %vm930, %v1575, %v1577
        %v1579 = vrot.slane %v1439, 2
        %v1580 = vrot.slane %v1440, 2
        %v1581 = vsel %vm930, %v1579, %v1580
        %v1582 = vrot.slane %v1441, 2
        %v1583 = vsel %vm930, %v1580, %v1582
        %v1584 = vrot.slane %v1442, 2
        %v1585 = vrot.slane %v1443, 2
        %v1586 = vsel %vm930, %v1584, %v1585
        %v1587 = vrot.slane %v1444, 2
        %v1588 = vsel %vm930, %v1585, %v1587
        %v1589 = vrot.slane %v1445, 2
        %v1590 = vrot.slane %v1446, 2
        %v1591 = vsel %vm930, %v1589, %v1590
        %v1592 = vrot.slane %v1447, 2
        %v1593 = vsel %vm930, %v1590, %v1592
        %v1594 = vrot.slane %v1448, 2
        %v1595 = vrot.slane %v1449, 2
        %v1596 = vsel %vm930, %v1594, %v1595
        %v1597 = vrot.slane %v1450, 2
        %v1598 = vsel %vm930, %v1595, %v1597
        %v1599 = vrot.slane %v1451, 2
        %v1600 = vrot.slane %v1452, 2
        %v1601 = vsel %vm930, %v1599, %v1600
        %v1602 = vrot.slane %v1453, 2
        %v1603 = vsel %vm930, %v1600, %v1602
        %v1604 = vrot.slane %v1454, 2
        %v1605 = vrot.slane %v1455, 2
        %v1606 = vsel %vm930, %v1604, %v1605
        %v1607 = vrot.slane %v1456, 2
        %v1608 = vsel %vm930, %v1605, %v1607
        %v1609 = vrot.slane %v1457, 2
        %v1610 = vrot.slane %v1458, 2
        %v1611 = vsel %vm930, %v1609, %v1610
        %v1612 = vrot.slane %v1459, 2
        %v1613 = vsel %vm930, %v1610, %v1612
        %v1614 = vrot.slane %v1460, 2
        %v1615 = vrot.slane %v1461, 2
        %v1616 = vsel %vm930, %v1614, %v1615
        %v1617 = vrot.slane %v1462, 2
        %v1618 = vsel %vm930, %v1615, %v1617
        %v1619 = vrot.slane %v1463, 2
        %v1620 = vrot.slane %v1464, 2
        %v1621 = vsel %vm930, %v1619, %v1620
        %v1622 = vrot.slane %v1465, 2
        %v1623 = vsel %vm930, %v1620, %v1622
        %v1624 = vrot.slane %v1466, 2
        %v1625 = vrot.slane %v1467, 2
        %v1626 = vsel %vm930, %v1624, %v1625
        %v1627 = vrot.slane %v1468, 2
        %v1628 = vsel %vm930, %v1625, %v1627
        %v1661 = vadd.f32 %v1469, %v1551
        %v1662 = vadd.f32 %v1470, %v1553
        %v1663 = vadd.f32 %v1471, %v1556
        %v1664 = vadd.f32 %v1472, %v1558
        %v1665 = vadd.f32 %v1473, %v1561
        %v1666 = vadd.f32 %v1474, %v1563
        %v1667 = vadd.f32 %v1475, %v1566
        %v1668 = vadd.f32 %v1476, %v1568
        %v1669 = vadd.f32 %v1477, %v1571
        %v1670 = vadd.f32 %v1478, %v1573
        %v1671 = vadd.f32 %v1479, %v1576
        %v1672 = vadd.f32 %v1480, %v1578
        %v1673 = vadd.f32 %v1481, %v1581
        %v1674 = vadd.f32 %v1482, %v1583
        %v1675 = vadd.f32 %v1483, %v1586
        %v1676 = vadd.f32 %v1484, %v1588
        %v1677 = vadd.f32 %v1485, %v1591
        %v1678 = vadd.f32 %v1486, %v1593
        %v1679 = vadd.f32 %v1487, %v1596
        %v1680 = vadd.f32 %v1488, %v1598
        %v1681 = vadd.f32 %v1489, %v1601
        %v1682 = vadd.f32 %v1490, %v1603
        %v1683 = vadd.f32 %v1491, %v1606
        %v1684 = vadd.f32 %v1492, %v1608
        %v1685 = vadd.f32 %v1493, %v1611
        %v1686 = vadd.f32 %v1494, %v1613
        %v1687 = vadd.f32 %v1495, %v1616
        %v1688 = vadd.f32 %v1496, %v1618
        %v1689 = vadd.f32 %v1497, %v1621
        %v1690 = vadd.f32 %v1498, %v1623
        %v1691 = vadd.f32 %v1499, %v1626
        %v1692 = vadd.f32 %v1500, %v1628
        %1693 = vst [vmem:[#allocation4] sm:$0xff] %v1661
        %1694 = vst [vmem:[#allocation4 + $0x8] sm:$0xff] %v1662
        %1695 = vst [vmem:[#allocation4 + $0x10] sm:$0xff] %v1663
        %1696 = vst [vmem:[#allocation4 + $0x18] sm:$0xff] %v1664
        %1697 = vst [vmem:[#allocation4 + $0x20] sm:$0xff] %v1665
        %1698 = vst [vmem:[#allocation4 + $0x28] sm:$0xff] %v1666
        %1699 = vst [vmem:[#allocation4 + $0x30] sm:$0xff] %v1667
        %1700 = vst [vmem:[#allocation4 + $0x38] sm:$0xff] %v1668
        %1701 = vst [vmem:[#allocation4 + $0x40] sm:$0xff] %v1669
        %1702 = vst [vmem:[#allocation4 + $0x48] sm:$0xff] %v1670
        %1703 = vst [vmem:[#allocation4 + $0x50] sm:$0xff] %v1671
        %1704 = vst [vmem:[#allocation4 + $0x58] sm:$0xff] %v1672
        %1705 = vst [vmem:[#allocation4 + $0x60] sm:$0xff] %v1673
        %1706 = vst [vmem:[#allocation4 + $0x68] sm:$0xff] %v1674
        %1707 = vst [vmem:[#allocation4 + $0x70] sm:$0xff] %v1675
        %1708 = vst [vmem:[#allocation4 + $0x78] sm:$0xff] %v1676
        %1709 = vst [vmem:[#allocation4 + $0x80] sm:$0xff] %v1677
        %1710 = vst [vmem:[#allocation4 + $0x88] sm:$0xff] %v1678
        %1711 = vst [vmem:[#allocation4 + $0x90] sm:$0xff] %v1679
        %1712 = vst [vmem:[#allocation4 + $0x98] sm:$0xff] %v1680
        %1713 = vst [vmem:[#allocation4 + $0xa0] sm:$0xff] %v1681
        %1714 = vst [vmem:[#allocation4 + $0xa8] sm:$0xff] %v1682
        %1715 = vst [vmem:[#allocation4 + $0xb0] sm:$0xff] %v1683
        %1716 = vst [vmem:[#allocation4 + $0xb8] sm:$0xff] %v1684
        %1717 = vst [vmem:[#allocation4 + $0xc0] sm:$0xff] %v1685
        %1718 = vst [vmem:[#allocation4 + $0xc8] sm:$0xff] %v1686
        %1719 = vst [vmem:[#allocation4 + $0xd0] sm:$0xff] %v1687
        %1720 = vst [vmem:[#allocation4 + $0xd8] sm:$0xff] %v1688
        %1721 = vst [vmem:[#allocation4 + $0xe0] sm:$0xff] %v1689
        %1722 = vst [vmem:[#allocation4 + $0xe8] sm:$0xff] %v1690
        %1723 = vst [vmem:[#allocation4 + $0xf0] sm:$0xff] %v1691
        %1724 = vst [vmem:[#allocation4 + $0xf8] sm:$0xff] %v1692
        %v1725 = vld [vmem:[%s228] sm:$0xc]
        %v1726 = vld [vmem:[%s228 + $0x4] sm:$0xf]
        %v1727 = vld [vmem:[%s228 + $0x8] sm:$0x3]
        %v1728 = vld [vmem:[%s228 + $0xc] sm:$0xc]
        %v1729 = vld [vmem:[%s228 + $0x10] sm:$0xf]
        %v1730 = vld [vmem:[%s228 + $0x14] sm:$0x3]
        %v1731 = vld [vmem:[%s228 + $0x18] sm:$0xc]
        %v1732 = vld [vmem:[%s228 + $0x1c] sm:$0xf]
        %v1733 = vld [vmem:[%s228 + $0x20] sm:$0x3]
        %v1734 = vld [vmem:[%s228 + $0x24] sm:$0xc]
        %v1735 = vld [vmem:[%s228 + $0x28] sm:$0xf]
        %v1736 = vld [vmem:[%s228 + $0x2c] sm:$0x3]
        %v1737 = vld [vmem:[%s228 + $0x30] sm:$0xc]
        %v1738 = vld [vmem:[%s228 + $0x34] sm:$0xf]
        %v1739 = vld [vmem:[%s228 + $0x38] sm:$0x3]
        %v1740 = vld [vmem:[%s228 + $0x3c] sm:$0xc]
        %v1741 = vld [vmem:[%s228 + $0x40] sm:$0xf]
        %v1742 = vld [vmem:[%s228 + $0x44] sm:$0x3]
        %v1743 = vld [vmem:[%s228 + $0x48] sm:$0xc]
        %v1744 = vld [vmem:[%s228 + $0x4c] sm:$0xf]
        %v1745 = vld [vmem:[%s228 + $0x50] sm:$0x3]
        %v1746 = vld [vmem:[%s228 + $0x54] sm:$0xc]
        %v1747 = vld [vmem:[%s228 + $0x58] sm:$0xf]
        %v1748 = vld [vmem:[%s228 + $0x5c] sm:$0x3]
        %v1749 = vld [vmem:[%s228 + $0x60] sm:$0xc]
        %v1750 = vld [vmem:[%s228 + $0x64] sm:$0xf]
        %v1751 = vld [vmem:[%s228 + $0x68] sm:$0x3]
        %v1752 = vld [vmem:[%s228 + $0x6c] sm:$0xc]
        %v1753 = vld [vmem:[%s228 + $0x70] sm:$0xf]
        %v1754 = vld [vmem:[%s228 + $0x74] sm:$0x3]
        %v1755 = vld [vmem:[%s228 + $0x78] sm:$0xc]
        %v1756 = vld [vmem:[%s228 + $0x7c] sm:$0xf]
        %v1757 = vld [vmem:[%s228 + $0x80] sm:$0x3]
        %v1758 = vld [vmem:[%s228 + $0x84] sm:$0xc]
        %v1759 = vld [vmem:[%s228 + $0x88] sm:$0xf]
        %v1760 = vld [vmem:[%s228 + $0x8c] sm:$0x3]
        %v1761 = vld [vmem:[%s228 + $0x90] sm:$0xc]
        %v1762 = vld [vmem:[%s228 + $0x94] sm:$0xf]
        %v1763 = vld [vmem:[%s228 + $0x98] sm:$0x3]
        %v1764 = vld [vmem:[%s228 + $0x9c] sm:$0xc]
        %v1765 = vld [vmem:[%s228 + $0xa0] sm:$0xf]
        %v1766 = vld [vmem:[%s228 + $0xa4] sm:$0x3]
        %v1767 = vld [vmem:[%s228 + $0xa8] sm:$0xc]
        %v1768 = vld [vmem:[%s228 + $0xac] sm:$0xf]
        %v1769 = vld [vmem:[%s228 + $0xb0] sm:$0x3]
        %v1770 = vld [vmem:[%s228 + $0xb4] sm:$0xc]
        %v1771 = vld [vmem:[%s228 + $0xb8] sm:$0xf]
        %v1772 = vld [vmem:[%s228 + $0xbc] sm:$0x3]
        %v1773 = vld [vmem:[%s228 + $0xc0] sm:$0xc]
        %v1774 = vld [vmem:[%s228 + $0xc4] sm:$0xf]
        %v1775 = vld [vmem:[%s228 + $0xc8] sm:$0x3]
        %v1776 = vld [vmem:[%s228 + $0xcc] sm:$0xc]
        %v1777 = vld [vmem:[%s228 + $0xd0] sm:$0xf]
        %v1778 = vld [vmem:[%s228 + $0xd4] sm:$0x3]
        %v1779 = vld [vmem:[%s228 + $0xd8] sm:$0xc]
        %v1780 = vld [vmem:[%s228 + $0xdc] sm:$0xf]
        %v1781 = vld [vmem:[%s228 + $0xe0] sm:$0x3]
        %v1782 = vld [vmem:[%s228 + $0xe4] sm:$0xc]
        %v1783 = vld [vmem:[%s228 + $0xe8] sm:$0xf]
        %v1784 = vld [vmem:[%s228 + $0xec] sm:$0x3]
        %v1785 = vunpack.c.l.bf16 %v1725
        %v1786 = vunpack.c.l.bf16 %v1726
        %v1787 = vunpack.c.l.bf16 %v1727
        %v1788 = vunpack.c.l.bf16 %v1728
        %v1789 = vunpack.c.l.bf16 %v1729
        %v1790 = vunpack.c.l.bf16 %v1730
        %v1791 = vunpack.c.l.bf16 %v1731
        %v1792 = vunpack.c.l.bf16 %v1732
        %v1793 = vunpack.c.l.bf16 %v1733
        %v1794 = vunpack.c.l.bf16 %v1734
        %v1795 = vunpack.c.l.bf16 %v1735
        %v1796 = vunpack.c.l.bf16 %v1736
        %v1797 = vunpack.c.l.bf16 %v1737
        %v1798 = vunpack.c.l.bf16 %v1738
        %v1799 = vunpack.c.l.bf16 %v1739
        %v1800 = vunpack.c.l.bf16 %v1740
        %v1801 = vunpack.c.l.bf16 %v1741
        %v1802 = vunpack.c.l.bf16 %v1742
        %v1803 = vunpack.c.l.bf16 %v1743
        %v1804 = vunpack.c.l.bf16 %v1744
        %v1805 = vunpack.c.l.bf16 %v1745
        %v1806 = vunpack.c.l.bf16 %v1746
        %v1807 = vunpack.c.l.bf16 %v1747
        %v1808 = vunpack.c.l.bf16 %v1748
        %v1809 = vunpack.c.l.bf16 %v1749
        %v1810 = vunpack.c.l.bf16 %v1750
        %v1811 = vunpack.c.l.bf16 %v1751
        %v1812 = vunpack.c.l.bf16 %v1752
        %v1813 = vunpack.c.l.bf16 %v1753
        %v1814 = vunpack.c.l.bf16 %v1754
        %v1815 = vunpack.c.l.bf16 %v1755
        %v1816 = vunpack.c.l.bf16 %v1756
        %v1817 = vunpack.c.l.bf16 %v1757
        %v1818 = vunpack.c.l.bf16 %v1758
        %v1819 = vunpack.c.l.bf16 %v1759
        %v1820 = vunpack.c.l.bf16 %v1760
        %v1821 = vunpack.c.l.bf16 %v1761
        %v1822 = vunpack.c.l.bf16 %v1762
        %v1823 = vunpack.c.l.bf16 %v1763
        %v1824 = vunpack.c.l.bf16 %v1764
        %v1825 = vunpack.c.l.bf16 %v1765
        %v1826 = vunpack.c.l.bf16 %v1766
        %v1827 = vunpack.c.l.bf16 %v1767
        %v1828 = vunpack.c.l.bf16 %v1768
        %v1829 = vunpack.c.l.bf16 %v1769
        %v1830 = vunpack.c.l.bf16 %v1770
        %v1831 = vunpack.c.l.bf16 %v1771
        %v1832 = vunpack.c.l.bf16 %v1772
        %v1833 = vunpack.c.l.bf16 %v1773
        %v1834 = vunpack.c.l.bf16 %v1774
        %v1835 = vunpack.c.l.bf16 %v1775
        %v1836 = vunpack.c.l.bf16 %v1776
        %v1837 = vunpack.c.l.bf16 %v1777
        %v1838 = vunpack.c.l.bf16 %v1778
        %v1839 = vunpack.c.l.bf16 %v1779
        %v1840 = vunpack.c.l.bf16 %v1780
        %v1841 = vunpack.c.l.bf16 %v1781
        %v1842 = vunpack.c.l.bf16 %v1782
        %v1843 = vunpack.c.l.bf16 %v1783
        %v1844 = vunpack.c.l.bf16 %v1784
        %v1845 = vld [vmem:[#allocation5 + $0x2] sm:$0x1]
        %v1846 = vlaneseq
        %v1847 = vshrl.u32 %v1846, 7
        %v1848 = vsub.s32 0, %v1847
        %v1849 = vrot.slane %v1845, %v1848
        %v1850 = vmul.f32 %v1785, %v1849
        %v1851 = vmul.f32 %v1786, %v1849
        %v1852 = vmul.f32 %v1787, %v1849
        %v1853 = vmul.f32 %v1788, %v1849
        %v1854 = vmul.f32 %v1789, %v1849
        %v1855 = vmul.f32 %v1790, %v1849
        %v1856 = vmul.f32 %v1791, %v1849
        %v1857 = vmul.f32 %v1792, %v1849
        %v1858 = vmul.f32 %v1793, %v1849
        %v1859 = vmul.f32 %v1794, %v1849
        %v1860 = vmul.f32 %v1795, %v1849
        %v1861 = vmul.f32 %v1796, %v1849
        %v1862 = vmul.f32 %v1797, %v1849
        %v1863 = vmul.f32 %v1798, %v1849
        %v1864 = vmul.f32 %v1799, %v1849
        %v1865 = vmul.f32 %v1800, %v1849
        %v1866 = vmul.f32 %v1801, %v1849
        %v1867 = vmul.f32 %v1802, %v1849
        %v1868 = vmul.f32 %v1803, %v1849
        %v1869 = vmul.f32 %v1804, %v1849
        %v1870 = vmul.f32 %v1805, %v1849
        %v1871 = vmul.f32 %v1806, %v1849
        %v1872 = vmul.f32 %v1807, %v1849
        %v1873 = vmul.f32 %v1808, %v1849
        %v1874 = vmul.f32 %v1809, %v1849
        %v1875 = vmul.f32 %v1810, %v1849
        %v1876 = vmul.f32 %v1811, %v1849
        %v1877 = vmul.f32 %v1812, %v1849
        %v1878 = vmul.f32 %v1813, %v1849
        %v1879 = vmul.f32 %v1814, %v1849
        %v1880 = vmul.f32 %v1815, %v1849
        %v1881 = vmul.f32 %v1816, %v1849
        %v1882 = vmul.f32 %v1817, %v1849
        %v1883 = vmul.f32 %v1818, %v1849
        %v1884 = vmul.f32 %v1819, %v1849
        %v1885 = vmul.f32 %v1820, %v1849
        %v1886 = vmul.f32 %v1821, %v1849
        %v1887 = vmul.f32 %v1822, %v1849
        %v1888 = vmul.f32 %v1823, %v1849
        %v1889 = vmul.f32 %v1824, %v1849
        %v1890 = vmul.f32 %v1825, %v1849
        %v1891 = vmul.f32 %v1826, %v1849
        %v1892 = vmul.f32 %v1827, %v1849
        %v1893 = vmul.f32 %v1828, %v1849
        %v1894 = vmul.f32 %v1829, %v1849
        %v1895 = vmul.f32 %v1830, %v1849
        %v1896 = vmul.f32 %v1831, %v1849
        %v1897 = vmul.f32 %v1832, %v1849
        %v1898 = vld [vmem:[#allocation4] sm:$0xff]
        %v1899 = vld [vmem:[#allocation4 + $0x8] sm:$0xff]
        %v1900 = vld [vmem:[#allocation4 + $0x10] sm:$0xff]
        %v1901 = vld [vmem:[#allocation4 + $0x18] sm:$0xff]
        %v1902 = vld [vmem:[#allocation4 + $0x20] sm:$0xff]
        %v1903 = vld [vmem:[#allocation4 + $0x28] sm:$0xff]
        %v1904 = vld [vmem:[#allocation4 + $0x30] sm:$0xff]
        %v1905 = vld [vmem:[#allocation4 + $0x38] sm:$0xff]
        %v1906 = vld [vmem:[#allocation4 + $0x40] sm:$0xff]
        %v1907 = vld [vmem:[#allocation4 + $0x48] sm:$0xff]
        %v1908 = vld [vmem:[#allocation4 + $0x50] sm:$0xff]
        %v1909 = vld [vmem:[#allocation4 + $0x58] sm:$0xff]
        %v1910 = vld [vmem:[#allocation4 + $0x60] sm:$0xff]
        %v1911 = vld [vmem:[#allocation4 + $0x68] sm:$0xff]
        %v1912 = vld [vmem:[#allocation4 + $0x70] sm:$0xff]
        %v1913 = vld [vmem:[#allocation4 + $0x78] sm:$0xff]
        %v1914 = vld [vmem:[#allocation4 + $0x80] sm:$0xff]
        %v1915 = vld [vmem:[#allocation4 + $0x88] sm:$0xff]
        %v1916 = vld [vmem:[#allocation4 + $0x90] sm:$0xff]
        %v1917 = vld [vmem:[#allocation4 + $0x98] sm:$0xff]
        %v1918 = vld [vmem:[#allocation4 + $0xa0] sm:$0xff]
        %v1919 = vld [vmem:[#allocation4 + $0xa8] sm:$0xff]
        %v1920 = vld [vmem:[#allocation4 + $0xb0] sm:$0xff]
        %v1921 = vld [vmem:[#allocation4 + $0xb8] sm:$0xff]
        %v1922 = vld [vmem:[#allocation4 + $0xc0] sm:$0xff]
        %v1923 = vld [vmem:[#allocation4 + $0xc8] sm:$0xff]
        %v1924 = vld [vmem:[#allocation4 + $0xd0] sm:$0xff]
        %v1925 = vld [vmem:[#allocation4 + $0xd8] sm:$0xff]
        %v1926 = vld [vmem:[#allocation4 + $0xe0] sm:$0xff]
        %v1927 = vld [vmem:[#allocation4 + $0xe8] sm:$0xff]
        %v1928 = vld [vmem:[#allocation4 + $0xf0] sm:$0xff]
        %v1929 = vld [vmem:[#allocation4 + $0xf8] sm:$0xff]
        %vm1978 = vcmask 1043456
        %v1979 = vrot.slane %v1850, 4
        %v1980 = vrot.slane %v1851, 4
        %v1981 = vsel %vm1978, %v1979, %v1980
        %v1982 = vrot.slane %v1852, 4
        %v1983 = vsel %vm1978, %v1980, %v1982
        %v1984 = vrot.slane %v1853, 4
        %v1985 = vrot.slane %v1854, 4
        %v1986 = vsel %vm1978, %v1984, %v1985
        %v1987 = vrot.slane %v1855, 4
        %v1988 = vsel %vm1978, %v1985, %v1987
        %v1989 = vrot.slane %v1856, 4
        %v1990 = vrot.slane %v1857, 4
        %v1991 = vsel %vm1978, %v1989, %v1990
        %v1992 = vrot.slane %v1858, 4
        %v1993 = vsel %vm1978, %v1990, %v1992
        %v1994 = vrot.slane %v1859, 4
        %v1995 = vrot.slane %v1860, 4
        %v1996 = vsel %vm1978, %v1994, %v1995
        %v1997 = vrot.slane %v1861, 4
        %v1998 = vsel %vm1978, %v1995, %v1997
        %v1999 = vrot.slane %v1862, 4
        %v2000 = vrot.slane %v1863, 4
        %v2001 = vsel %vm1978, %v1999, %v2000
        %v2002 = vrot.slane %v1864, 4
        %v2003 = vsel %vm1978, %v2000, %v2002
        %v2004 = vrot.slane %v1865, 4
        %v2005 = vrot.slane %v1866, 4
        %v2006 = vsel %vm1978, %v2004, %v2005
        %v2007 = vrot.slane %v1867, 4
        %v2008 = vsel %vm1978, %v2005, %v2007
        %v2009 = vrot.slane %v1868, 4
        %v2010 = vrot.slane %v1869, 4
        %v2011 = vsel %vm1978, %v2009, %v2010
        %v2012 = vrot.slane %v1870, 4
        %v2013 = vsel %vm1978, %v2010, %v2012
        %v2014 = vrot.slane %v1871, 4
        %v2015 = vrot.slane %v1872, 4
        %v2016 = vsel %vm1978, %v2014, %v2015
        %v2017 = vrot.slane %v1873, 4
        %v2018 = vsel %vm1978, %v2015, %v2017
        %v2019 = vrot.slane %v1874, 4
        %v2020 = vrot.slane %v1875, 4
        %v2021 = vsel %vm1978, %v2019, %v2020
        %v2022 = vrot.slane %v1876, 4
        %v2023 = vsel %vm1978, %v2020, %v2022
        %v2024 = vrot.slane %v1877, 4
        %v2025 = vrot.slane %v1878, 4
        %v2026 = vsel %vm1978, %v2024, %v2025
        %v2027 = vrot.slane %v1879, 4
        %v2028 = vsel %vm1978, %v2025, %v2027
        %v2029 = vrot.slane %v1880, 4
        %v2030 = vrot.slane %v1881, 4
        %v2031 = vsel %vm1978, %v2029, %v2030
        %v2032 = vrot.slane %v1882, 4
        %v2033 = vsel %vm1978, %v2030, %v2032
        %v2034 = vrot.slane %v1883, 4
        %v2035 = vrot.slane %v1884, 4
        %v2036 = vsel %vm1978, %v2034, %v2035
        %v2037 = vrot.slane %v1885, 4
        %v2038 = vsel %vm1978, %v2035, %v2037
        %v2039 = vrot.slane %v1886, 4
        %v2040 = vrot.slane %v1887, 4
        %v2041 = vsel %vm1978, %v2039, %v2040
        %v2042 = vrot.slane %v1888, 4
        %v2043 = vsel %vm1978, %v2040, %v2042
        %v2044 = vrot.slane %v1889, 4
        %v2045 = vrot.slane %v1890, 4
        %v2046 = vsel %vm1978, %v2044, %v2045
        %v2047 = vrot.slane %v1891, 4
        %v2048 = vsel %vm1978, %v2045, %v2047
        %v2049 = vrot.slane %v1892, 4
        %v2050 = vrot.slane %v1893, 4
        %v2051 = vsel %vm1978, %v2049, %v2050
        %v2052 = vrot.slane %v1894, 4
        %v2053 = vsel %vm1978, %v2050, %v2052
        %v2054 = vrot.slane %v1895, 4
        %v2055 = vrot.slane %v1896, 4
        %v2056 = vsel %vm1978, %v2054, %v2055
        %v2057 = vrot.slane %v1897, 4
        %v2058 = vsel %vm1978, %v2055, %v2057
        %v2091 = vadd.f32 %v1898, %v1981
        %v2092 = vadd.f32 %v1899, %v1983
        %v2093 = vadd.f32 %v1900, %v1986
        %v2094 = vadd.f32 %v1901, %v1988
        %v2095 = vadd.f32 %v1902, %v1991
        %v2096 = vadd.f32 %v1903, %v1993
        %v2097 = vadd.f32 %v1904, %v1996
        %v2098 = vadd.f32 %v1905, %v1998
        %v2099 = vadd.f32 %v1906, %v2001
        %v2100 = vadd.f32 %v1907, %v2003
        %v2101 = vadd.f32 %v1908, %v2006
        %v2102 = vadd.f32 %v1909, %v2008
        %v2103 = vadd.f32 %v1910, %v2011
        %v2104 = vadd.f32 %v1911, %v2013
        %v2105 = vadd.f32 %v1912, %v2016
        %v2106 = vadd.f32 %v1913, %v2018
        %v2107 = vadd.f32 %v1914, %v2021
        %v2108 = vadd.f32 %v1915, %v2023
        %v2109 = vadd.f32 %v1916, %v2026
        %v2110 = vadd.f32 %v1917, %v2028
        %v2111 = vadd.f32 %v1918, %v2031
        %v2112 = vadd.f32 %v1919, %v2033
        %v2113 = vadd.f32 %v1920, %v2036
        %v2114 = vadd.f32 %v1921, %v2038
        %v2115 = vadd.f32 %v1922, %v2041
        %v2116 = vadd.f32 %v1923, %v2043
        %v2117 = vadd.f32 %v1924, %v2046
        %v2118 = vadd.f32 %v1925, %v2048
        %v2119 = vadd.f32 %v1926, %v2051
        %v2120 = vadd.f32 %v1927, %v2053
        %v2121 = vadd.f32 %v1928, %v2056
        %v2122 = vadd.f32 %v1929, %v2058
        %2123 = vst [vmem:[#allocation4] sm:$0xff] %v2091
        %2124 = vst [vmem:[#allocation4 + $0x8] sm:$0xff] %v2092
        %2125 = vst [vmem:[#allocation4 + $0x10] sm:$0xff] %v2093
        %2126 = vst [vmem:[#allocation4 + $0x18] sm:$0xff] %v2094
        %2127 = vst [vmem:[#allocation4 + $0x20] sm:$0xff] %v2095
        %2128 = vst [vmem:[#allocation4 + $0x28] sm:$0xff] %v2096
        %2129 = vst [vmem:[#allocation4 + $0x30] sm:$0xff] %v2097
        %2130 = vst [vmem:[#allocation4 + $0x38] sm:$0xff] %v2098
        %2131 = vst [vmem:[#allocation4 + $0x40] sm:$0xff] %v2099
        %2132 = vst [vmem:[#allocation4 + $0x48] sm:$0xff] %v2100
        %2133 = vst [vmem:[#allocation4 + $0x50] sm:$0xff] %v2101
        %2134 = vst [vmem:[#allocation4 + $0x58] sm:$0xff] %v2102
        %2135 = vst [vmem:[#allocation4 + $0x60] sm:$0xff] %v2103
        %2136 = vst [vmem:[#allocation4 + $0x68] sm:$0xff] %v2104
        %2137 = vst [vmem:[#allocation4 + $0x70] sm:$0xff] %v2105
        %2138 = vst [vmem:[#allocation4 + $0x78] sm:$0xff] %v2106
        %2139 = vst [vmem:[#allocation4 + $0x80] sm:$0xff] %v2107
        %2140 = vst [vmem:[#allocation4 + $0x88] sm:$0xff] %v2108
        %2141 = vst [vmem:[#allocation4 + $0x90] sm:$0xff] %v2109
        %2142 = vst [vmem:[#allocation4 + $0x98] sm:$0xff] %v2110
        %2143 = vst [vmem:[#allocation4 + $0xa0] sm:$0xff] %v2111
        %2144 = vst [vmem:[#allocation4 + $0xa8] sm:$0xff] %v2112
        %2145 = vst [vmem:[#allocation4 + $0xb0] sm:$0xff] %v2113
        %2146 = vst [vmem:[#allocation4 + $0xb8] sm:$0xff] %v2114
        %2147 = vst [vmem:[#allocation4 + $0xc0] sm:$0xff] %v2115
        %2148 = vst [vmem:[#allocation4 + $0xc8] sm:$0xff] %v2116
        %2149 = vst [vmem:[#allocation4 + $0xd0] sm:$0xff] %v2117
        %2150 = vst [vmem:[#allocation4 + $0xd8] sm:$0xff] %v2118
        %2151 = vst [vmem:[#allocation4 + $0xe0] sm:$0xff] %v2119
        %2152 = vst [vmem:[#allocation4 + $0xe8] sm:$0xff] %v2120
        %2153 = vst [vmem:[#allocation4 + $0xf0] sm:$0xff] %v2121
        %2154 = vst [vmem:[#allocation4 + $0xf8] sm:$0xff] %v2122
        %v2155 = vld [vmem:[#allocation5 + $0x5] sm:$0x1]
        %v2156 = vlaneseq
        %v2157 = vshrl.u32 %v2156, 7
        %v2158 = vsub.s32 0, %v2157
        %v2159 = vrot.slane %v2155, %v2158
        %v2160 = vmul.f32 %v1791, %v2159
        %v2161 = vmul.f32 %v1792, %v2159
        %v2162 = vmul.f32 %v1793, %v2159
        %v2163 = vmul.f32 %v1794, %v2159
        %v2164 = vmul.f32 %v1795, %v2159
        %v2165 = vmul.f32 %v1796, %v2159
        %v2166 = vmul.f32 %v1797, %v2159
        %v2167 = vmul.f32 %v1798, %v2159
        %v2168 = vmul.f32 %v1799, %v2159
        %v2169 = vmul.f32 %v1800, %v2159
        %v2170 = vmul.f32 %v1801, %v2159
        %v2171 = vmul.f32 %v1802, %v2159
        %v2172 = vmul.f32 %v1803, %v2159
        %v2173 = vmul.f32 %v1804, %v2159
        %v2174 = vmul.f32 %v1805, %v2159
        %v2175 = vmul.f32 %v1806, %v2159
        %v2176 = vmul.f32 %v1807, %v2159
        %v2177 = vmul.f32 %v1808, %v2159
        %v2178 = vmul.f32 %v1809, %v2159
        %v2179 = vmul.f32 %v1810, %v2159
        %v2180 = vmul.f32 %v1811, %v2159
        %v2181 = vmul.f32 %v1812, %v2159
        %v2182 = vmul.f32 %v1813, %v2159
        %v2183 = vmul.f32 %v1814, %v2159
        %v2184 = vmul.f32 %v1815, %v2159
        %v2185 = vmul.f32 %v1816, %v2159
        %v2186 = vmul.f32 %v1817, %v2159
        %v2187 = vmul.f32 %v1818, %v2159
        %v2188 = vmul.f32 %v1819, %v2159
        %v2189 = vmul.f32 %v1820, %v2159
        %v2190 = vmul.f32 %v1821, %v2159
        %v2191 = vmul.f32 %v1822, %v2159
        %v2192 = vmul.f32 %v1823, %v2159
        %v2193 = vmul.f32 %v1824, %v2159
        %v2194 = vmul.f32 %v1825, %v2159
        %v2195 = vmul.f32 %v1826, %v2159
        %v2196 = vmul.f32 %v1827, %v2159
        %v2197 = vmul.f32 %v1828, %v2159
        %v2198 = vmul.f32 %v1829, %v2159
        %v2199 = vmul.f32 %v1830, %v2159
        %v2200 = vmul.f32 %v1831, %v2159
        %v2201 = vmul.f32 %v1832, %v2159
        %v2202 = vmul.f32 %v1833, %v2159
        %v2203 = vmul.f32 %v1834, %v2159
        %v2204 = vmul.f32 %v1835, %v2159
        %v2205 = vmul.f32 %v1836, %v2159
        %v2206 = vmul.f32 %v1837, %v2159
        %v2207 = vmul.f32 %v1838, %v2159
        %v2208 = vld [vmem:[#allocation4] sm:$0xff]
        %v2209 = vld [vmem:[#allocation4 + $0x8] sm:$0xff]
        %v2210 = vld [vmem:[#allocation4 + $0x10] sm:$0xff]
        %v2211 = vld [vmem:[#allocation4 + $0x18] sm:$0xff]
        %v2212 = vld [vmem:[#allocation4 + $0x20] sm:$0xff]
        %v2213 = vld [vmem:[#allocation4 + $0x28] sm:$0xff]
        %v2214 = vld [vmem:[#allocation4 + $0x30] sm:$0xff]
        %v2215 = vld [vmem:[#allocation4 + $0x38] sm:$0xff]
        %v2216 = vld [vmem:[#allocation4 + $0x40] sm:$0xff]
        %v2217 = vld [vmem:[#allocation4 + $0x48] sm:$0xff]
        %v2218 = vld [vmem:[#allocation4 + $0x50] sm:$0xff]
        %v2219 = vld [vmem:[#allocation4 + $0x58] sm:$0xff]
        %v2220 = vld [vmem:[#allocation4 + $0x60] sm:$0xff]
        %v2221 = vld [vmem:[#allocation4 + $0x68] sm:$0xff]
        %v2222 = vld [vmem:[#allocation4 + $0x70] sm:$0xff]
        %v2223 = vld [vmem:[#allocation4 + $0x78] sm:$0xff]
        %v2224 = vld [vmem:[#allocation4 + $0x80] sm:$0xff]
        %v2225 = vld [vmem:[#allocation4 + $0x88] sm:$0xff]
        %v2226 = vld [vmem:[#allocation4 + $0x90] sm:$0xff]
        %v2227 = vld [vmem:[#allocation4 + $0x98] sm:$0xff]
        %v2228 = vld [vmem:[#allocation4 + $0xa0] sm:$0xff]
        %v2229 = vld [vmem:[#allocation4 + $0xa8] sm:$0xff]
        %v2230 = vld [vmem:[#allocation4 + $0xb0] sm:$0xff]
        %v2231 = vld [vmem:[#allocation4 + $0xb8] sm:$0xff]
        %v2232 = vld [vmem:[#allocation4 + $0xc0] sm:$0xff]
        %v2233 = vld [vmem:[#allocation4 + $0xc8] sm:$0xff]
        %v2234 = vld [vmem:[#allocation4 + $0xd0] sm:$0xff]
        %v2235 = vld [vmem:[#allocation4 + $0xd8] sm:$0xff]
        %v2236 = vld [vmem:[#allocation4 + $0xe0] sm:$0xff]
        %v2237 = vld [vmem:[#allocation4 + $0xe8] sm:$0xff]
        %v2238 = vld [vmem:[#allocation4 + $0xf0] sm:$0xff]
        %v2239 = vld [vmem:[#allocation4 + $0xf8] sm:$0xff]
        %v2288 = vrot.slane %v2160, 4
        %v2289 = vrot.slane %v2161, 4
        %v2290 = vsel %vm1978, %v2288, %v2289
        %v2291 = vrot.slane %v2162, 4
        %v2292 = vsel %vm1978, %v2289, %v2291
        %v2293 = vrot.slane %v2163, 4
        %v2294 = vrot.slane %v2164, 4
        %v2295 = vsel %vm1978, %v2293, %v2294
        %v2296 = vrot.slane %v2165, 4
        %v2297 = vsel %vm1978, %v2294, %v2296
        %v2298 = vrot.slane %v2166, 4
        %v2299 = vrot.slane %v2167, 4
        %v2300 = vsel %vm1978, %v2298, %v2299
        %v2301 = vrot.slane %v2168, 4
        %v2302 = vsel %vm1978, %v2299, %v2301
        %v2303 = vrot.slane %v2169, 4
        %v2304 = vrot.slane %v2170, 4
        %v2305 = vsel %vm1978, %v2303, %v2304
        %v2306 = vrot.slane %v2171, 4
        %v2307 = vsel %vm1978, %v2304, %v2306
        %v2308 = vrot.slane %v2172, 4
        %v2309 = vrot.slane %v2173, 4
        %v2310 = vsel %vm1978, %v2308, %v2309
        %v2311 = vrot.slane %v2174, 4
        %v2312 = vsel %vm1978, %v2309, %v2311
        %v2313 = vrot.slane %v2175, 4
        %v2314 = vrot.slane %v2176, 4
        %v2315 = vsel %vm1978, %v2313, %v2314
        %v2316 = vrot.slane %v2177, 4
        %v2317 = vsel %vm1978, %v2314, %v2316
        %v2318 = vrot.slane %v2178, 4
        %v2319 = vrot.slane %v2179, 4
        %v2320 = vsel %vm1978, %v2318, %v2319
        %v2321 = vrot.slane %v2180, 4
        %v2322 = vsel %vm1978, %v2319, %v2321
        %v2323 = vrot.slane %v2181, 4
        %v2324 = vrot.slane %v2182, 4
        %v2325 = vsel %vm1978, %v2323, %v2324
        %v2326 = vrot.slane %v2183, 4
        %v2327 = vsel %vm1978, %v2324, %v2326
        %v2328 = vrot.slane %v2184, 4
        %v2329 = vrot.slane %v2185, 4
        %v2330 = vsel %vm1978, %v2328, %v2329
        %v2331 = vrot.slane %v2186, 4
        %v2332 = vsel %vm1978, %v2329, %v2331
        %v2333 = vrot.slane %v2187, 4
        %v2334 = vrot.slane %v2188, 4
        %v2335 = vsel %vm1978, %v2333, %v2334
        %v2336 = vrot.slane %v2189, 4
        %v2337 = vsel %vm1978, %v2334, %v2336
        %v2338 = vrot.slane %v2190, 4
        %v2339 = vrot.slane %v2191, 4
        %v2340 = vsel %vm1978, %v2338, %v2339
        %v2341 = vrot.slane %v2192, 4
        %v2342 = vsel %vm1978, %v2339, %v2341
        %v2343 = vrot.slane %v2193, 4
        %v2344 = vrot.slane %v2194, 4
        %v2345 = vsel %vm1978, %v2343, %v2344
        %v2346 = vrot.slane %v2195, 4
        %v2347 = vsel %vm1978, %v2344, %v2346
        %v2348 = vrot.slane %v2196, 4
        %v2349 = vrot.slane %v2197, 4
        %v2350 = vsel %vm1978, %v2348, %v2349
        %v2351 = vrot.slane %v2198, 4
        %v2352 = vsel %vm1978, %v2349, %v2351
        %v2353 = vrot.slane %v2199, 4
        %v2354 = vrot.slane %v2200, 4
        %v2355 = vsel %vm1978, %v2353, %v2354
        %v2356 = vrot.slane %v2201, 4
        %v2357 = vsel %vm1978, %v2354, %v2356
        %v2358 = vrot.slane %v2202, 4
        %v2359 = vrot.slane %v2203, 4
        %v2360 = vsel %vm1978, %v2358, %v2359
        %v2361 = vrot.slane %v2204, 4
        %v2362 = vsel %vm1978, %v2359, %v2361
        %v2363 = vrot.slane %v2205, 4
        %v2364 = vrot.slane %v2206, 4
        %v2365 = vsel %vm1978, %v2363, %v2364
        %v2366 = vrot.slane %v2207, 4
        %v2367 = vsel %vm1978, %v2364, %v2366
        %v2400 = vadd.f32 %v2208, %v2290
        %v2401 = vadd.f32 %v2209, %v2292
        %v2402 = vadd.f32 %v2210, %v2295
        %v2403 = vadd.f32 %v2211, %v2297
        %v2404 = vadd.f32 %v2212, %v2300
        %v2405 = vadd.f32 %v2213, %v2302
        %v2406 = vadd.f32 %v2214, %v2305
        %v2407 = vadd.f32 %v2215, %v2307
        %v2408 = vadd.f32 %v2216, %v2310
        %v2409 = vadd.f32 %v2217, %v2312
        %v2410 = vadd.f32 %v2218, %v2315
        %v2411 = vadd.f32 %v2219, %v2317
        %v2412 = vadd.f32 %v2220, %v2320
        %v2413 = vadd.f32 %v2221, %v2322
        %v2414 = vadd.f32 %v2222, %v2325
        %v2415 = vadd.f32 %v2223, %v2327
        %v2416 = vadd.f32 %v2224, %v2330
        %v2417 = vadd.f32 %v2225, %v2332
        %v2418 = vadd.f32 %v2226, %v2335
        %v2419 = vadd.f32 %v2227, %v2337
        %v2420 = vadd.f32 %v2228, %v2340
        %v2421 = vadd.f32 %v2229, %v2342
        %v2422 = vadd.f32 %v2230, %v2345
        %v2423 = vadd.f32 %v2231, %v2347
        %v2424 = vadd.f32 %v2232, %v2350
        %v2425 = vadd.f32 %v2233, %v2352
        %v2426 = vadd.f32 %v2234, %v2355
        %v2427 = vadd.f32 %v2235, %v2357
        %v2428 = vadd.f32 %v2236, %v2360
        %v2429 = vadd.f32 %v2237, %v2362
        %v2430 = vadd.f32 %v2238, %v2365
        %v2431 = vadd.f32 %v2239, %v2367
        %2432 = vst [vmem:[#allocation4] sm:$0xff] %v2400
        %2433 = vst [vmem:[#allocation4 + $0x8] sm:$0xff] %v2401
        %2434 = vst [vmem:[#allocation4 + $0x10] sm:$0xff] %v2402
        %2435 = vst [vmem:[#allocation4 + $0x18] sm:$0xff] %v2403
        %2436 = vst [vmem:[#allocation4 + $0x20] sm:$0xff] %v2404
        %2437 = vst [vmem:[#allocation4 + $0x28] sm:$0xff] %v2405
        %2438 = vst [vmem:[#allocation4 + $0x30] sm:$0xff] %v2406
        %2439 = vst [vmem:[#allocation4 + $0x38] sm:$0xff] %v2407
        %2440 = vst [vmem:[#allocation4 + $0x40] sm:$0xff] %v2408
        %2441 = vst [vmem:[#allocation4 + $0x48] sm:$0xff] %v2409
        %2442 = vst [vmem:[#allocation4 + $0x50] sm:$0xff] %v2410
        %2443 = vst [vmem:[#allocation4 + $0x58] sm:$0xff] %v2411
        %2444 = vst [vmem:[#allocation4 + $0x60] sm:$0xff] %v2412
        %2445 = vst [vmem:[#allocation4 + $0x68] sm:$0xff] %v2413
        %2446 = vst [vmem:[#allocation4 + $0x70] sm:$0xff] %v2414
        %2447 = vst [vmem:[#allocation4 + $0x78] sm:$0xff] %v2415
        %2448 = vst [vmem:[#allocation4 + $0x80] sm:$0xff] %v2416
        %2449 = vst [vmem:[#allocation4 + $0x88] sm:$0xff] %v2417
        %2450 = vst [vmem:[#allocation4 + $0x90] sm:$0xff] %v2418
        %2451 = vst [vmem:[#allocation4 + $0x98] sm:$0xff] %v2419
        %2452 = vst [vmem:[#allocation4 + $0xa0] sm:$0xff] %v2420
        %2453 = vst [vmem:[#allocation4 + $0xa8] sm:$0xff] %v2421
        %2454 = vst [vmem:[#allocation4 + $0xb0] sm:$0xff] %v2422
        %2455 = vst [vmem:[#allocation4 + $0xb8] sm:$0xff] %v2423
        %2456 = vst [vmem:[#allocation4 + $0xc0] sm:$0xff] %v2424
        %2457 = vst [vmem:[#allocation4 + $0xc8] sm:$0xff] %v2425
        %2458 = vst [vmem:[#allocation4 + $0xd0] sm:$0xff] %v2426
        %2459 = vst [vmem:[#allocation4 + $0xd8] sm:$0xff] %v2427
        %2460 = vst [vmem:[#allocation4 + $0xe0] sm:$0xff] %v2428
        %2461 = vst [vmem:[#allocation4 + $0xe8] sm:$0xff] %v2429
        %2462 = vst [vmem:[#allocation4 + $0xf0] sm:$0xff] %v2430
        %2463 = vst [vmem:[#allocation4 + $0xf8] sm:$0xff] %v2431
        %v2464 = vld [vmem:[#allocation5 + $0x8] sm:$0x1]
        %v2465 = vlaneseq
        %v2466 = vshrl.u32 %v2465, 7
        %v2467 = vsub.s32 0, %v2466
        %v2468 = vrot.slane %v2464, %v2467
        %v2469 = vmul.f32 %v1797, %v2468
        %v2470 = vmul.f32 %v1798, %v2468
        %v2471 = vmul.f32 %v1799, %v2468
        %v2472 = vmul.f32 %v1800, %v2468
        %v2473 = vmul.f32 %v1801, %v2468
        %v2474 = vmul.f32 %v1802, %v2468
        %v2475 = vmul.f32 %v1803, %v2468
        %v2476 = vmul.f32 %v1804, %v2468
        %v2477 = vmul.f32 %v1805, %v2468
        %v2478 = vmul.f32 %v1806, %v2468
        %v2479 = vmul.f32 %v1807, %v2468
        %v2480 = vmul.f32 %v1808, %v2468
        %v2481 = vmul.f32 %v1809, %v2468
        %v2482 = vmul.f32 %v1810, %v2468
        %v2483 = vmul.f32 %v1811, %v2468
        %v2484 = vmul.f32 %v1812, %v2468
        %v2485 = vmul.f32 %v1813, %v2468
        %v2486 = vmul.f32 %v1814, %v2468
        %v2487 = vmul.f32 %v1815, %v2468
        %v2488 = vmul.f32 %v1816, %v2468
        %v2489 = vmul.f32 %v1817, %v2468
        %v2490 = vmul.f32 %v1818, %v2468
        %v2491 = vmul.f32 %v1819, %v2468
        %v2492 = vmul.f32 %v1820, %v2468
        %v2493 = vmul.f32 %v1821, %v2468
        %v2494 = vmul.f32 %v1822, %v2468
        %v2495 = vmul.f32 %v1823, %v2468
        %v2496 = vmul.f32 %v1824, %v2468
        %v2497 = vmul.f32 %v1825, %v2468
        %v2498 = vmul.f32 %v1826, %v2468
        %v2499 = vmul.f32 %v1827, %v2468
        %v2500 = vmul.f32 %v1828, %v2468
        %v2501 = vmul.f32 %v1829, %v2468
        %v2502 = vmul.f32 %v1830, %v2468
        %v2503 = vmul.f32 %v1831, %v2468
        %v2504 = vmul.f32 %v1832, %v2468
        %v2505 = vmul.f32 %v1833, %v2468
        %v2506 = vmul.f32 %v1834, %v2468
        %v2507 = vmul.f32 %v1835, %v2468
        %v2508 = vmul.f32 %v1836, %v2468
        %v2509 = vmul.f32 %v1837, %v2468
        %v2510 = vmul.f32 %v1838, %v2468
        %v2511 = vmul.f32 %v1839, %v2468
        %v2512 = vmul.f32 %v1840, %v2468
        %v2513 = vmul.f32 %v1841, %v2468
        %v2514 = vmul.f32 %v1842, %v2468
        %v2515 = vmul.f32 %v1843, %v2468
        %v2516 = vmul.f32 %v1844, %v2468
        %v2517 = vld [vmem:[#allocation4] sm:$0xff]
        %v2518 = vld [vmem:[#allocation4 + $0x8] sm:$0xff]
        %v2519 = vld [vmem:[#allocation4 + $0x10] sm:$0xff]
        %v2520 = vld [vmem:[#allocation4 + $0x18] sm:$0xff]
        %v2521 = vld [vmem:[#allocation4 + $0x20] sm:$0xff]
        %v2522 = vld [vmem:[#allocation4 + $0x28] sm:$0xff]
        %v2523 = vld [vmem:[#allocation4 + $0x30] sm:$0xff]
        %v2524 = vld [vmem:[#allocation4 + $0x38] sm:$0xff]
        %v2525 = vld [vmem:[#allocation4 + $0x40] sm:$0xff]
        %v2526 = vld [vmem:[#allocation4 + $0x48] sm:$0xff]
        %v2527 = vld [vmem:[#allocation4 + $0x50] sm:$0xff]
        %v2528 = vld [vmem:[#allocation4 + $0x58] sm:$0xff]
        %v2529 = vld [vmem:[#allocation4 + $0x60] sm:$0xff]
        %v2530 = vld [vmem:[#allocation4 + $0x68] sm:$0xff]
        %v2531 = vld [vmem:[#allocation4 + $0x70] sm:$0xff]
        %v2532 = vld [vmem:[#allocation4 + $0x78] sm:$0xff]
        %v2533 = vld [vmem:[#allocation4 + $0x80] sm:$0xff]
        %v2534 = vld [vmem:[#allocation4 + $0x88] sm:$0xff]
        %v2535 = vld [vmem:[#allocation4 + $0x90] sm:$0xff]
        %v2536 = vld [vmem:[#allocation4 + $0x98] sm:$0xff]
        %v2537 = vld [vmem:[#allocation4 + $0xa0] sm:$0xff]
        %v2538 = vld [vmem:[#allocation4 + $0xa8] sm:$0xff]
        %v2539 = vld [vmem:[#allocation4 + $0xb0] sm:$0xff]
        %v2540 = vld [vmem:[#allocation4 + $0xb8] sm:$0xff]
        %v2541 = vld [vmem:[#allocation4 + $0xc0] sm:$0xff]
        %v2542 = vld [vmem:[#allocation4 + $0xc8] sm:$0xff]
        %v2543 = vld [vmem:[#allocation4 + $0xd0] sm:$0xff]
        %v2544 = vld [vmem:[#allocation4 + $0xd8] sm:$0xff]
        %v2545 = vld [vmem:[#allocation4 + $0xe0] sm:$0xff]
        %v2546 = vld [vmem:[#allocation4 + $0xe8] sm:$0xff]
        %v2547 = vld [vmem:[#allocation4 + $0xf0] sm:$0xff]
        %v2548 = vld [vmem:[#allocation4 + $0xf8] sm:$0xff]
        %v2597 = vrot.slane %v2469, 4
        %v2598 = vrot.slane %v2470, 4
        %v2599 = vsel %vm1978, %v2597, %v2598
        %v2600 = vrot.slane %v2471, 4
        %v2601 = vsel %vm1978, %v2598, %v2600
        %v2602 = vrot.slane %v2472, 4
        %v2603 = vrot.slane %v2473, 4
        %v2604 = vsel %vm1978, %v2602, %v2603
        %v2605 = vrot.slane %v2474, 4
        %v2606 = vsel %vm1978, %v2603, %v2605
        %v2607 = vrot.slane %v2475, 4
        %v2608 = vrot.slane %v2476, 4
        %v2609 = vsel %vm1978, %v2607, %v2608
        %v2610 = vrot.slane %v2477, 4
        %v2611 = vsel %vm1978, %v2608, %v2610
        %v2612 = vrot.slane %v2478, 4
        %v2613 = vrot.slane %v2479, 4
        %v2614 = vsel %vm1978, %v2612, %v2613
        %v2615 = vrot.slane %v2480, 4
        %v2616 = vsel %vm1978, %v2613, %v2615
        %v2617 = vrot.slane %v2481, 4
        %v2618 = vrot.slane %v2482, 4
        %v2619 = vsel %vm1978, %v2617, %v2618
        %v2620 = vrot.slane %v2483, 4
        %v2621 = vsel %vm1978, %v2618, %v2620
        %v2622 = vrot.slane %v2484, 4
        %v2623 = vrot.slane %v2485, 4
        %v2624 = vsel %vm1978, %v2622, %v2623
        %v2625 = vrot.slane %v2486, 4
        %v2626 = vsel %vm1978, %v2623, %v2625
        %v2627 = vrot.slane %v2487, 4
        %v2628 = vrot.slane %v2488, 4
        %v2629 = vsel %vm1978, %v2627, %v2628
        %v2630 = vrot.slane %v2489, 4
        %v2631 = vsel %vm1978, %v2628, %v2630
        %v2632 = vrot.slane %v2490, 4
        %v2633 = vrot.slane %v2491, 4
        %v2634 = vsel %vm1978, %v2632, %v2633
        %v2635 = vrot.slane %v2492, 4
        %v2636 = vsel %vm1978, %v2633, %v2635
        %v2637 = vrot.slane %v2493, 4
        %v2638 = vrot.slane %v2494, 4
        %v2639 = vsel %vm1978, %v2637, %v2638
        %v2640 = vrot.slane %v2495, 4
        %v2641 = vsel %vm1978, %v2638, %v2640
        %v2642 = vrot.slane %v2496, 4
        %v2643 = vrot.slane %v2497, 4
        %v2644 = vsel %vm1978, %v2642, %v2643
        %v2645 = vrot.slane %v2498, 4
        %v2646 = vsel %vm1978, %v2643, %v2645
        %v2647 = vrot.slane %v2499, 4
        %v2648 = vrot.slane %v2500, 4
        %v2649 = vsel %vm1978, %v2647, %v2648
        %v2650 = vrot.slane %v2501, 4
        %v2651 = vsel %vm1978, %v2648, %v2650
        %v2652 = vrot.slane %v2502, 4
        %v2653 = vrot.slane %v2503, 4
        %v2654 = vsel %vm1978, %v2652, %v2653
        %v2655 = vrot.slane %v2504, 4
        %v2656 = vsel %vm1978, %v2653, %v2655
        %v2657 = vrot.slane %v2505, 4
        %v2658 = vrot.slane %v2506, 4
        %v2659 = vsel %vm1978, %v2657, %v2658
        %v2660 = vrot.slane %v2507, 4
        %v2661 = vsel %vm1978, %v2658, %v2660
        %v2662 = vrot.slane %v2508, 4
        %v2663 = vrot.slane %v2509, 4
        %v2664 = vsel %vm1978, %v2662, %v2663
        %v2665 = vrot.slane %v2510, 4
        %v2666 = vsel %vm1978, %v2663, %v2665
        %v2667 = vrot.slane %v2511, 4
        %v2668 = vrot.slane %v2512, 4
        %v2669 = vsel %vm1978, %v2667, %v2668
        %v2670 = vrot.slane %v2513, 4
        %v2671 = vsel %vm1978, %v2668, %v2670
        %v2672 = vrot.slane %v2514, 4
        %v2673 = vrot.slane %v2515, 4
        %v2674 = vsel %vm1978, %v2672, %v2673
        %v2675 = vrot.slane %v2516, 4
        %v2676 = vsel %vm1978, %v2673, %v2675
        %v2709 = vadd.f32 %v2517, %v2599
        %v2710 = vadd.f32 %v2518, %v2601
        %v2711 = vadd.f32 %v2519, %v2604
        %v2712 = vadd.f32 %v2520, %v2606
        %v2713 = vadd.f32 %v2521, %v2609
        %v2714 = vadd.f32 %v2522, %v2611
        %v2715 = vadd.f32 %v2523, %v2614
        %v2716 = vadd.f32 %v2524, %v2616
        %v2717 = vadd.f32 %v2525, %v2619
        %v2718 = vadd.f32 %v2526, %v2621
        %v2719 = vadd.f32 %v2527, %v2624
        %v2720 = vadd.f32 %v2528, %v2626
        %v2721 = vadd.f32 %v2529, %v2629
        %v2722 = vadd.f32 %v2530, %v2631
        %v2723 = vadd.f32 %v2531, %v2634
        %v2724 = vadd.f32 %v2532, %v2636
        %v2725 = vadd.f32 %v2533, %v2639
        %v2726 = vadd.f32 %v2534, %v2641
        %v2727 = vadd.f32 %v2535, %v2644
        %v2728 = vadd.f32 %v2536, %v2646
        %v2729 = vadd.f32 %v2537, %v2649
        %v2730 = vadd.f32 %v2538, %v2651
        %v2731 = vadd.f32 %v2539, %v2654
        %v2732 = vadd.f32 %v2540, %v2656
        %v2733 = vadd.f32 %v2541, %v2659
        %v2734 = vadd.f32 %v2542, %v2661
        %v2735 = vadd.f32 %v2543, %v2664
        %v2736 = vadd.f32 %v2544, %v2666
        %v2737 = vadd.f32 %v2545, %v2669
        %v2738 = vadd.f32 %v2546, %v2671
        %v2739 = vadd.f32 %v2547, %v2674
        %v2740 = vadd.f32 %v2548, %v2676
        %2741 = vst [vmem:[#allocation4] sm:$0xff] %v2709
        %2742 = vst [vmem:[#allocation4 + $0x8] sm:$0xff] %v2710
        %2743 = vst [vmem:[#allocation4 + $0x10] sm:$0xff] %v2711
        %2744 = vst [vmem:[#allocation4 + $0x18] sm:$0xff] %v2712
        %2745 = vst [vmem:[#allocation4 + $0x20] sm:$0xff] %v2713
        %2746 = vst [vmem:[#allocation4 + $0x28] sm:$0xff] %v2714
        %2747 = vst [vmem:[#allocation4 + $0x30] sm:$0xff] %v2715
        %2748 = vst [vmem:[#allocation4 + $0x38] sm:$0xff] %v2716
        %2749 = vst [vmem:[#allocation4 + $0x40] sm:$0xff] %v2717
        %2750 = vst [vmem:[#allocation4 + $0x48] sm:$0xff] %v2718
        %2751 = vst [vmem:[#allocation4 + $0x50] sm:$0xff] %v2719
        %2752 = vst [vmem:[#allocation4 + $0x58] sm:$0xff] %v2720
        %2753 = vst [vmem:[#allocation4 + $0x60] sm:$0xff] %v2721
        %2754 = vst [vmem:[#allocation4 + $0x68] sm:$0xff] %v2722
        %2755 = vst [vmem:[#allocation4 + $0x70] sm:$0xff] %v2723
        %2756 = vst [vmem:[#allocation4 + $0x78] sm:$0xff] %v2724
        %2757 = vst [vmem:[#allocation4 + $0x80] sm:$0xff] %v2725
        %2758 = vst [vmem:[#allocation4 + $0x88] sm:$0xff] %v2726
        %2759 = vst [vmem:[#allocation4 + $0x90] sm:$0xff] %v2727
        %2760 = vst [vmem:[#allocation4 + $0x98] sm:$0xff] %v2728
        %2761 = vst [vmem:[#allocation4 + $0xa0] sm:$0xff] %v2729
        %2762 = vst [vmem:[#allocation4 + $0xa8] sm:$0xff] %v2730
        %2763 = vst [vmem:[#allocation4 + $0xb0] sm:$0xff] %v2731
        %2764 = vst [vmem:[#allocation4 + $0xb8] sm:$0xff] %v2732
        %2765 = vst [vmem:[#allocation4 + $0xc0] sm:$0xff] %v2733
        %2766 = vst [vmem:[#allocation4 + $0xc8] sm:$0xff] %v2734
        %2767 = vst [vmem:[#allocation4 + $0xd0] sm:$0xff] %v2735
        %2768 = vst [vmem:[#allocation4 + $0xd8] sm:$0xff] %v2736
        %2769 = vst [vmem:[#allocation4 + $0xe0] sm:$0xff] %v2737
        %2770 = vst [vmem:[#allocation4 + $0xe8] sm:$0xff] %v2738
        %2771 = vst [vmem:[#allocation4 + $0xf0] sm:$0xff] %v2739
        %2772 = vst [vmem:[#allocation4 + $0xf8] sm:$0xff] %v2740
        %v2773 = vld [vmem:[#allocation4] sm:$0xff]
        %v2774 = vld [vmem:[#allocation4 + $0x8] sm:$0xff]
        %v2775 = vld [vmem:[#allocation4 + $0x10] sm:$0xff]
        %v2776 = vld [vmem:[#allocation4 + $0x18] sm:$0xff]
        %v2777 = vld [vmem:[#allocation4 + $0x20] sm:$0xff]
        %v2778 = vld [vmem:[#allocation4 + $0x28] sm:$0xff]
        %v2779 = vld [vmem:[#allocation4 + $0x30] sm:$0xff]
        %v2780 = vld [vmem:[#allocation4 + $0x38] sm:$0xff]
        %v2781 = vld [vmem:[#allocation4 + $0x40] sm:$0xff]
        %v2782 = vld [vmem:[#allocation4 + $0x48] sm:$0xff]
        %v2783 = vld [vmem:[#allocation4 + $0x50] sm:$0xff]
        %v2784 = vld [vmem:[#allocation4 + $0x58] sm:$0xff]
        %v2785 = vld [vmem:[#allocation4 + $0x60] sm:$0xff]
        %v2786 = vld [vmem:[#allocation4 + $0x68] sm:$0xff]
        %v2787 = vld [vmem:[#allocation4 + $0x70] sm:$0xff]
        %v2788 = vld [vmem:[#allocation4 + $0x78] sm:$0xff]
        %v2789 = vld [vmem:[#allocation4 + $0x80] sm:$0xff]
        %v2790 = vld [vmem:[#allocation4 + $0x88] sm:$0xff]
        %v2791 = vld [vmem:[#allocation4 + $0x90] sm:$0xff]
        %v2792 = vld [vmem:[#allocation4 + $0x98] sm:$0xff]
        %v2793 = vld [vmem:[#allocation4 + $0xa0] sm:$0xff]
        %v2794 = vld [vmem:[#allocation4 + $0xa8] sm:$0xff]
        %v2795 = vld [vmem:[#allocation4 + $0xb0] sm:$0xff]
        %v2796 = vld [vmem:[#allocation4 + $0xb8] sm:$0xff]
        %v2797 = vld [vmem:[#allocation4 + $0xc0] sm:$0xff]
        %v2798 = vld [vmem:[#allocation4 + $0xc8] sm:$0xff]
        %v2799 = vld [vmem:[#allocation4 + $0xd0] sm:$0xff]
        %v2800 = vld [vmem:[#allocation4 + $0xd8] sm:$0xff]
        %v2801 = vld [vmem:[#allocation4 + $0xe0] sm:$0xff]
        %v2802 = vld [vmem:[#allocation4 + $0xe8] sm:$0xff]
        %v2803 = vld [vmem:[#allocation4 + $0xf0] sm:$0xff]
        %v2804 = vld [vmem:[#allocation4 + $0xf8] sm:$0xff]
        %v2805 = vld [vmem:[%s2] sm:$0x1]
        %v2807 = vlaneseq
        %v2808 = vshrl.u32 %v2807, 7
        %v2809 = vsub.s32 0, %v2808
        %v2810 = vrot.slane %v2805, %v2809
        %v2812 = vadd.f32 %v2773, %v2810
        %v2813 = vadd.f32 %v2774, %v2810
        %v2814 = vadd.f32 %v2775, %v2810
        %v2815 = vadd.f32 %v2776, %v2810
        %v2816 = vadd.f32 %v2777, %v2810
        %v2817 = vadd.f32 %v2778, %v2810
        %v2818 = vadd.f32 %v2779, %v2810
        %v2819 = vadd.f32 %v2780, %v2810
        %v2820 = vadd.f32 %v2781, %v2810
        %v2821 = vadd.f32 %v2782, %v2810
        %v2822 = vadd.f32 %v2783, %v2810
        %v2823 = vadd.f32 %v2784, %v2810
        %v2824 = vadd.f32 %v2785, %v2810
        %v2825 = vadd.f32 %v2786, %v2810
        %v2826 = vadd.f32 %v2787, %v2810
        %v2827 = vadd.f32 %v2788, %v2810
        %v2828 = vadd.f32 %v2789, %v2810
        %v2829 = vadd.f32 %v2790, %v2810
        %v2830 = vadd.f32 %v2791, %v2810
        %v2831 = vadd.f32 %v2792, %v2810
        %v2832 = vadd.f32 %v2793, %v2810
        %v2833 = vadd.f32 %v2794, %v2810
        %v2834 = vadd.f32 %v2795, %v2810
        %v2835 = vadd.f32 %v2796, %v2810
        %v2836 = vadd.f32 %v2797, %v2810
        %v2837 = vadd.f32 %v2798, %v2810
        %v2838 = vadd.f32 %v2799, %v2810
        %v2839 = vadd.f32 %v2800, %v2810
        %v2840 = vadd.f32 %v2801, %v2810
        %v2841 = vadd.f32 %v2802, %v2810
        %v2842 = vadd.f32 %v2803, %v2810
        %v2843 = vadd.f32 %v2804, %v2810
        %v2844 = vmax.f32 %v2812, 0.0
        %v2845 = vmax.f32 %v2813, 0.0
        %v2846 = vmax.f32 %v2814, 0.0
        %v2847 = vmax.f32 %v2815, 0.0
        %v2848 = vmax.f32 %v2816, 0.0
        %v2849 = vmax.f32 %v2817, 0.0
        %v2850 = vmax.f32 %v2818, 0.0
        %v2851 = vmax.f32 %v2819, 0.0
        %v2852 = vmax.f32 %v2820, 0.0
        %v2853 = vmax.f32 %v2821, 0.0
        %v2854 = vmax.f32 %v2822, 0.0
        %v2855 = vmax.f32 %v2823, 0.0
        %v2856 = vmax.f32 %v2824, 0.0
        %v2857 = vmax.f32 %v2825, 0.0
        %v2858 = vmax.f32 %v2826, 0.0
        %v2859 = vmax.f32 %v2827, 0.0
        %v2860 = vmax.f32 %v2828, 0.0
        %v2861 = vmax.f32 %v2829, 0.0
        %v2862 = vmax.f32 %v2830, 0.0
        %v2863 = vmax.f32 %v2831, 0.0
        %v2864 = vmax.f32 %v2832, 0.0
        %v2865 = vmax.f32 %v2833, 0.0
        %v2866 = vmax.f32 %v2834, 0.0
        %v2867 = vmax.f32 %v2835, 0.0
        %v2868 = vmax.f32 %v2836, 0.0
        %v2869 = vmax.f32 %v2837, 0.0
        %v2870 = vmax.f32 %v2838, 0.0
        %v2871 = vmax.f32 %v2839, 0.0
        %v2872 = vmax.f32 %v2840, 0.0
        %v2873 = vmax.f32 %v2841, 0.0
        %v2874 = vmax.f32 %v2842, 0.0
        %v2875 = vmax.f32 %v2843, 0.0
        %v2876 = vpack.c.bf16 %v2845, %v2844
        %v2877 = vpack.c.bf16 %v2847, %v2846
        %v2878 = vpack.c.bf16 %v2849, %v2848
        %v2879 = vpack.c.bf16 %v2851, %v2850
        %v2880 = vpack.c.bf16 %v2853, %v2852
        %v2881 = vpack.c.bf16 %v2855, %v2854
        %v2882 = vpack.c.bf16 %v2857, %v2856
        %v2883 = vpack.c.bf16 %v2859, %v2858
        %v2884 = vpack.c.bf16 %v2861, %v2860
        %v2885 = vpack.c.bf16 %v2863, %v2862
        %v2886 = vpack.c.bf16 %v2865, %v2864
        %v2887 = vpack.c.bf16 %v2867, %v2866
        %v2888 = vpack.c.bf16 %v2869, %v2868
        %v2889 = vpack.c.bf16 %v2871, %v2870
        %v2890 = vpack.c.bf16 %v2873, %v2872
        %v2891 = vpack.c.bf16 %v2875, %v2874
        %v2892 = vld [vmem:[#allocation8] sm:$0xf]
        %v2893 = vld [vmem:[#allocation8 + $0x4] sm:$0xf]
        %v2894 = vld [vmem:[#allocation8 + $0x8] sm:$0xf]
        %v2895 = vld [vmem:[#allocation8 + $0xc] sm:$0xf]
        %v2896 = vld [vmem:[#allocation8 + $0x10] sm:$0xf]
        %v2897 = vld [vmem:[#allocation8 + $0x14] sm:$0xf]
        %v2898 = vld [vmem:[#allocation8 + $0x18] sm:$0xf]
        %v2899 = vld [vmem:[#allocation8 + $0x1c] sm:$0xf]
        %v2900 = vld [vmem:[#allocation8 + $0x20] sm:$0xf]
        %v2901 = vld [vmem:[#allocation8 + $0x24] sm:$0xf]
        %v2902 = vld [vmem:[#allocation8 + $0x28] sm:$0xf]
        %v2903 = vld [vmem:[#allocation8 + $0x2c] sm:$0xf]
        %v2904 = vld [vmem:[#allocation8 + $0x30] sm:$0xf]
        %v2905 = vld [vmem:[#allocation8 + $0x34] sm:$0xf]
        %v2906 = vld [vmem:[#allocation8 + $0x38] sm:$0xf]
        %v2907 = vld [vmem:[#allocation8 + $0x3c] sm:$0xf]
        %v2924 = vunpack.c.l.b16 %v2892
        %v2925 = vunpack.c.l.b16 %v2893
        %v2926 = vunpack.c.l.b16 %v2894
        %v2927 = vunpack.c.l.b16 %v2895
        %v2928 = vunpack.c.l.b16 %v2896
        %v2929 = vunpack.c.l.b16 %v2897
        %v2930 = vunpack.c.l.b16 %v2898
        %v2931 = vunpack.c.l.b16 %v2899
        %v2932 = vunpack.c.l.b16 %v2900
        %v2933 = vunpack.c.l.b16 %v2901
        %v2934 = vunpack.c.l.b16 %v2902
        %v2935 = vunpack.c.l.b16 %v2903
        %v2936 = vunpack.c.l.b16 %v2904
        %v2937 = vunpack.c.l.b16 %v2905
        %v2938 = vunpack.c.l.b16 %v2906
        %v2939 = vunpack.c.l.b16 %v2907
        %v2940 = vpack.c.b16 %v2925, %v2924
        %v2941 = vpack.c.b16 %v2927, %v2926
        %v2942 = vpack.c.b16 %v2929, %v2928
        %v2943 = vpack.c.b16 %v2931, %v2930
        %v2944 = vpack.c.b16 %v2933, %v2932
        %v2945 = vpack.c.b16 %v2935, %v2934
        %v2946 = vpack.c.b16 %v2937, %v2936
        %v2947 = vpack.c.b16 %v2939, %v2938
        %2956 = vmatprep.subr.bf16.mxu0 0
        %2957 = vmatpush1.bf16.msra.mxu0 %v2947
        %2958 = vmatprep.subr.bf16.mxu0 0
        %2959 = vmatpush1.bf16.msra.mxu0 %v2946
        %2960 = vmatprep.subr.bf16.mxu0 0
        %2961 = vmatpush1.bf16.msra.mxu0 %v2945
        %2962 = vmatprep.subr.bf16.mxu0 0
        %2963 = vmatpush1.bf16.msra.mxu0 %v2944
        %2964 = vmatprep.subr.bf16.mxu0 0
        %2965 = vmatpush1.bf16.msra.mxu0 %v2943
        %2966 = vmatprep.subr.bf16.mxu0 0
        %2967 = vmatpush1.bf16.msra.mxu0 %v2942
        %2968 = vmatprep.subr.bf16.mxu0 0
        %2969 = vmatpush1.bf16.msra.mxu0 %v2941
        %2970 = vmatprep.subr.bf16.mxu0 0
        %2971 = vmatpush1.bf16.msra.mxu0 %v2940
        %2972 = vmatprep.subr.bf16.mxu0 0
        %2973 = vmatpush2.bf16.msra.mxu0 0
        %2974 = vmatprep.subr.bf16.mxu0 0
        %2975 = vmatpush2.bf16.msra.mxu0 0
        %2976 = vmatprep.subr.bf16.mxu0 0
        %2977 = vmatpush2.bf16.msra.mxu0 0
        %2978 = vmatprep.subr.bf16.mxu0 0
        %2979 = vmatpush2.bf16.msra.mxu0 0
        %2980 = vmatprep.subr.bf16.mxu0 0
        %2981 = vmatpush2.bf16.msra.mxu0 0
        %2982 = vmatprep.subr.bf16.mxu0 0
        %2983 = vmatpush2.bf16.msra.mxu0 0
        %2984 = vmatprep.subr.bf16.mxu0 0
        %2985 = vmatpush2.bf16.msra.mxu0 0
        %2986 = vmatprep.subr.bf16.mxu0 0
        %2987 = vmatpush2.bf16.msra.mxu0 0
        %2988 = vmatprep.mubr.bf16.mxu0 0
        %2989 = vmatmul.mubr.bf16.gmra.mxu0 %v2876
        %v2990 = vpop.f32.mrf.mxu0
        %v2991 = vadd.f32 0.0, %v2990
        %v2992 = vpop.f32.mrf.mxu0
        %v2993 = vpop.f32.mrf.mxu0
        %v2994 = vadd.f32 0.0, %v2993
        %v2995 = vpop.f32.mrf.mxu0
        %2996 = vmatprep.mubr.bf16.mxu0 0
        %2997 = vmatmul.mubr.bf16.gmra.mxu0 %v2877
        %v2998 = vpop.f32.mrf.mxu0
        %v2999 = vadd.f32 0.0, %v2998
        %v3000 = vpop.f32.mrf.mxu0
        %v3001 = vpop.f32.mrf.mxu0
        %v3002 = vadd.f32 0.0, %v3001
        %v3003 = vpop.f32.mrf.mxu0
        %3004 = vmatprep.mubr.bf16.mxu0 0
        %3005 = vmatmul.mubr.bf16.gmra.mxu0 %v2878
        %v3006 = vpop.f32.mrf.mxu0
        %v3007 = vadd.f32 0.0, %v3006
        %v3008 = vpop.f32.mrf.mxu0
        %v3009 = vpop.f32.mrf.mxu0
        %v3010 = vadd.f32 0.0, %v3009
        %v3011 = vpop.f32.mrf.mxu0
        %3012 = vmatprep.mubr.bf16.mxu0 0
        %3013 = vmatmul.mubr.bf16.gmra.mxu0 %v2879
        %v3014 = vpop.f32.mrf.mxu0
        %v3015 = vadd.f32 0.0, %v3014
        %v3016 = vpop.f32.mrf.mxu0
        %v3017 = vpop.f32.mrf.mxu0
        %v3018 = vadd.f32 0.0, %v3017
        %v3019 = vpop.f32.mrf.mxu0
        %3020 = vmatprep.mubr.bf16.mxu0 0
        %3021 = vmatmul.mubr.bf16.gmra.mxu0 %v2880
        %v3022 = vpop.f32.mrf.mxu0
        %v3023 = vadd.f32 0.0, %v3022
        %v3024 = vpop.f32.mrf.mxu0
        %v3025 = vpop.f32.mrf.mxu0
        %v3026 = vadd.f32 0.0, %v3025
        %v3027 = vpop.f32.mrf.mxu0
        %3028 = vmatprep.mubr.bf16.mxu0 0
        %3029 = vmatmul.mubr.bf16.gmra.mxu0 %v2881
        %v3030 = vpop.f32.mrf.mxu0
        %v3031 = vadd.f32 0.0, %v3030
        %v3032 = vpop.f32.mrf.mxu0
        %v3033 = vpop.f32.mrf.mxu0
        %v3034 = vadd.f32 0.0, %v3033
        %v3035 = vpop.f32.mrf.mxu0
        %3036 = vmatprep.mubr.bf16.mxu0 0
        %3037 = vmatmul.mubr.bf16.gmra.mxu0 %v2882
        %v3038 = vpop.f32.mrf.mxu0
        %v3039 = vadd.f32 0.0, %v3038
        %v3040 = vpop.f32.mrf.mxu0
        %v3041 = vpop.f32.mrf.mxu0
        %v3042 = vadd.f32 0.0, %v3041
        %v3043 = vpop.f32.mrf.mxu0
        %3044 = vmatprep.mubr.bf16.mxu0 0
        %3045 = vmatmul.mubr.bf16.gmra.mxu0 %v2883
        %v3046 = vpop.f32.mrf.mxu0
        %v3047 = vadd.f32 0.0, %v3046
        %v3048 = vpop.f32.mrf.mxu0
        %v3049 = vpop.f32.mrf.mxu0
        %v3050 = vadd.f32 0.0, %v3049
        %v3051 = vpop.f32.mrf.mxu0
        %3052 = vmatprep.mubr.bf16.mxu0 0
        %3053 = vmatmul.mubr.bf16.gmra.mxu0 %v2884
        %v3054 = vpop.f32.mrf.mxu0
        %v3055 = vadd.f32 0.0, %v3054
        %v3056 = vpop.f32.mrf.mxu0
        %v3057 = vpop.f32.mrf.mxu0
        %v3058 = vadd.f32 0.0, %v3057
        %v3059 = vpop.f32.mrf.mxu0
        %3060 = vmatprep.mubr.bf16.mxu0 0
        %3061 = vmatmul.mubr.bf16.gmra.mxu0 %v2885
        %v3062 = vpop.f32.mrf.mxu0
        %v3063 = vadd.f32 0.0, %v3062
        %v3064 = vpop.f32.mrf.mxu0
        %v3065 = vpop.f32.mrf.mxu0
        %v3066 = vadd.f32 0.0, %v3065
        %v3067 = vpop.f32.mrf.mxu0
        %3068 = vmatprep.mubr.bf16.mxu0 0
        %3069 = vmatmul.mubr.bf16.gmra.mxu0 %v2886
        %v3070 = vpop.f32.mrf.mxu0
        %v3071 = vadd.f32 0.0, %v3070
        %v3072 = vpop.f32.mrf.mxu0
        %v3073 = vpop.f32.mrf.mxu0
        %v3074 = vadd.f32 0.0, %v3073
        %v3075 = vpop.f32.mrf.mxu0
        %3076 = vmatprep.mubr.bf16.mxu0 0
        %3077 = vmatmul.mubr.bf16.gmra.mxu0 %v2887
        %v3078 = vpop.f32.mrf.mxu0
        %v3079 = vadd.f32 0.0, %v3078
        %v3080 = vpop.f32.mrf.mxu0
        %v3081 = vpop.f32.mrf.mxu0
        %v3082 = vadd.f32 0.0, %v3081
        %v3083 = vpop.f32.mrf.mxu0
        %3084 = vmatprep.mubr.bf16.mxu0 0
        %3085 = vmatmul.mubr.bf16.gmra.mxu0 %v2888
        %v3086 = vpop.f32.mrf.mxu0
        %v3087 = vadd.f32 0.0, %v3086
        %v3088 = vpop.f32.mrf.mxu0
        %v3089 = vpop.f32.mrf.mxu0
        %v3090 = vadd.f32 0.0, %v3089
        %v3091 = vpop.f32.mrf.mxu0
        %3092 = vmatprep.mubr.bf16.mxu0 0
        %3093 = vmatmul.mubr.bf16.gmra.mxu0 %v2889
        %v3094 = vpop.f32.mrf.mxu0
        %v3095 = vadd.f32 0.0, %v3094
        %v3096 = vpop.f32.mrf.mxu0
        %v3097 = vpop.f32.mrf.mxu0
        %v3098 = vadd.f32 0.0, %v3097
        %v3099 = vpop.f32.mrf.mxu0
        %3100 = vmatprep.mubr.bf16.mxu0 0
        %3101 = vmatmul.mubr.bf16.gmra.mxu0 %v2890
        %v3102 = vpop.f32.mrf.mxu0
        %v3103 = vadd.f32 0.0, %v3102
        %v3104 = vpop.f32.mrf.mxu0
        %v3105 = vpop.f32.mrf.mxu0
        %v3106 = vadd.f32 0.0, %v3105
        %v3107 = vpop.f32.mrf.mxu0
        %3108 = vmatprep.mubr.bf16.mxu0 0
        %3109 = vmatmul.mubr.bf16.gmra.mxu0 %v2891
        %v3110 = vpop.f32.mrf.mxu0
        %v3111 = vadd.f32 0.0, %v3110
        %v3112 = vpop.f32.mrf.mxu0
        %v3113 = vpop.f32.mrf.mxu0
        %v3114 = vadd.f32 0.0, %v3113
        %v3115 = vpop.f32.mrf.mxu0
        %3116 = vdwg.mxu0
        %v3117 = vmax.f32 %v2991, 0.0
        %v3118 = vmax.f32 %v2994, 0.0
        %v3119 = vmax.f32 %v2999, 0.0
        %v3120 = vmax.f32 %v3002, 0.0
        %v3121 = vmax.f32 %v3007, 0.0
        %v3122 = vmax.f32 %v3010, 0.0
        %v3123 = vmax.f32 %v3015, 0.0
        %v3124 = vmax.f32 %v3018, 0.0
        %v3125 = vmax.f32 %v3023, 0.0
        %v3126 = vmax.f32 %v3026, 0.0
        %v3127 = vmax.f32 %v3031, 0.0
        %v3128 = vmax.f32 %v3034, 0.0
        %v3129 = vmax.f32 %v3039, 0.0
        %v3130 = vmax.f32 %v3042, 0.0
        %v3131 = vmax.f32 %v3047, 0.0
        %v3132 = vmax.f32 %v3050, 0.0
        %v3133 = vmax.f32 %v3055, 0.0
        %v3134 = vmax.f32 %v3058, 0.0
        %v3135 = vmax.f32 %v3063, 0.0
        %v3136 = vmax.f32 %v3066, 0.0
        %v3137 = vmax.f32 %v3071, 0.0
        %v3138 = vmax.f32 %v3074, 0.0
        %v3139 = vmax.f32 %v3079, 0.0
        %v3140 = vmax.f32 %v3082, 0.0
        %v3141 = vmax.f32 %v3087, 0.0
        %v3142 = vmax.f32 %v3090, 0.0
        %v3143 = vmax.f32 %v3095, 0.0
        %v3144 = vmax.f32 %v3098, 0.0
        %v3145 = vmax.f32 %v3103, 0.0
        %v3146 = vmax.f32 %v3106, 0.0
        %v3147 = vmax.f32 %v3111, 0.0
        %v3148 = vmax.f32 %v3114, 0.0
        %3149 = vst [vmem:[%s193] sm:$0xff] %v3117
        %3150 = vst [vmem:[%s193 + $0x8] sm:$0xff] %v3118
        %3151 = vst [vmem:[%s193 + $0x10] sm:$0xff] %v3119
        %3152 = vst [vmem:[%s193 + $0x18] sm:$0xff] %v3120
        %3153 = vst [vmem:[%s193 + $0x20] sm:$0xff] %v3121
        %3154 = vst [vmem:[%s193 + $0x28] sm:$0xff] %v3122
        %3155 = vst [vmem:[%s193 + $0x30] sm:$0xff] %v3123
        %3156 = vst [vmem:[%s193 + $0x38] sm:$0xff] %v3124
        %3157 = vst [vmem:[%s193 + $0x40] sm:$0xff] %v3125
        %3158 = vst [vmem:[%s193 + $0x48] sm:$0xff] %v3126
        %3159 = vst [vmem:[%s193 + $0x50] sm:$0xff] %v3127
        %3160 = vst [vmem:[%s193 + $0x58] sm:$0xff] %v3128
        %3161 = vst [vmem:[%s193 + $0x60] sm:$0xff] %v3129
        %3162 = vst [vmem:[%s193 + $0x68] sm:$0xff] %v3130
        %3163 = vst [vmem:[%s193 + $0x70] sm:$0xff] %v3131
        %3164 = vst [vmem:[%s193 + $0x78] sm:$0xff] %v3132
        %3165 = vst [vmem:[%s193 + $0x80] sm:$0xff] %v3133
        %3166 = vst [vmem:[%s193 + $0x88] sm:$0xff] %v3134
        %3167 = vst [vmem:[%s193 + $0x90] sm:$0xff] %v3135
        %3168 = vst [vmem:[%s193 + $0x98] sm:$0xff] %v3136
        %3169 = vst [vmem:[%s193 + $0xa0] sm:$0xff] %v3137
        %3170 = vst [vmem:[%s193 + $0xa8] sm:$0xff] %v3138
        %3171 = vst [vmem:[%s193 + $0xb0] sm:$0xff] %v3139
        %3172 = vst [vmem:[%s193 + $0xb8] sm:$0xff] %v3140
        %3173 = vst [vmem:[%s193 + $0xc0] sm:$0xff] %v3141
        %3174 = vst [vmem:[%s193 + $0xc8] sm:$0xff] %v3142
        %3175 = vst [vmem:[%s193 + $0xd0] sm:$0xff] %v3143
        %3176 = vst [vmem:[%s193 + $0xd8] sm:$0xff] %v3144
        %3177 = vst [vmem:[%s193 + $0xe0] sm:$0xff] %v3145
        %3178 = vst [vmem:[%s193 + $0xe8] sm:$0xff] %v3146
        %3179 = vst [vmem:[%s193 + $0xf0] sm:$0xff] %v3147
        %3180 = vst [vmem:[%s193 + $0xf8] sm:$0xff] %v3148
        %s3181 = sand.u32 %s105, 1
        %s3182 = scalar_lea.sflag [#allocation7], %s3181
        %s3183 = sand.u32 %s105, 1
        %s3184 = smul.addr %s3183, 256
        %s3185 = scalar_lea.vmem [#allocation10], %s3184
        // Predicated region
        $region57: #{tpu_custom_call.1} parent=31 // pred_check
          %p3186 = pneg %p115
        $region58: #{tpu_custom_call.1} parent=31 // pred_check_branch
          %3188 = sbr.rel (%p3186) target = $region60
        $region59: #{tpu_custom_call.1} parent=31 // pred_region
          %s3189 = smul.u32 16, %s25
          %s3191 = ssub.s32 4096, 4096
          %3192 = vsyncadd %s3182, %s3191
          %s3193 = smul.addr %s3189, 2
          %s3194 = smul.addr %s24, 32
          %s3195 = sadd.s32 %s3193, %s3194
          %s3196 = smul.addr %s3195, 128
          %s3197 = scalar_lea.hbm %s4, %s3196
          %s3198 = sshll.u32 %s3185, 4
          %s3199 = int_to_ptr.vmem [resolvable:$true] %s3198
          %3204 = dma.vmem_to_hbm [thread:$0]  %s3199, 4096, %s3197, %s3182, 128, 128, 8
        $region60: #{tpu_custom_call.1} parent=31 // pred_fallthru
          _
      $region32: #{tpu_custom_call.1} parent=5 // pred_fallthru
        _
      %p3205 = scmp.le.s32.totalorder 2, %s15
      // Predicated region
      $region61: #{tpu_custom_call.1} parent=5 // pred_check
        %p3206 = pneg %p3205
      $region62: #{tpu_custom_call.1} parent=5 // pred_check_branch
        %3208 = sbr.rel (%p3206) target = $region64
      $region63: #{tpu_custom_call.1} parent=5 // pred_region
        %s3209 = ssub.s32 %s15, 2
        // Predicated region
        $region65: #{tpu_custom_call.1} parent=63 // pred_check
          %p3210 = pneg %p121
        $region66: #{tpu_custom_call.1} parent=63 // pred_check_branch
          %3212 = sbr.rel (%p3210) target = $region68
        $region67: #{tpu_custom_call.1} parent=63 // pred_region
          %s3213 = sand.u32 %s106, 1
          %s3214 = scalar_lea.sflag [#allocation7], %s3213
          %s3215 = sand.u32 %s106, 1
          %s3216 = smul.addr %s3215, 256
          %s3217 = scalar_lea.vmem [#allocation10], %s3216
          %3218 = dma.done %s3214, 4096
        $region68: #{tpu_custom_call.1} parent=63 // pred_fallthru
          _
      $region64: #{tpu_custom_call.1} parent=5 // pred_fallthru
        _
    $region6: #{tpu_custom_call.1} parent=1 // loop_footer
      %s19 = sadd.s32 1, %s15
    $region7: #{tpu_custom_call.1} parent=1 // loop_footer_branch
      %14 = sbr.rel target = $region3
    $region8: #{tpu_custom_call.1} parent=1 // loop_exit
      _
    %3219 = vsyncpa [#allocation6], 1
    %s3220 = scalar_lea.sflag [#allocation6], 1
    %3221 = vsyncpa %s3220, 1
    %3222 = vsyncpa [#allocation9], 1
    %3223 = vsyncpa [#allocation7], 1
    %s3224 = scalar_lea.sflag [#allocation7], 1
    %3225 = vsyncpa %s3224, 1
  %3226 = vsyncmov [#allocation3]
  %s3227 = vpop.sfrf %3226
  %p3228 = scmp.eq.s32.totalorder %s3227, 0
  %p3229 = pneg %p3228
  %3231 = shalt.err (%p3229)
  %s3232 = scalar_lea.sflag [#allocation3], 1
  %3233 = vsyncmov %s3232
  %s3234 = vpop.sfrf %3233
  %p3235 = scmp.eq.s32.totalorder %s3234, 0
  %p3236 = pneg %p3235
  %3238 = shalt.err (%p3236)

</llo_original>
